<compile_context>
chip_gen: v7x
topology: tpu7x:2x2x1
jax: 0.10.0
libtpu: 0.0.40
codegen_flags: <defaults>
</compile_context>

<pallas_src>
import functools
import math

import jax
import jax.numpy as jnp
from jax.experimental import pallas as pl
from jax.experimental.pallas import tpu as pltpu


def _pi_kernel(bd_ref, o_ref, *, sigma, offset, resolution,
               x0s, dxs, y0s, dys, scale):
    """Whole batch of persistence diagrams -> flattened persistence images.

    bd_ref : (2, B, M, 1)  [0]=births, [1]=deaths (M intervals on sublanes)
    o_ref  : (B, Qp)       flattened persistence images, Qp = Q padded to 128
    """
    b = bd_ref[0]                                    # (B, M, 1)
    d = bd_ref[1]                                    # (B, M, 1)

    p = jnp.abs(d - b)                               # (B, M, 1) persistence
    nz = (p > (offset * 0.5)).astype(jnp.float32)    # non-trivial-interval mask

    # Cosine weight; fold the non-trivial mask and the final 1/sigma^2 scale
    # into this (B, M, 1) vector so there is no extra pass over the result.
    w = jnp.clip(p, 0.0, offset) * (math.pi / offset)
    w = (1.0 - jnp.cos(w)) * (0.5 / (sigma * sigma)) * nz      # (B, M, 1)

    # In-kernel evaluation grids, already pre-scaled by 1/(sqrt(2)*sigma):
    #   q = r*R + s ;  xs[q] = scale * x[q // R] ;  ys[q] = scale * y[q % R]
    Qp = o_ref.shape[-1]
    q = jax.lax.broadcasted_iota(jnp.int32, (1, 1, Qp), 2).astype(jnp.float32)
    r = jnp.floor((q + 0.5) * (1.0 / resolution))    # exact q // R for small q
    s = q - r * resolution                           # q % R
    xs = x0s + r * dxs                               # (1, 1, Qp)
    ys = y0s + s * dys                               # (1, 1, Qp)

    # Pre-scale the (B, M, 1) operands once instead of scaling (B, M, Qp).
    bs = b * scale
    ps = p * scale

    # Single fused Gaussian over the (B, M, Qp) domain (one exp, not two).
    # Padded lanes q >= Q compute harmless finite garbage; wrapper slices them.
    g = jnp.exp(-((bs - xs) ** 2 + (ps - ys) ** 2)) * w        # (B, M, Qp)

    # PI_flat[b, q] = sum_m g[b, m, q]  (sublane reduce over M on the XLU).
    # Note: torch's global `if N > 0` branch only matters when *every* interval
    # in the whole batch is trivial; rows with no non-trivial intervals already
    # give an all-zero image since g is masked by `nz` via w.
    o_ref[...] = jnp.sum(g, axis=1)                  # (B, Qp)


def persistence_image(births, deaths, *, resolution, sigma, square=(0.0, 1.0)):
    """Pallas equivalent of PersistenceImage.forward for births/deaths [B, M]."""
    B, M = births.shape
    R = resolution
    Q = R * R
    Qp = ((Q + 127) // 128) * 128                    # lane-dense padded width
    rng = abs(square[1] - square[0])
    offset = rng / (R - 3)

    # linspace parameters (same spacing for x and y grids):
    #   x[i] = (square[0] - offset) + i * dx,  y[i] = -offset + i * dy
    dx = (rng + 2.0 * offset) / (R - 1)
    dy = (rng + 2.0 * offset) / (R - 1)
    scale = 1.0 / (math.sqrt(2.0) * sigma)           # sqrt(1 / (2 sigma^2))

    # Pack births/deaths into one array -> one input DMA.
    bd = jnp.stack(
        [births.astype(jnp.float32), deaths.astype(jnp.float32)], axis=0
    ).reshape(2, B, M, 1)

    kernel = functools.partial(
        _pi_kernel,
        sigma=float(sigma),
        offset=float(offset),
        resolution=float(R),
        x0s=float((square[0] - offset) * scale),
        dxs=float(dx * scale),
        y0s=float((-offset) * scale),
        dys=float(dy * scale),
        scale=float(scale),
    )

    out = pl.pallas_call(
        kernel,
        out_shape=jax.ShapeDtypeStruct((B, Qp), jnp.float32),
        grid=(1,),                                   # whole batch in one step
        in_specs=[
            pl.BlockSpec((2, B, M, 1), lambda i: (0, 0, 0, 0)),  # packed b/d
        ],
        out_specs=pl.BlockSpec((B, Qp), lambda i: (0, 0)),       # lane-dense
        compiler_params=pltpu.CompilerParams(
            dimension_semantics=("parallel",)),
    )(bd)

    return out[:, :Q].reshape(B, R, R)


class GenPHandPI:
    """JAX/Pallas port of models.GenPHandPI (persistence-image generation)."""

    def __init__(self, resolution=10, lims=(0.0, 1.0),
                 max_num_intervals=(32, 32, 32)):
        self.resolution = resolution
        self.max_num_intervals = max_num_intervals
        self.mn = min(lims)
        self.mx = max(lims)
        self.range = abs(self.mx - self.mn)
        self.sigma = 1.0 / (resolution - 3)

    def __call__(self, births, deaths):
        # births, deaths: [L, 3, M] already filled with normalized filtration
        # values (what GenPHandPI.forward builds from critical_vertices).
        #
        # The PyTorch module constructs PersistenceImage(resolution, sigma) with
        # its *default* square=[0, 1] (filtration values are normalized to
        # [0, 1] via (f - mn)/range), independent of `lims` — so square=(0, 1)
        # is passed explicitly here to match that exactly.
        L, K, M = births.shape
        b = births.reshape(L * K, M)
        d = deaths.reshape(L * K, M)
        pis = persistence_image(b, d, resolution=self.resolution,
                                sigma=self.sigma, square=(0.0, 1.0))
        return pis.reshape(L, K, self.resolution, self.resolution)


def _reference_pi(births, deaths, resolution, sigma, square=(0.0, 1.0)):
    """Pure-JAX reference matching PersistenceImage.forward."""
    rng = abs(square[1] - square[0])
    offset = rng / (resolution - 3)
    x = jnp.linspace(square[0] - offset, square[1] + offset, resolution)
    y = jnp.linspace(-offset, rng + offset, resolution)
    b = births
    d = deaths
    nz = (jnp.abs(d - b) > offset / 2).astype(jnp.float32)
    p = jnp.abs(d - b)
    X = jnp.exp(-((b[..., None] - x) ** 2) / 2.0 / sigma ** 2)          # (B, M, R)
    X = jnp.swapaxes(X, -1, -2)                                          # (B, R, M)
    Y = jnp.exp(-((p[..., None] - y) ** 2) / 2.0 / sigma ** 2)          # (B, M, R)
    Y = nz[..., None] * Y
    w = jnp.clip(p, 0.0, offset) * jnp.pi / offset
    w = (1.0 - jnp.cos(w)) / 2.0
    Y = w[..., None] * Y
    return jnp.matmul(X, Y) / sigma ** 2                                 # (B, R, R)


if __name__ == "__main__":
    L = 2                       # batch of "graphs"
    K = 3                       # homology dimensions 0/1/2
    M = 32                      # max_num_intervals (small synthetic size)
    resolution = 10

    model = GenPHandPI(resolution=resolution, lims=(0.0, 1.0),
                       max_num_intervals=(M, M, M))

    key = jax.random.PRNGKey(0)
    kb, kg, kn = jax.random.split(key, 3)

    # Synthetic normalized birth values in [0, 0.6] and positive persistence gaps.
    births = jax.random.uniform(kb, (L, K, M), dtype=jnp.float32) * 0.6
    gaps = jax.random.uniform(kg, (L, K, M), dtype=jnp.float32) * 0.4
    deaths = births + gaps

    # Emulate the zero-padding of unused interval slots in GenPHandPI.forward.
    lengths = jnp.array([[20, 12, 5], [28, 0, 16]], dtype=jnp.int32)     # per (L, K)
    valid = (jnp.arange(M)[None, None, :] < lengths[..., None]).astype(jnp.float32)
    births = births * valid
    deaths = deaths * valid

    pis = model(births, deaths)
    pis = jax.block_until_ready(pis)

    assert pis.shape == (L, K, resolution, resolution)
    assert pis.dtype == jnp.float32

    ref = _reference_pi(births.reshape(L * K, M), deaths.reshape(L * K, M),
                        resolution, model.sigma).reshape(L, K, resolution, resolution)
    assert jnp.allclose(pis, ref, atol=1e-4, rtol=1e-4), (
        float(jnp.max(jnp.abs(pis - ref))))

    print("KERNEL_OK")
</pallas_src>

<mosaic_0001>
module attributes {stable_mosaic.version = 11 : i64} {
  func.func @_pi_kernel(%arg0: i32, %arg1: memref<2x6x32x1xf32, #tpu.memory_space<vmem>>, %arg2: memref<6x128xf32, #tpu.memory_space<vmem>>) attributes {dimension_semantics = [#tpu.dimension_semantics<parallel>], iteration_bounds = array<i64: 1>, scalar_prefetch = 0 : i64, scratch_operands = 0 : i64, tpu.core_type = #tpu.core_type<tc>, window_params = [{pipeline_mode = #tpu.pipeline_mode<synchronous>, transform_indices = @transform_0, window_bounds = array<i64: 2, 6, 32, 1>}, {pipeline_mode = #tpu.pipeline_mode<synchronous>, transform_indices = @transform_1, window_bounds = array<i64: 6, 128>}]} {
    %c0 = arith.constant 0 : index
    %c0_0 = arith.constant 0 : index
    %c0_1 = arith.constant 0 : index
    %c0_2 = arith.constant 0 : index
    %0 = vector.load %arg1[%c0, %c0_0, %c0_1, %c0_2] : memref<2x6x32x1xf32, #tpu.memory_space<vmem>>, vector<1x6x32x1xf32>
    %1 = vector.shape_cast %0 : vector<1x6x32x1xf32> to vector<6x32x1xf32>
    %c1 = arith.constant 1 : index
    %c0_3 = arith.constant 0 : index
    %c0_4 = arith.constant 0 : index
    %c0_5 = arith.constant 0 : index
    %2 = vector.load %arg1[%c1, %c0_3, %c0_4, %c0_5] : memref<2x6x32x1xf32, #tpu.memory_space<vmem>>, vector<1x6x32x1xf32>
    %3 = vector.shape_cast %2 : vector<1x6x32x1xf32> to vector<6x32x1xf32>
    %4 = arith.subf %3, %1 : vector<6x32x1xf32>
    %5 = math.absf %4 : vector<6x32x1xf32>
    %cst = arith.constant 0.0714285746 : f32
    %6 = vector.broadcast %cst : f32 to vector<6x32x1xf32>
    %7 = arith.cmpf ogt, %5, %6 : vector<6x32x1xf32>
    %8 = arith.extui %7 : vector<6x32x1xi1> to vector<6x32x1xi32>
    %9 = arith.sitofp %8 : vector<6x32x1xi32> to vector<6x32x1xf32>
    %cst_6 = arith.constant 0.000000e+00 : f32
    %cst_7 = arith.constant 0.142857149 : f32
    %10 = vector.broadcast %cst_6 : f32 to vector<6x32x1xf32>
    %11 = arith.maximumf %10, %5 : vector<6x32x1xf32>
    %12 = vector.broadcast %cst_7 : f32 to vector<6x32x1xf32>
    %13 = arith.minimumf %12, %11 : vector<6x32x1xf32>
    %cst_8 = arith.constant 21.991148 : f32
    %14 = vector.broadcast %cst_8 : f32 to vector<6x32x1xf32>
    %15 = arith.mulf %13, %14 : vector<6x32x1xf32>
    %16 = math.cos %15 : vector<6x32x1xf32>
    %cst_9 = arith.constant 1.000000e+00 : f32
    %17 = vector.broadcast %cst_9 : f32 to vector<6x32x1xf32>
    %18 = arith.subf %17, %16 : vector<6x32x1xf32>
    %cst_10 = arith.constant 2.450000e+01 : f32
    %19 = vector.broadcast %cst_10 : f32 to vector<6x32x1xf32>
    %20 = arith.mulf %18, %19 : vector<6x32x1xf32>
    %21 = arith.mulf %20, %9 : vector<6x32x1xf32>
    %22 = tpu.iota {dimensions = array<i32: 2>} : vector<1x1x128xi32>
    %23 = arith.sitofp %22 : vector<1x1x128xi32> to vector<1x1x128xf32>
    %cst_11 = arith.constant 5.000000e-01 : f32
    %24 = vector.broadcast %cst_11 : f32 to vector<1x1x128xf32>
    %25 = arith.addf %23, %24 : vector<1x1x128xf32>
    %cst_12 = arith.constant 1.000000e-01 : f32
    %26 = vector.broadcast %cst_12 : f32 to vector<1x1x128xf32>
    %27 = arith.mulf %25, %26 : vector<1x1x128xf32>
    %28 = math.floor %27 : vector<1x1x128xf32>
    %cst_13 = arith.constant 1.000000e+01 : f32
    %29 = vector.broadcast %cst_13 : f32 to vector<1x1x128xf32>
    %30 = arith.mulf %28, %29 : vector<1x1x128xf32>
    %31 = arith.subf %23, %30 : vector<1x1x128xf32>
    %cst_14 = arith.constant 0.707106769 : f32
    %32 = vector.broadcast %cst_14 : f32 to vector<1x1x128xf32>
    %33 = arith.mulf %28, %32 : vector<1x1x128xf32>
    %cst_15 = arith.constant -0.707106769 : f32
    %34 = vector.broadcast %cst_15 : f32 to vector<1x1x128xf32>
    %35 = arith.addf %34, %33 : vector<1x1x128xf32>
    %cst_16 = arith.constant 0.707106769 : f32
    %36 = vector.broadcast %cst_16 : f32 to vector<1x1x128xf32>
    %37 = arith.mulf %31, %36 : vector<1x1x128xf32>
    %cst_17 = arith.constant -0.707106769 : f32
    %38 = vector.broadcast %cst_17 : f32 to vector<1x1x128xf32>
    %39 = arith.addf %38, %37 : vector<1x1x128xf32>
    %cst_18 = arith.constant 4.94974756 : f32
    %40 = vector.broadcast %cst_18 : f32 to vector<6x32x1xf32>
    %41 = arith.mulf %1, %40 : vector<6x32x1xf32>
    %cst_19 = arith.constant 4.94974756 : f32
    %42 = vector.broadcast %cst_19 : f32 to vector<6x32x1xf32>
    %43 = arith.mulf %5, %42 : vector<6x32x1xf32>
    %44 = vector.broadcast %41 : vector<6x32x1xf32> to vector<6x32x128xf32>
    %45 = vector.broadcast %35 : vector<1x1x128xf32> to vector<6x32x128xf32>
    %46 = arith.subf %44, %45 : vector<6x32x128xf32>
    %47 = arith.mulf %46, %46 : vector<6x32x128xf32>
    %48 = vector.broadcast %43 : vector<6x32x1xf32> to vector<6x32x128xf32>
    %49 = vector.broadcast %39 : vector<1x1x128xf32> to vector<6x32x128xf32>
    %50 = arith.subf %48, %49 : vector<6x32x128xf32>
    %51 = arith.mulf %50, %50 : vector<6x32x128xf32>
    %52 = arith.addf %47, %51 : vector<6x32x128xf32>
    %cst_20 = arith.constant 0.000000e+00 : f32
    %53 = vector.broadcast %cst_20 : f32 to vector<6x32x128xf32>
    %54 = arith.subf %53, %52 : vector<6x32x128xf32>
    %55 = math.exp %54 : vector<6x32x128xf32>
    %56 = vector.broadcast %21 : vector<6x32x1xf32> to vector<6x32x128xf32>
    %57 = arith.mulf %55, %56 : vector<6x32x128xf32>
    %cst_21 = arith.constant dense<0.000000e+00> : vector<6x128xf32>
    %58 = vector.multi_reduction <add>, %57, %cst_21 [1] : vector<6x32x128xf32> to vector<6x128xf32>
    %c0_22 = arith.constant 0 : index
    %c0_23 = arith.constant 0 : index
    %59 = vector.load %arg2[%c0_22, %c0_23] : memref<6x128xf32, #tpu.memory_space<vmem>>, vector<6x128xf32>
    tpu.vector_store %arg2[%c0_22, %c0_23], %58 {strides = array<i32>} : memref<6x128xf32, #tpu.memory_space<vmem>>, vector<6x128xf32>,
    return
  }
  func.func @transform_0(%arg0: i32) -> (i32, i32, i32, i32) {
    %c0_i32 = arith.constant 0 : i32
    %c0_i32_0 = arith.constant 0 : i32
    %c0_i32_1 = arith.constant 0 : i32
    %c0_i32_2 = arith.constant 0 : i32
    %c0_i32_3 = arith.constant 0 : i32
    return %c0_i32, %c0_i32_0, %c0_i32_1, %c0_i32_2 : i32, i32, i32, i32
  }
  func.func @transform_1(%arg0: i32) -> (i32, i32) {
    %c0_i32 = arith.constant 0 : i32
    %c0_i32_0 = arith.constant 0 : i32
    %c0_i32_1 = arith.constant 0 : i32
    return %c0_i32, %c0_i32_0 : i32, i32
  }
}

</mosaic_0001>

<llo_original>
// kernel: tpu_custom_call.1
$region0: #{tpu_custom_call.1}
  #allocation0 [shape = 'u32[]', space=smem, size = 0x4, offset = 0x4, fixed_abs, tag = 'smem constant byte address 0x4 - core index']
  #allocation1 [shape = 'u32[144,128]{1,0:T(1,128)}', space=vmem, size = 0x12000, scoped, tag = 'internal scratch']
  %s0 = inlined_call_operand.vmem [shape: f32[2,6,32,1], index: 0, kind: input, shape index: {}]
  %s1 = inlined_call_operand.hbm [shape: f32[6,128], index: 1, kind: output, shape index: {}]
  %s2 = sld [smem:[#allocation0]]
  $region14: #{tpu_custom_call.1} parent=0
    _
  %s4 = ssub.s32 1, %s2
  %s5 = scalar_select 0, %s4, %s2
  $region1: #{tpu_custom_call.1} parent=0
    #allocation2 [shape = 'u8[4096]{0}', space=vmem, size = 0x1000, scoped, tag = 'output window, operand 0, single buffered']
    #allocation3 [shape = 's32[1]{0}', space=sflag, size = 0x4, scoped, tag = 'scoped memory for tpu_custom_call.1']
    %6 = vsyncpa [#allocation3], 0
    // Predicated region
    $region2: #{tpu_custom_call.1} parent=1 // pred_check
      _
    $region3: #{tpu_custom_call.1} parent=1 // pred_check_branch
      %8 = sbr.rel (0) target = $region5
    $region4: #{tpu_custom_call.1} parent=1 // pred_region
      _
    $region5: #{tpu_custom_call.1} parent=1 // pred_fallthru
      _
    %v9 = vld [vmem:[%s0] sm:$0xff]
    %v10 = vld [vmem:[%s0 + $0x8] sm:$0xff]
    %v11 = vld [vmem:[%s0 + $0x10] sm:$0xff]
    %v12 = vld [vmem:[%s0 + $0x18] sm:$0xff]
    %v13 = vld [vmem:[%s0 + $0x20] sm:$0xff]
    %v14 = vld [vmem:[%s0 + $0x28] sm:$0xff]
    %v15 = vld [vmem:[%s0 + $0x30] sm:$0xff]
    %v16 = vld [vmem:[%s0 + $0x38] sm:$0xff]
    %v17 = vld [vmem:[%s0 + $0x40] sm:$0xff]
    %v18 = vld [vmem:[%s0 + $0x48] sm:$0xff]
    %v19 = vld [vmem:[%s0 + $0x50] sm:$0xff]
    %v20 = vld [vmem:[%s0 + $0x58] sm:$0xff]
    %v21 = vld [vmem:[%s0 + $0x60] sm:$0xff]
    %v22 = vld [vmem:[%s0 + $0x68] sm:$0xff]
    %v23 = vld [vmem:[%s0 + $0x70] sm:$0xff]
    %v24 = vld [vmem:[%s0 + $0x78] sm:$0xff]
    %v25 = vld [vmem:[%s0 + $0x80] sm:$0xff]
    %v26 = vld [vmem:[%s0 + $0x88] sm:$0xff]
    %v27 = vld [vmem:[%s0 + $0x90] sm:$0xff]
    %v28 = vld [vmem:[%s0 + $0x98] sm:$0xff]
    %v29 = vld [vmem:[%s0 + $0xa0] sm:$0xff]
    %v30 = vld [vmem:[%s0 + $0xa8] sm:$0xff]
    %v31 = vld [vmem:[%s0 + $0xb0] sm:$0xff]
    %v32 = vld [vmem:[%s0 + $0xb8] sm:$0xff]
    %s33 = scalar_lea.vmem %s0, 192
    %v34 = vld [vmem:[%s33] sm:$0xff]
    %v35 = vld [vmem:[%s33 + $0x8] sm:$0xff]
    %v36 = vld [vmem:[%s33 + $0x10] sm:$0xff]
    %v37 = vld [vmem:[%s33 + $0x18] sm:$0xff]
    %v38 = vld [vmem:[%s33 + $0x20] sm:$0xff]
    %v39 = vld [vmem:[%s33 + $0x28] sm:$0xff]
    %v40 = vld [vmem:[%s33 + $0x30] sm:$0xff]
    %v41 = vld [vmem:[%s33 + $0x38] sm:$0xff]
    %v42 = vld [vmem:[%s33 + $0x40] sm:$0xff]
    %v43 = vld [vmem:[%s33 + $0x48] sm:$0xff]
    %v44 = vld [vmem:[%s33 + $0x50] sm:$0xff]
    %v45 = vld [vmem:[%s33 + $0x58] sm:$0xff]
    %v46 = vld [vmem:[%s33 + $0x60] sm:$0xff]
    %v47 = vld [vmem:[%s33 + $0x68] sm:$0xff]
    %v48 = vld [vmem:[%s33 + $0x70] sm:$0xff]
    %v49 = vld [vmem:[%s33 + $0x78] sm:$0xff]
    %v50 = vld [vmem:[%s33 + $0x80] sm:$0xff]
    %v51 = vld [vmem:[%s33 + $0x88] sm:$0xff]
    %v52 = vld [vmem:[%s33 + $0x90] sm:$0xff]
    %v53 = vld [vmem:[%s33 + $0x98] sm:$0xff]
    %v54 = vld [vmem:[%s33 + $0xa0] sm:$0xff]
    %v55 = vld [vmem:[%s33 + $0xa8] sm:$0xff]
    %v56 = vld [vmem:[%s33 + $0xb0] sm:$0xff]
    %v57 = vld [vmem:[%s33 + $0xb8] sm:$0xff]
    %v58 = vsub.f32 %v34, %v9
    %v59 = vsub.f32 %v35, %v10
    %v60 = vsub.f32 %v36, %v11
    %v61 = vsub.f32 %v37, %v12
    %v62 = vsub.f32 %v38, %v13
    %v63 = vsub.f32 %v39, %v14
    %v64 = vsub.f32 %v40, %v15
    %v65 = vsub.f32 %v41, %v16
    %v66 = vsub.f32 %v42, %v17
    %v67 = vsub.f32 %v43, %v18
    %v68 = vsub.f32 %v44, %v19
    %v69 = vsub.f32 %v45, %v20
    %v70 = vsub.f32 %v46, %v21
    %v71 = vsub.f32 %v47, %v22
    %v72 = vsub.f32 %v48, %v23
    %v73 = vsub.f32 %v49, %v24
    %v74 = vsub.f32 %v50, %v25
    %v75 = vsub.f32 %v51, %v26
    %v76 = vsub.f32 %v52, %v27
    %v77 = vsub.f32 %v53, %v28
    %v78 = vsub.f32 %v54, %v29
    %v79 = vsub.f32 %v55, %v30
    %v80 = vsub.f32 %v56, %v31
    %v81 = vsub.f32 %v57, %v32
    %v82 = vand.u32 2147483647, %v58
    %v83 = vand.u32 2147483647, %v59
    %v84 = vand.u32 2147483647, %v60
    %v85 = vand.u32 2147483647, %v61
    %v86 = vand.u32 2147483647, %v62
    %v87 = vand.u32 2147483647, %v63
    %v88 = vand.u32 2147483647, %v64
    %v89 = vand.u32 2147483647, %v65
    %v90 = vand.u32 2147483647, %v66
    %v91 = vand.u32 2147483647, %v67
    %v92 = vand.u32 2147483647, %v68
    %v93 = vand.u32 2147483647, %v69
    %v94 = vand.u32 2147483647, %v70
    %v95 = vand.u32 2147483647, %v71
    %v96 = vand.u32 2147483647, %v72
    %v97 = vand.u32 2147483647, %v73
    %v98 = vand.u32 2147483647, %v74
    %v99 = vand.u32 2147483647, %v75
    %v100 = vand.u32 2147483647, %v76
    %v101 = vand.u32 2147483647, %v77
    %v102 = vand.u32 2147483647, %v78
    %v103 = vand.u32 2147483647, %v79
    %v104 = vand.u32 2147483647, %v80
    %v105 = vand.u32 2147483647, %v81
    %vm106 = vcmp.gt.f32.partialorder %v82, 0.071428575
    %vm107 = vcmp.gt.f32.partialorder %v83, 0.071428575
    %vm108 = vcmp.gt.f32.partialorder %v84, 0.071428575
    %vm109 = vcmp.gt.f32.partialorder %v85, 0.071428575
    %vm110 = vcmp.gt.f32.partialorder %v86, 0.071428575
    %vm111 = vcmp.gt.f32.partialorder %v87, 0.071428575
    %vm112 = vcmp.gt.f32.partialorder %v88, 0.071428575
    %vm113 = vcmp.gt.f32.partialorder %v89, 0.071428575
    %vm114 = vcmp.gt.f32.partialorder %v90, 0.071428575
    %vm115 = vcmp.gt.f32.partialorder %v91, 0.071428575
    %vm116 = vcmp.gt.f32.partialorder %v92, 0.071428575
    %vm117 = vcmp.gt.f32.partialorder %v93, 0.071428575
    %vm118 = vcmp.gt.f32.partialorder %v94, 0.071428575
    %vm119 = vcmp.gt.f32.partialorder %v95, 0.071428575
    %vm120 = vcmp.gt.f32.partialorder %v96, 0.071428575
    %vm121 = vcmp.gt.f32.partialorder %v97, 0.071428575
    %vm122 = vcmp.gt.f32.partialorder %v98, 0.071428575
    %vm123 = vcmp.gt.f32.partialorder %v99, 0.071428575
    %vm124 = vcmp.gt.f32.partialorder %v100, 0.071428575
    %vm125 = vcmp.gt.f32.partialorder %v101, 0.071428575
    %vm126 = vcmp.gt.f32.partialorder %v102, 0.071428575
    %vm127 = vcmp.gt.f32.partialorder %v103, 0.071428575
    %vm128 = vcmp.gt.f32.partialorder %v104, 0.071428575
    %vm129 = vcmp.gt.f32.partialorder %v105, 0.071428575
    %v130 = vsel %vm106, 1, 0
    %v131 = vsel %vm107, 1, 0
    %v132 = vsel %vm108, 1, 0
    %v133 = vsel %vm109, 1, 0
    %v134 = vsel %vm110, 1, 0
    %v135 = vsel %vm111, 1, 0
    %v136 = vsel %vm112, 1, 0
    %v137 = vsel %vm113, 1, 0
    %v138 = vsel %vm114, 1, 0
    %v139 = vsel %vm115, 1, 0
    %v140 = vsel %vm116, 1, 0
    %v141 = vsel %vm117, 1, 0
    %v142 = vsel %vm118, 1, 0
    %v143 = vsel %vm119, 1, 0
    %v144 = vsel %vm120, 1, 0
    %v145 = vsel %vm121, 1, 0
    %v146 = vsel %vm122, 1, 0
    %v147 = vsel %vm123, 1, 0
    %v148 = vsel %vm124, 1, 0
    %v149 = vsel %vm125, 1, 0
    %v150 = vsel %vm126, 1, 0
    %v151 = vsel %vm127, 1, 0
    %v152 = vsel %vm128, 1, 0
    %v153 = vsel %vm129, 1, 0
    %v154 = vcvt.s32.f32 %v130
    %v155 = vcvt.s32.f32 %v131
    %v156 = vcvt.s32.f32 %v132
    %v157 = vcvt.s32.f32 %v133
    %v158 = vcvt.s32.f32 %v134
    %v159 = vcvt.s32.f32 %v135
    %v160 = vcvt.s32.f32 %v136
    %v161 = vcvt.s32.f32 %v137
    %v162 = vcvt.s32.f32 %v138
    %v163 = vcvt.s32.f32 %v139
    %v164 = vcvt.s32.f32 %v140
    %v165 = vcvt.s32.f32 %v141
    %v166 = vcvt.s32.f32 %v142
    %v167 = vcvt.s32.f32 %v143
    %v168 = vcvt.s32.f32 %v144
    %v169 = vcvt.s32.f32 %v145
    %v170 = vcvt.s32.f32 %v146
    %v171 = vcvt.s32.f32 %v147
    %v172 = vcvt.s32.f32 %v148
    %v173 = vcvt.s32.f32 %v149
    %v174 = vcvt.s32.f32 %v150
    %v175 = vcvt.s32.f32 %v151
    %v176 = vcvt.s32.f32 %v152
    %v177 = vcvt.s32.f32 %v153
    %v178 = vmax.f32 %v82, 0.0
    %v179 = vmax.f32 %v83, 0.0
    %v180 = vmax.f32 %v84, 0.0
    %v181 = vmax.f32 %v85, 0.0
    %v182 = vmax.f32 %v86, 0.0
    %v183 = vmax.f32 %v87, 0.0
    %v184 = vmax.f32 %v88, 0.0
    %v185 = vmax.f32 %v89, 0.0
    %v186 = vmax.f32 %v90, 0.0
    %v187 = vmax.f32 %v91, 0.0
    %v188 = vmax.f32 %v92, 0.0
    %v189 = vmax.f32 %v93, 0.0
    %v190 = vmax.f32 %v94, 0.0
    %v191 = vmax.f32 %v95, 0.0
    %v192 = vmax.f32 %v96, 0.0
    %v193 = vmax.f32 %v97, 0.0
    %v194 = vmax.f32 %v98, 0.0
    %v195 = vmax.f32 %v99, 0.0
    %v196 = vmax.f32 %v100, 0.0
    %v197 = vmax.f32 %v101, 0.0
    %v198 = vmax.f32 %v102, 0.0
    %v199 = vmax.f32 %v103, 0.0
    %v200 = vmax.f32 %v104, 0.0
    %v201 = vmax.f32 %v105, 0.0
    %v202 = vmin.f32 %v178, 0.14285715
    %v203 = vmin.f32 %v179, 0.14285715
    %v204 = vmin.f32 %v180, 0.14285715
    %v205 = vmin.f32 %v181, 0.14285715
    %v206 = vmin.f32 %v182, 0.14285715
    %v207 = vmin.f32 %v183, 0.14285715
    %v208 = vmin.f32 %v184, 0.14285715
    %v209 = vmin.f32 %v185, 0.14285715
    %v210 = vmin.f32 %v186, 0.14285715
    %v211 = vmin.f32 %v187, 0.14285715
    %v212 = vmin.f32 %v188, 0.14285715
    %v213 = vmin.f32 %v189, 0.14285715
    %v214 = vmin.f32 %v190, 0.14285715
    %v215 = vmin.f32 %v191, 0.14285715
    %v216 = vmin.f32 %v192, 0.14285715
    %v217 = vmin.f32 %v193, 0.14285715
    %v218 = vmin.f32 %v194, 0.14285715
    %v219 = vmin.f32 %v195, 0.14285715
    %v220 = vmin.f32 %v196, 0.14285715
    %v221 = vmin.f32 %v197, 0.14285715
    %v222 = vmin.f32 %v198, 0.14285715
    %v223 = vmin.f32 %v199, 0.14285715
    %v224 = vmin.f32 %v200, 0.14285715
    %v225 = vmin.f32 %v201, 0.14285715
    %v226 = vmul.f32 %v202, 21.991148
    %v227 = vmul.f32 %v203, 21.991148
    %v228 = vmul.f32 %v204, 21.991148
    %v229 = vmul.f32 %v205, 21.991148
    %v230 = vmul.f32 %v206, 21.991148
    %v231 = vmul.f32 %v207, 21.991148
    %v232 = vmul.f32 %v208, 21.991148
    %v233 = vmul.f32 %v209, 21.991148
    %v234 = vmul.f32 %v210, 21.991148
    %v235 = vmul.f32 %v211, 21.991148
    %v236 = vmul.f32 %v212, 21.991148
    %v237 = vmul.f32 %v213, 21.991148
    %v238 = vmul.f32 %v214, 21.991148
    %v239 = vmul.f32 %v215, 21.991148
    %v240 = vmul.f32 %v216, 21.991148
    %v241 = vmul.f32 %v217, 21.991148
    %v242 = vmul.f32 %v218, 21.991148
    %v243 = vmul.f32 %v219, 21.991148
    %v244 = vmul.f32 %v220, 21.991148
    %v245 = vmul.f32 %v221, 21.991148
    %v246 = vmul.f32 %v222, 21.991148
    %v247 = vmul.f32 %v223, 21.991148
    %v248 = vmul.f32 %v224, 21.991148
    %v249 = vmul.f32 %v225, 21.991148
    %v250 = vand.u32 2147483647, %v226
    %vm251 = vcmp.le.f32.partialorder %v250, 0.7853982
    %vm252 = vcmp.lt.s32.totalorder %v226, 0
    %v253 = vand.u32 %v226, 2139095040
    %v254 = vshrl.u32 %v253, 23
    %v255 = vsub.s32 %v254, 127
    %v256 = vand.u32 2147483647, %v226
    %v257 = vand.u32 %v256, 8388607
    %v258 = vor.u32 %v257, 8388608
    %v259 = vsub.s32 0, %v258
    %v260 = vadd.s32 %v255, 1
    %vm261 = vcmp.gt.s32.totalorder %v260, 0
    %v262 = vsel %vm261, %v260, 0
    %v263 = vshrl.u32 %v262, 5
    %v264 = vand.u32 %v262, 31
    %v265 = vsub.s32 32, %v264
    %v266 = vshrl.u32 683565275, %v265
    %v267 = vshll.u32 683565275, %v264
    %v268 = vshrl.u32 2475754826, %v265
    %v269 = vor.u32 %v267, %v268
    %v270 = vshll.u32 2475754826, %v264
    %v271 = vshrl.u32 2131351028, %v265
    %v272 = vor.u32 %v270, %v271
    %v273 = vshll.u32 2131351028, %v264
    %v274 = vshrl.u32 2102212464, %v265
    %v275 = vor.u32 %v273, %v274
    %v276 = vshll.u32 2102212464, %v264
    %v277 = vshrl.u32 920167782, %v265
    %v278 = vor.u32 %v276, %v277
    %v279 = vshll.u32 920167782, %v264
    %v280 = vshrl.u32 1326507024, %v265
    %v281 = vor.u32 %v279, %v280
    %vm282 = vcmp.lt.s32.totalorder %v263, 1
    %vm283 = vcmp.lt.s32.totalorder %v263, 2
    %vm284 = vcmp.lt.s32.totalorder %v263, 3
    %vm285 = vcmp.lt.s32.totalorder %v263, 4
    %v286 = vsel %vm282, %v266, %v269
    %v287 = vsel %vm285, %v275, 2102212464
    %v288 = vsel %vm284, %v272, %v287
    %v289 = vsel %vm283, %v286, %v288
    %v290 = vsel %vm282, %v269, %v272
    %v291 = vsel %vm285, %v278, 920167782
    %v292 = vsel %vm284, %v275, %v291
    %v293 = vsel %vm283, %v290, %v292
    %v294 = vsel %vm282, %v272, %v275
    %v295 = vsel %vm285, %v281, 1326507024
    %v296 = vsel %vm284, %v278, %v295
    %v297 = vsel %vm283, %v294, %v296
    %v298 = vshll.u32 %v258, 8
    %v299 = vmul.u32.u64.compose %v298, %v297
    %v300 = vextract.low.u32 %v299
    %v301 = vextract.high.u32 %v299
    %v302 = vmul.u32.u64.compose %v298, %v293
    %v303 = vextract.low.u32 %v302
    %v304 = vextract.high.u32 %v302
    %v305 = vmul.u32 %v298, %v289
    %v306 = vadd.s32 %v301, %v303
    %vm307 = vc.u32 %v301, %v303
    %v308 = vadd.s32 %v304, 1
    %v309 = vsel %vm307, %v308, %v304
    %v310 = vadd.s32 %v305, %v309
    %v311 = vadd.s32 %v310, 536870912
    %v312 = vshrl.u32 %v311, 30
    %v313 = vshll.u32 %v312, 30
    %v314 = vsub.s32 %v310, %v313
    %vm315 = vcmp.lt.s32.totalorder %v314, 0
    %v316 = vsub.s32 0, %v314
    %v317 = vsel %vm315, %v316, %v314
    %v318 = vclz %v317
    %v319 = vsub.s32 %v318, 2
    %vm320 = vcmp.gt.s32.totalorder 0, %v319
    %v321 = vsel %vm320, 0, %v319
    %v322 = vsub.s32 32, %v321
    %v323 = vshll.u32 %v314, %v321
    %v324 = vshrl.u32 %v306, %v322
    %v325 = vor.u32 %v323, %v324
    %v326 = vsub.s32 4294967266, %v321
    %v327 = vadd.s32 %v326, 127
    %v328 = vshll.u32 %v327, 23
    %v329 = vor.u32 4788187, %v328
    %v330 = vand.u32 2147483647, %v329
    %v332 = vcvt.s32.f32 %v325
    %v333 = vmul.f32 %v332, %v330
    %v334 = vxor.u32 %v333, 2147483648
    %v335 = vsel %vm252, %v334, %v333
    %v336 = vsub.s32 4, %v312
    %v337 = vsel %vm252, %v336, %v312
    %v338 = vsel %vm251, %v226, %v335
    %v339 = vsel %vm251, 0, %v337
    %v340 = vcosq.f32.pop %v338
    %v341 = vsinq.f32.pop %v338
    %vm342 = vweird.f32 %v226
    %v343 = vand.u32 %v339, 3
    %vm344 = vcmp.lt.s32.totalorder %v343, 2
    %vm345 = vcmp.eq.s32.totalorder %v343, 0
    %v346 = vxor.u32 %v341, 2147483648
    %v347 = vsel %vm345, %v340, %v346
    %vm348 = vcmp.eq.s32.totalorder %v343, 2
    %v349 = vxor.u32 %v340, 2147483648
    %v350 = vsel %vm348, %v349, %v341
    %v351 = vsel %vm344, %v347, %v350
    %v352 = vsel %vm342, nan, %v351
    %v353 = vand.u32 2147483647, %v227
    %vm354 = vcmp.le.f32.partialorder %v353, 0.7853982
    %vm355 = vcmp.lt.s32.totalorder %v227, 0
    %v356 = vand.u32 %v227, 2139095040
    %v357 = vshrl.u32 %v356, 23
    %v358 = vsub.s32 %v357, 127
    %v359 = vand.u32 2147483647, %v227
    %v360 = vand.u32 %v359, 8388607
    %v361 = vor.u32 %v360, 8388608
    %v362 = vsub.s32 0, %v361
    %v363 = vadd.s32 %v358, 1
    %vm364 = vcmp.gt.s32.totalorder %v363, 0
    %v365 = vsel %vm364, %v363, 0
    %v366 = vshrl.u32 %v365, 5
    %v367 = vand.u32 %v365, 31
    %v368 = vsub.s32 32, %v367
    %v369 = vshrl.u32 683565275, %v368
    %v370 = vshll.u32 683565275, %v367
    %v371 = vshrl.u32 2475754826, %v368
    %v372 = vor.u32 %v370, %v371
    %v373 = vshll.u32 2475754826, %v367
    %v374 = vshrl.u32 2131351028, %v368
    %v375 = vor.u32 %v373, %v374
    %v376 = vshll.u32 2131351028, %v367
    %v377 = vshrl.u32 2102212464, %v368
    %v378 = vor.u32 %v376, %v377
    %v379 = vshll.u32 2102212464, %v367
    %v380 = vshrl.u32 920167782, %v368
    %v381 = vor.u32 %v379, %v380
    %v382 = vshll.u32 920167782, %v367
    %v383 = vshrl.u32 1326507024, %v368
    %v384 = vor.u32 %v382, %v383
    %vm385 = vcmp.lt.s32.totalorder %v366, 1
    %vm386 = vcmp.lt.s32.totalorder %v366, 2
    %vm387 = vcmp.lt.s32.totalorder %v366, 3
    %vm388 = vcmp.lt.s32.totalorder %v366, 4
    %v389 = vsel %vm385, %v369, %v372
    %v390 = vsel %vm388, %v378, 2102212464
    %v391 = vsel %vm387, %v375, %v390
    %v392 = vsel %vm386, %v389, %v391
    %v393 = vsel %vm385, %v372, %v375
    %v394 = vsel %vm388, %v381, 920167782
    %v395 = vsel %vm387, %v378, %v394
    %v396 = vsel %vm386, %v393, %v395
    %v397 = vsel %vm385, %v375, %v378
    %v398 = vsel %vm388, %v384, 1326507024
    %v399 = vsel %vm387, %v381, %v398
    %v400 = vsel %vm386, %v397, %v399
    %v401 = vshll.u32 %v361, 8
    %v402 = vmul.u32.u64.compose %v401, %v400
    %v403 = vextract.low.u32 %v402
    %v404 = vextract.high.u32 %v402
    %v405 = vmul.u32.u64.compose %v401, %v396
    %v406 = vextract.low.u32 %v405
    %v407 = vextract.high.u32 %v405
    %v408 = vmul.u32 %v401, %v392
    %v409 = vadd.s32 %v404, %v406
    %vm410 = vc.u32 %v404, %v406
    %v411 = vadd.s32 %v407, 1
    %v412 = vsel %vm410, %v411, %v407
    %v413 = vadd.s32 %v408, %v412
    %v414 = vadd.s32 %v413, 536870912
    %v415 = vshrl.u32 %v414, 30
    %v416 = vshll.u32 %v415, 30
    %v417 = vsub.s32 %v413, %v416
    %vm418 = vcmp.lt.s32.totalorder %v417, 0
    %v419 = vsub.s32 0, %v417
    %v420 = vsel %vm418, %v419, %v417
    %v421 = vclz %v420
    %v422 = vsub.s32 %v421, 2
    %vm423 = vcmp.gt.s32.totalorder 0, %v422
    %v424 = vsel %vm423, 0, %v422
    %v425 = vsub.s32 32, %v424
    %v426 = vshll.u32 %v417, %v424
    %v427 = vshrl.u32 %v409, %v425
    %v428 = vor.u32 %v426, %v427
    %v429 = vsub.s32 4294967266, %v424
    %v430 = vadd.s32 %v429, 127
    %v431 = vshll.u32 %v430, 23
    %v432 = vor.u32 4788187, %v431
    %v433 = vand.u32 2147483647, %v432
    %v435 = vcvt.s32.f32 %v428
    %v436 = vmul.f32 %v435, %v433
    %v437 = vxor.u32 %v436, 2147483648
    %v438 = vsel %vm355, %v437, %v436
    %v439 = vsub.s32 4, %v415
    %v440 = vsel %vm355, %v439, %v415
    %v441 = vsel %vm354, %v227, %v438
    %v442 = vsel %vm354, 0, %v440
    %v443 = vcosq.f32.pop %v441
    %v444 = vsinq.f32.pop %v441
    %vm445 = vweird.f32 %v227
    %v446 = vand.u32 %v442, 3
    %vm447 = vcmp.lt.s32.totalorder %v446, 2
    %vm448 = vcmp.eq.s32.totalorder %v446, 0
    %v449 = vxor.u32 %v444, 2147483648
    %v450 = vsel %vm448, %v443, %v449
    %vm451 = vcmp.eq.s32.totalorder %v446, 2
    %v452 = vxor.u32 %v443, 2147483648
    %v453 = vsel %vm451, %v452, %v444
    %v454 = vsel %vm447, %v450, %v453
    %v455 = vsel %vm445, nan, %v454
    %v456 = vand.u32 2147483647, %v228
    %vm457 = vcmp.le.f32.partialorder %v456, 0.7853982
    %vm458 = vcmp.lt.s32.totalorder %v228, 0
    %v459 = vand.u32 %v228, 2139095040
    %v460 = vshrl.u32 %v459, 23
    %v461 = vsub.s32 %v460, 127
    %v462 = vand.u32 2147483647, %v228
    %v463 = vand.u32 %v462, 8388607
    %v464 = vor.u32 %v463, 8388608
    %v465 = vsub.s32 0, %v464
    %v466 = vadd.s32 %v461, 1
    %vm467 = vcmp.gt.s32.totalorder %v466, 0
    %v468 = vsel %vm467, %v466, 0
    %v469 = vshrl.u32 %v468, 5
    %v470 = vand.u32 %v468, 31
    %v471 = vsub.s32 32, %v470
    %v472 = vshrl.u32 683565275, %v471
    %v473 = vshll.u32 683565275, %v470
    %v474 = vshrl.u32 2475754826, %v471
    %v475 = vor.u32 %v473, %v474
    %v476 = vshll.u32 2475754826, %v470
    %v477 = vshrl.u32 2131351028, %v471
    %v478 = vor.u32 %v476, %v477
    %v479 = vshll.u32 2131351028, %v470
    %v480 = vshrl.u32 2102212464, %v471
    %v481 = vor.u32 %v479, %v480
    %v482 = vshll.u32 2102212464, %v470
    %v483 = vshrl.u32 920167782, %v471
    %v484 = vor.u32 %v482, %v483
    %v485 = vshll.u32 920167782, %v470
    %v486 = vshrl.u32 1326507024, %v471
    %v487 = vor.u32 %v485, %v486
    %vm488 = vcmp.lt.s32.totalorder %v469, 1
    %vm489 = vcmp.lt.s32.totalorder %v469, 2
    %vm490 = vcmp.lt.s32.totalorder %v469, 3
    %vm491 = vcmp.lt.s32.totalorder %v469, 4
    %v492 = vsel %vm488, %v472, %v475
    %v493 = vsel %vm491, %v481, 2102212464
    %v494 = vsel %vm490, %v478, %v493
    %v495 = vsel %vm489, %v492, %v494
    %v496 = vsel %vm488, %v475, %v478
    %v497 = vsel %vm491, %v484, 920167782
    %v498 = vsel %vm490, %v481, %v497
    %v499 = vsel %vm489, %v496, %v498
    %v500 = vsel %vm488, %v478, %v481
    %v501 = vsel %vm491, %v487, 1326507024
    %v502 = vsel %vm490, %v484, %v501
    %v503 = vsel %vm489, %v500, %v502
    %v504 = vshll.u32 %v464, 8
    %v505 = vmul.u32.u64.compose %v504, %v503
    %v506 = vextract.low.u32 %v505
    %v507 = vextract.high.u32 %v505
    %v508 = vmul.u32.u64.compose %v504, %v499
    %v509 = vextract.low.u32 %v508
    %v510 = vextract.high.u32 %v508
    %v511 = vmul.u32 %v504, %v495
    %v512 = vadd.s32 %v507, %v509
    %vm513 = vc.u32 %v507, %v509
    %v514 = vadd.s32 %v510, 1
    %v515 = vsel %vm513, %v514, %v510
    %v516 = vadd.s32 %v511, %v515
    %v517 = vadd.s32 %v516, 536870912
    %v518 = vshrl.u32 %v517, 30
    %v519 = vshll.u32 %v518, 30
    %v520 = vsub.s32 %v516, %v519
    %vm521 = vcmp.lt.s32.totalorder %v520, 0
    %v522 = vsub.s32 0, %v520
    %v523 = vsel %vm521, %v522, %v520
    %v524 = vclz %v523
    %v525 = vsub.s32 %v524, 2
    %vm526 = vcmp.gt.s32.totalorder 0, %v525
    %v527 = vsel %vm526, 0, %v525
    %v528 = vsub.s32 32, %v527
    %v529 = vshll.u32 %v520, %v527
    %v530 = vshrl.u32 %v512, %v528
    %v531 = vor.u32 %v529, %v530
    %v532 = vsub.s32 4294967266, %v527
    %v533 = vadd.s32 %v532, 127
    %v534 = vshll.u32 %v533, 23
    %v535 = vor.u32 4788187, %v534
    %v536 = vand.u32 2147483647, %v535
    %v538 = vcvt.s32.f32 %v531
    %v539 = vmul.f32 %v538, %v536
    %v540 = vxor.u32 %v539, 2147483648
    %v541 = vsel %vm458, %v540, %v539
    %v542 = vsub.s32 4, %v518
    %v543 = vsel %vm458, %v542, %v518
    %v544 = vsel %vm457, %v228, %v541
    %v545 = vsel %vm457, 0, %v543
    %v546 = vcosq.f32.pop %v544
    %v547 = vsinq.f32.pop %v544
    %vm548 = vweird.f32 %v228
    %v549 = vand.u32 %v545, 3
    %vm550 = vcmp.lt.s32.totalorder %v549, 2
    %vm551 = vcmp.eq.s32.totalorder %v549, 0
    %v552 = vxor.u32 %v547, 2147483648
    %v553 = vsel %vm551, %v546, %v552
    %vm554 = vcmp.eq.s32.totalorder %v549, 2
    %v555 = vxor.u32 %v546, 2147483648
    %v556 = vsel %vm554, %v555, %v547
    %v557 = vsel %vm550, %v553, %v556
    %v558 = vsel %vm548, nan, %v557
    %v559 = vand.u32 2147483647, %v229
    %vm560 = vcmp.le.f32.partialorder %v559, 0.7853982
    %vm561 = vcmp.lt.s32.totalorder %v229, 0
    %v562 = vand.u32 %v229, 2139095040
    %v563 = vshrl.u32 %v562, 23
    %v564 = vsub.s32 %v563, 127
    %v565 = vand.u32 2147483647, %v229
    %v566 = vand.u32 %v565, 8388607
    %v567 = vor.u32 %v566, 8388608
    %v568 = vsub.s32 0, %v567
    %v569 = vadd.s32 %v564, 1
    %vm570 = vcmp.gt.s32.totalorder %v569, 0
    %v571 = vsel %vm570, %v569, 0
    %v572 = vshrl.u32 %v571, 5
    %v573 = vand.u32 %v571, 31
    %v574 = vsub.s32 32, %v573
    %v575 = vshrl.u32 683565275, %v574
    %v576 = vshll.u32 683565275, %v573
    %v577 = vshrl.u32 2475754826, %v574
    %v578 = vor.u32 %v576, %v577
    %v579 = vshll.u32 2475754826, %v573
    %v580 = vshrl.u32 2131351028, %v574
    %v581 = vor.u32 %v579, %v580
    %v582 = vshll.u32 2131351028, %v573
    %v583 = vshrl.u32 2102212464, %v574
    %v584 = vor.u32 %v582, %v583
    %v585 = vshll.u32 2102212464, %v573
    %v586 = vshrl.u32 920167782, %v574
    %v587 = vor.u32 %v585, %v586
    %v588 = vshll.u32 920167782, %v573
    %v589 = vshrl.u32 1326507024, %v574
    %v590 = vor.u32 %v588, %v589
    %vm591 = vcmp.lt.s32.totalorder %v572, 1
    %vm592 = vcmp.lt.s32.totalorder %v572, 2
    %vm593 = vcmp.lt.s32.totalorder %v572, 3
    %vm594 = vcmp.lt.s32.totalorder %v572, 4
    %v595 = vsel %vm591, %v575, %v578
    %v596 = vsel %vm594, %v584, 2102212464
    %v597 = vsel %vm593, %v581, %v596
    %v598 = vsel %vm592, %v595, %v597
    %v599 = vsel %vm591, %v578, %v581
    %v600 = vsel %vm594, %v587, 920167782
    %v601 = vsel %vm593, %v584, %v600
    %v602 = vsel %vm592, %v599, %v601
    %v603 = vsel %vm591, %v581, %v584
    %v604 = vsel %vm594, %v590, 1326507024
    %v605 = vsel %vm593, %v587, %v604
    %v606 = vsel %vm592, %v603, %v605
    %v607 = vshll.u32 %v567, 8
    %v608 = vmul.u32.u64.compose %v607, %v606
    %v609 = vextract.low.u32 %v608
    %v610 = vextract.high.u32 %v608
    %v611 = vmul.u32.u64.compose %v607, %v602
    %v612 = vextract.low.u32 %v611
    %v613 = vextract.high.u32 %v611
    %v614 = vmul.u32 %v607, %v598
    %v615 = vadd.s32 %v610, %v612
    %vm616 = vc.u32 %v610, %v612
    %v617 = vadd.s32 %v613, 1
    %v618 = vsel %vm616, %v617, %v613
    %v619 = vadd.s32 %v614, %v618
    %v620 = vadd.s32 %v619, 536870912
    %v621 = vshrl.u32 %v620, 30
    %v622 = vshll.u32 %v621, 30
    %v623 = vsub.s32 %v619, %v622
    %vm624 = vcmp.lt.s32.totalorder %v623, 0
    %v625 = vsub.s32 0, %v623
    %v626 = vsel %vm624, %v625, %v623
    %v627 = vclz %v626
    %v628 = vsub.s32 %v627, 2
    %vm629 = vcmp.gt.s32.totalorder 0, %v628
    %v630 = vsel %vm629, 0, %v628
    %v631 = vsub.s32 32, %v630
    %v632 = vshll.u32 %v623, %v630
    %v633 = vshrl.u32 %v615, %v631
    %v634 = vor.u32 %v632, %v633
    %v635 = vsub.s32 4294967266, %v630
    %v636 = vadd.s32 %v635, 127
    %v637 = vshll.u32 %v636, 23
    %v638 = vor.u32 4788187, %v637
    %v639 = vand.u32 2147483647, %v638
    %v641 = vcvt.s32.f32 %v634
    %v642 = vmul.f32 %v641, %v639
    %v643 = vxor.u32 %v642, 2147483648
    %v644 = vsel %vm561, %v643, %v642
    %v645 = vsub.s32 4, %v621
    %v646 = vsel %vm561, %v645, %v621
    %v647 = vsel %vm560, %v229, %v644
    %v648 = vsel %vm560, 0, %v646
    %v649 = vcosq.f32.pop %v647
    %v650 = vsinq.f32.pop %v647
    %vm651 = vweird.f32 %v229
    %v652 = vand.u32 %v648, 3
    %vm653 = vcmp.lt.s32.totalorder %v652, 2
    %vm654 = vcmp.eq.s32.totalorder %v652, 0
    %v655 = vxor.u32 %v650, 2147483648
    %v656 = vsel %vm654, %v649, %v655
    %vm657 = vcmp.eq.s32.totalorder %v652, 2
    %v658 = vxor.u32 %v649, 2147483648
    %v659 = vsel %vm657, %v658, %v650
    %v660 = vsel %vm653, %v656, %v659
    %v661 = vsel %vm651, nan, %v660
    %v662 = vand.u32 2147483647, %v230
    %vm663 = vcmp.le.f32.partialorder %v662, 0.7853982
    %vm664 = vcmp.lt.s32.totalorder %v230, 0
    %v665 = vand.u32 %v230, 2139095040
    %v666 = vshrl.u32 %v665, 23
    %v667 = vsub.s32 %v666, 127
    %v668 = vand.u32 2147483647, %v230
    %v669 = vand.u32 %v668, 8388607
    %v670 = vor.u32 %v669, 8388608
    %v671 = vsub.s32 0, %v670
    %v672 = vadd.s32 %v667, 1
    %vm673 = vcmp.gt.s32.totalorder %v672, 0
    %v674 = vsel %vm673, %v672, 0
    %v675 = vshrl.u32 %v674, 5
    %v676 = vand.u32 %v674, 31
    %v677 = vsub.s32 32, %v676
    %v678 = vshrl.u32 683565275, %v677
    %v679 = vshll.u32 683565275, %v676
    %v680 = vshrl.u32 2475754826, %v677
    %v681 = vor.u32 %v679, %v680
    %v682 = vshll.u32 2475754826, %v676
    %v683 = vshrl.u32 2131351028, %v677
    %v684 = vor.u32 %v682, %v683
    %v685 = vshll.u32 2131351028, %v676
    %v686 = vshrl.u32 2102212464, %v677
    %v687 = vor.u32 %v685, %v686
    %v688 = vshll.u32 2102212464, %v676
    %v689 = vshrl.u32 920167782, %v677
    %v690 = vor.u32 %v688, %v689
    %v691 = vshll.u32 920167782, %v676
    %v692 = vshrl.u32 1326507024, %v677
    %v693 = vor.u32 %v691, %v692
    %vm694 = vcmp.lt.s32.totalorder %v675, 1
    %vm695 = vcmp.lt.s32.totalorder %v675, 2
    %vm696 = vcmp.lt.s32.totalorder %v675, 3
    %vm697 = vcmp.lt.s32.totalorder %v675, 4
    %v698 = vsel %vm694, %v678, %v681
    %v699 = vsel %vm697, %v687, 2102212464
    %v700 = vsel %vm696, %v684, %v699
    %v701 = vsel %vm695, %v698, %v700
    %v702 = vsel %vm694, %v681, %v684
    %v703 = vsel %vm697, %v690, 920167782
    %v704 = vsel %vm696, %v687, %v703
    %v705 = vsel %vm695, %v702, %v704
    %v706 = vsel %vm694, %v684, %v687
    %v707 = vsel %vm697, %v693, 1326507024
    %v708 = vsel %vm696, %v690, %v707
    %v709 = vsel %vm695, %v706, %v708
    %v710 = vshll.u32 %v670, 8
    %v711 = vmul.u32.u64.compose %v710, %v709
    %v712 = vextract.low.u32 %v711
    %v713 = vextract.high.u32 %v711
    %v714 = vmul.u32.u64.compose %v710, %v705
    %v715 = vextract.low.u32 %v714
    %v716 = vextract.high.u32 %v714
    %v717 = vmul.u32 %v710, %v701
    %v718 = vadd.s32 %v713, %v715
    %vm719 = vc.u32 %v713, %v715
    %v720 = vadd.s32 %v716, 1
    %v721 = vsel %vm719, %v720, %v716
    %v722 = vadd.s32 %v717, %v721
    %v723 = vadd.s32 %v722, 536870912
    %v724 = vshrl.u32 %v723, 30
    %v725 = vshll.u32 %v724, 30
    %v726 = vsub.s32 %v722, %v725
    %vm727 = vcmp.lt.s32.totalorder %v726, 0
    %v728 = vsub.s32 0, %v726
    %v729 = vsel %vm727, %v728, %v726
    %v730 = vclz %v729
    %v731 = vsub.s32 %v730, 2
    %vm732 = vcmp.gt.s32.totalorder 0, %v731
    %v733 = vsel %vm732, 0, %v731
    %v734 = vsub.s32 32, %v733
    %v735 = vshll.u32 %v726, %v733
    %v736 = vshrl.u32 %v718, %v734
    %v737 = vor.u32 %v735, %v736
    %v738 = vsub.s32 4294967266, %v733
    %v739 = vadd.s32 %v738, 127
    %v740 = vshll.u32 %v739, 23
    %v741 = vor.u32 4788187, %v740
    %v742 = vand.u32 2147483647, %v741
    %v744 = vcvt.s32.f32 %v737
    %v745 = vmul.f32 %v744, %v742
    %v746 = vxor.u32 %v745, 2147483648
    %v747 = vsel %vm664, %v746, %v745
    %v748 = vsub.s32 4, %v724
    %v749 = vsel %vm664, %v748, %v724
    %v750 = vsel %vm663, %v230, %v747
    %v751 = vsel %vm663, 0, %v749
    %v752 = vcosq.f32.pop %v750
    %v753 = vsinq.f32.pop %v750
    %vm754 = vweird.f32 %v230
    %v755 = vand.u32 %v751, 3
    %vm756 = vcmp.lt.s32.totalorder %v755, 2
    %vm757 = vcmp.eq.s32.totalorder %v755, 0
    %v758 = vxor.u32 %v753, 2147483648
    %v759 = vsel %vm757, %v752, %v758
    %vm760 = vcmp.eq.s32.totalorder %v755, 2
    %v761 = vxor.u32 %v752, 2147483648
    %v762 = vsel %vm760, %v761, %v753
    %v763 = vsel %vm756, %v759, %v762
    %v764 = vsel %vm754, nan, %v763
    %v765 = vand.u32 2147483647, %v231
    %vm766 = vcmp.le.f32.partialorder %v765, 0.7853982
    %vm767 = vcmp.lt.s32.totalorder %v231, 0
    %v768 = vand.u32 %v231, 2139095040
    %v769 = vshrl.u32 %v768, 23
    %v770 = vsub.s32 %v769, 127
    %v771 = vand.u32 2147483647, %v231
    %v772 = vand.u32 %v771, 8388607
    %v773 = vor.u32 %v772, 8388608
    %v774 = vsub.s32 0, %v773
    %v775 = vadd.s32 %v770, 1
    %vm776 = vcmp.gt.s32.totalorder %v775, 0
    %v777 = vsel %vm776, %v775, 0
    %v778 = vshrl.u32 %v777, 5
    %v779 = vand.u32 %v777, 31
    %v780 = vsub.s32 32, %v779
    %v781 = vshrl.u32 683565275, %v780
    %v782 = vshll.u32 683565275, %v779
    %v783 = vshrl.u32 2475754826, %v780
    %v784 = vor.u32 %v782, %v783
    %v785 = vshll.u32 2475754826, %v779
    %v786 = vshrl.u32 2131351028, %v780
    %v787 = vor.u32 %v785, %v786
    %v788 = vshll.u32 2131351028, %v779
    %v789 = vshrl.u32 2102212464, %v780
    %v790 = vor.u32 %v788, %v789
    %v791 = vshll.u32 2102212464, %v779
    %v792 = vshrl.u32 920167782, %v780
    %v793 = vor.u32 %v791, %v792
    %v794 = vshll.u32 920167782, %v779
    %v795 = vshrl.u32 1326507024, %v780
    %v796 = vor.u32 %v794, %v795
    %vm797 = vcmp.lt.s32.totalorder %v778, 1
    %vm798 = vcmp.lt.s32.totalorder %v778, 2
    %vm799 = vcmp.lt.s32.totalorder %v778, 3
    %vm800 = vcmp.lt.s32.totalorder %v778, 4
    %v801 = vsel %vm797, %v781, %v784
    %v802 = vsel %vm800, %v790, 2102212464
    %v803 = vsel %vm799, %v787, %v802
    %v804 = vsel %vm798, %v801, %v803
    %v805 = vsel %vm797, %v784, %v787
    %v806 = vsel %vm800, %v793, 920167782
    %v807 = vsel %vm799, %v790, %v806
    %v808 = vsel %vm798, %v805, %v807
    %v809 = vsel %vm797, %v787, %v790
    %v810 = vsel %vm800, %v796, 1326507024
    %v811 = vsel %vm799, %v793, %v810
    %v812 = vsel %vm798, %v809, %v811
    %v813 = vshll.u32 %v773, 8
    %v814 = vmul.u32.u64.compose %v813, %v812
    %v815 = vextract.low.u32 %v814
    %v816 = vextract.high.u32 %v814
    %v817 = vmul.u32.u64.compose %v813, %v808
    %v818 = vextract.low.u32 %v817
    %v819 = vextract.high.u32 %v817
    %v820 = vmul.u32 %v813, %v804
    %v821 = vadd.s32 %v816, %v818
    %vm822 = vc.u32 %v816, %v818
    %v823 = vadd.s32 %v819, 1
    %v824 = vsel %vm822, %v823, %v819
    %v825 = vadd.s32 %v820, %v824
    %v826 = vadd.s32 %v825, 536870912
    %v827 = vshrl.u32 %v826, 30
    %v828 = vshll.u32 %v827, 30
    %v829 = vsub.s32 %v825, %v828
    %vm830 = vcmp.lt.s32.totalorder %v829, 0
    %v831 = vsub.s32 0, %v829
    %v832 = vsel %vm830, %v831, %v829
    %v833 = vclz %v832
    %v834 = vsub.s32 %v833, 2
    %vm835 = vcmp.gt.s32.totalorder 0, %v834
    %v836 = vsel %vm835, 0, %v834
    %v837 = vsub.s32 32, %v836
    %v838 = vshll.u32 %v829, %v836
    %v839 = vshrl.u32 %v821, %v837
    %v840 = vor.u32 %v838, %v839
    %v841 = vsub.s32 4294967266, %v836
    %v842 = vadd.s32 %v841, 127
    %v843 = vshll.u32 %v842, 23
    %v844 = vor.u32 4788187, %v843
    %v845 = vand.u32 2147483647, %v844
    %v847 = vcvt.s32.f32 %v840
    %v848 = vmul.f32 %v847, %v845
    %v849 = vxor.u32 %v848, 2147483648
    %v850 = vsel %vm767, %v849, %v848
    %v851 = vsub.s32 4, %v827
    %v852 = vsel %vm767, %v851, %v827
    %v853 = vsel %vm766, %v231, %v850
    %v854 = vsel %vm766, 0, %v852
    %v855 = vcosq.f32.pop %v853
    %v856 = vsinq.f32.pop %v853
    %vm857 = vweird.f32 %v231
    %v858 = vand.u32 %v854, 3
    %vm859 = vcmp.lt.s32.totalorder %v858, 2
    %vm860 = vcmp.eq.s32.totalorder %v858, 0
    %v861 = vxor.u32 %v856, 2147483648
    %v862 = vsel %vm860, %v855, %v861
    %vm863 = vcmp.eq.s32.totalorder %v858, 2
    %v864 = vxor.u32 %v855, 2147483648
    %v865 = vsel %vm863, %v864, %v856
    %v866 = vsel %vm859, %v862, %v865
    %v867 = vsel %vm857, nan, %v866
    %v868 = vand.u32 2147483647, %v232
    %vm869 = vcmp.le.f32.partialorder %v868, 0.7853982
    %vm870 = vcmp.lt.s32.totalorder %v232, 0
    %v871 = vand.u32 %v232, 2139095040
    %v872 = vshrl.u32 %v871, 23
    %v873 = vsub.s32 %v872, 127
    %v874 = vand.u32 2147483647, %v232
    %v875 = vand.u32 %v874, 8388607
    %v876 = vor.u32 %v875, 8388608
    %v877 = vsub.s32 0, %v876
    %v878 = vadd.s32 %v873, 1
    %vm879 = vcmp.gt.s32.totalorder %v878, 0
    %v880 = vsel %vm879, %v878, 0
    %v881 = vshrl.u32 %v880, 5
    %v882 = vand.u32 %v880, 31
    %v883 = vsub.s32 32, %v882
    %v884 = vshrl.u32 683565275, %v883
    %v885 = vshll.u32 683565275, %v882
    %v886 = vshrl.u32 2475754826, %v883
    %v887 = vor.u32 %v885, %v886
    %v888 = vshll.u32 2475754826, %v882
    %v889 = vshrl.u32 2131351028, %v883
    %v890 = vor.u32 %v888, %v889
    %v891 = vshll.u32 2131351028, %v882
    %v892 = vshrl.u32 2102212464, %v883
    %v893 = vor.u32 %v891, %v892
    %v894 = vshll.u32 2102212464, %v882
    %v895 = vshrl.u32 920167782, %v883
    %v896 = vor.u32 %v894, %v895
    %v897 = vshll.u32 920167782, %v882
    %v898 = vshrl.u32 1326507024, %v883
    %v899 = vor.u32 %v897, %v898
    %vm900 = vcmp.lt.s32.totalorder %v881, 1
    %vm901 = vcmp.lt.s32.totalorder %v881, 2
    %vm902 = vcmp.lt.s32.totalorder %v881, 3
    %vm903 = vcmp.lt.s32.totalorder %v881, 4
    %v904 = vsel %vm900, %v884, %v887
    %v905 = vsel %vm903, %v893, 2102212464
    %v906 = vsel %vm902, %v890, %v905
    %v907 = vsel %vm901, %v904, %v906
    %v908 = vsel %vm900, %v887, %v890
    %v909 = vsel %vm903, %v896, 920167782
    %v910 = vsel %vm902, %v893, %v909
    %v911 = vsel %vm901, %v908, %v910
    %v912 = vsel %vm900, %v890, %v893
    %v913 = vsel %vm903, %v899, 1326507024
    %v914 = vsel %vm902, %v896, %v913
    %v915 = vsel %vm901, %v912, %v914
    %v916 = vshll.u32 %v876, 8
    %v917 = vmul.u32.u64.compose %v916, %v915
    %v918 = vextract.low.u32 %v917
    %v919 = vextract.high.u32 %v917
    %v920 = vmul.u32.u64.compose %v916, %v911
    %v921 = vextract.low.u32 %v920
    %v922 = vextract.high.u32 %v920
    %v923 = vmul.u32 %v916, %v907
    %v924 = vadd.s32 %v919, %v921
    %vm925 = vc.u32 %v919, %v921
    %v926 = vadd.s32 %v922, 1
    %v927 = vsel %vm925, %v926, %v922
    %v928 = vadd.s32 %v923, %v927
    %v929 = vadd.s32 %v928, 536870912
    %v930 = vshrl.u32 %v929, 30
    %v931 = vshll.u32 %v930, 30
    %v932 = vsub.s32 %v928, %v931
    %vm933 = vcmp.lt.s32.totalorder %v932, 0
    %v934 = vsub.s32 0, %v932
    %v935 = vsel %vm933, %v934, %v932
    %v936 = vclz %v935
    %v937 = vsub.s32 %v936, 2
    %vm938 = vcmp.gt.s32.totalorder 0, %v937
    %v939 = vsel %vm938, 0, %v937
    %v940 = vsub.s32 32, %v939
    %v941 = vshll.u32 %v932, %v939
    %v942 = vshrl.u32 %v924, %v940
    %v943 = vor.u32 %v941, %v942
    %v944 = vsub.s32 4294967266, %v939
    %v945 = vadd.s32 %v944, 127
    %v946 = vshll.u32 %v945, 23
    %v947 = vor.u32 4788187, %v946
    %v948 = vand.u32 2147483647, %v947
    %v950 = vcvt.s32.f32 %v943
    %v951 = vmul.f32 %v950, %v948
    %v952 = vxor.u32 %v951, 2147483648
    %v953 = vsel %vm870, %v952, %v951
    %v954 = vsub.s32 4, %v930
    %v955 = vsel %vm870, %v954, %v930
    %v956 = vsel %vm869, %v232, %v953
    %v957 = vsel %vm869, 0, %v955
    %v958 = vcosq.f32.pop %v956
    %v959 = vsinq.f32.pop %v956
    %vm960 = vweird.f32 %v232
    %v961 = vand.u32 %v957, 3
    %vm962 = vcmp.lt.s32.totalorder %v961, 2
    %vm963 = vcmp.eq.s32.totalorder %v961, 0
    %v964 = vxor.u32 %v959, 2147483648
    %v965 = vsel %vm963, %v958, %v964
    %vm966 = vcmp.eq.s32.totalorder %v961, 2
    %v967 = vxor.u32 %v958, 2147483648
    %v968 = vsel %vm966, %v967, %v959
    %v969 = vsel %vm962, %v965, %v968
    %v970 = vsel %vm960, nan, %v969
    %v971 = vand.u32 2147483647, %v233
    %vm972 = vcmp.le.f32.partialorder %v971, 0.7853982
    %vm973 = vcmp.lt.s32.totalorder %v233, 0
    %v974 = vand.u32 %v233, 2139095040
    %v975 = vshrl.u32 %v974, 23
    %v976 = vsub.s32 %v975, 127
    %v977 = vand.u32 2147483647, %v233
    %v978 = vand.u32 %v977, 8388607
    %v979 = vor.u32 %v978, 8388608
    %v980 = vsub.s32 0, %v979
    %v981 = vadd.s32 %v976, 1
    %vm982 = vcmp.gt.s32.totalorder %v981, 0
    %v983 = vsel %vm982, %v981, 0
    %v984 = vshrl.u32 %v983, 5
    %v985 = vand.u32 %v983, 31
    %v986 = vsub.s32 32, %v985
    %v987 = vshrl.u32 683565275, %v986
    %v988 = vshll.u32 683565275, %v985
    %v989 = vshrl.u32 2475754826, %v986
    %v990 = vor.u32 %v988, %v989
    %v991 = vshll.u32 2475754826, %v985
    %v992 = vshrl.u32 2131351028, %v986
    %v993 = vor.u32 %v991, %v992
    %v994 = vshll.u32 2131351028, %v985
    %v995 = vshrl.u32 2102212464, %v986
    %v996 = vor.u32 %v994, %v995
    %v997 = vshll.u32 2102212464, %v985
    %v998 = vshrl.u32 920167782, %v986
    %v999 = vor.u32 %v997, %v998
    %v1000 = vshll.u32 920167782, %v985
    %v1001 = vshrl.u32 1326507024, %v986
    %v1002 = vor.u32 %v1000, %v1001
    %vm1003 = vcmp.lt.s32.totalorder %v984, 1
    %vm1004 = vcmp.lt.s32.totalorder %v984, 2
    %vm1005 = vcmp.lt.s32.totalorder %v984, 3
    %vm1006 = vcmp.lt.s32.totalorder %v984, 4
    %v1007 = vsel %vm1003, %v987, %v990
    %v1008 = vsel %vm1006, %v996, 2102212464
    %v1009 = vsel %vm1005, %v993, %v1008
    %v1010 = vsel %vm1004, %v1007, %v1009
    %v1011 = vsel %vm1003, %v990, %v993
    %v1012 = vsel %vm1006, %v999, 920167782
    %v1013 = vsel %vm1005, %v996, %v1012
    %v1014 = vsel %vm1004, %v1011, %v1013
    %v1015 = vsel %vm1003, %v993, %v996
    %v1016 = vsel %vm1006, %v1002, 1326507024
    %v1017 = vsel %vm1005, %v999, %v1016
    %v1018 = vsel %vm1004, %v1015, %v1017
    %v1019 = vshll.u32 %v979, 8
    %v1020 = vmul.u32.u64.compose %v1019, %v1018
    %v1021 = vextract.low.u32 %v1020
    %v1022 = vextract.high.u32 %v1020
    %v1023 = vmul.u32.u64.compose %v1019, %v1014
    %v1024 = vextract.low.u32 %v1023
    %v1025 = vextract.high.u32 %v1023
    %v1026 = vmul.u32 %v1019, %v1010
    %v1027 = vadd.s32 %v1022, %v1024
    %vm1028 = vc.u32 %v1022, %v1024
    %v1029 = vadd.s32 %v1025, 1
    %v1030 = vsel %vm1028, %v1029, %v1025
    %v1031 = vadd.s32 %v1026, %v1030
    %v1032 = vadd.s32 %v1031, 536870912
    %v1033 = vshrl.u32 %v1032, 30
    %v1034 = vshll.u32 %v1033, 30
    %v1035 = vsub.s32 %v1031, %v1034
    %vm1036 = vcmp.lt.s32.totalorder %v1035, 0
    %v1037 = vsub.s32 0, %v1035
    %v1038 = vsel %vm1036, %v1037, %v1035
    %v1039 = vclz %v1038
    %v1040 = vsub.s32 %v1039, 2
    %vm1041 = vcmp.gt.s32.totalorder 0, %v1040
    %v1042 = vsel %vm1041, 0, %v1040
    %v1043 = vsub.s32 32, %v1042
    %v1044 = vshll.u32 %v1035, %v1042
    %v1045 = vshrl.u32 %v1027, %v1043
    %v1046 = vor.u32 %v1044, %v1045
    %v1047 = vsub.s32 4294967266, %v1042
    %v1048 = vadd.s32 %v1047, 127
    %v1049 = vshll.u32 %v1048, 23
    %v1050 = vor.u32 4788187, %v1049
    %v1051 = vand.u32 2147483647, %v1050
    %v1053 = vcvt.s32.f32 %v1046
    %v1054 = vmul.f32 %v1053, %v1051
    %v1055 = vxor.u32 %v1054, 2147483648
    %v1056 = vsel %vm973, %v1055, %v1054
    %v1057 = vsub.s32 4, %v1033
    %v1058 = vsel %vm973, %v1057, %v1033
    %v1059 = vsel %vm972, %v233, %v1056
    %v1060 = vsel %vm972, 0, %v1058
    %v1061 = vcosq.f32.pop %v1059
    %v1062 = vsinq.f32.pop %v1059
    %vm1063 = vweird.f32 %v233
    %v1064 = vand.u32 %v1060, 3
    %vm1065 = vcmp.lt.s32.totalorder %v1064, 2
    %vm1066 = vcmp.eq.s32.totalorder %v1064, 0
    %v1067 = vxor.u32 %v1062, 2147483648
    %v1068 = vsel %vm1066, %v1061, %v1067
    %vm1069 = vcmp.eq.s32.totalorder %v1064, 2
    %v1070 = vxor.u32 %v1061, 2147483648
    %v1071 = vsel %vm1069, %v1070, %v1062
    %v1072 = vsel %vm1065, %v1068, %v1071
    %v1073 = vsel %vm1063, nan, %v1072
    %v1074 = vand.u32 2147483647, %v234
    %vm1075 = vcmp.le.f32.partialorder %v1074, 0.7853982
    %vm1076 = vcmp.lt.s32.totalorder %v234, 0
    %v1077 = vand.u32 %v234, 2139095040
    %v1078 = vshrl.u32 %v1077, 23
    %v1079 = vsub.s32 %v1078, 127
    %v1080 = vand.u32 2147483647, %v234
    %v1081 = vand.u32 %v1080, 8388607
    %v1082 = vor.u32 %v1081, 8388608
    %v1083 = vsub.s32 0, %v1082
    %v1084 = vadd.s32 %v1079, 1
    %vm1085 = vcmp.gt.s32.totalorder %v1084, 0
    %v1086 = vsel %vm1085, %v1084, 0
    %v1087 = vshrl.u32 %v1086, 5
    %v1088 = vand.u32 %v1086, 31
    %v1089 = vsub.s32 32, %v1088
    %v1090 = vshrl.u32 683565275, %v1089
    %v1091 = vshll.u32 683565275, %v1088
    %v1092 = vshrl.u32 2475754826, %v1089
    %v1093 = vor.u32 %v1091, %v1092
    %v1094 = vshll.u32 2475754826, %v1088
    %v1095 = vshrl.u32 2131351028, %v1089
    %v1096 = vor.u32 %v1094, %v1095
    %v1097 = vshll.u32 2131351028, %v1088
    %v1098 = vshrl.u32 2102212464, %v1089
    %v1099 = vor.u32 %v1097, %v1098
    %v1100 = vshll.u32 2102212464, %v1088
    %v1101 = vshrl.u32 920167782, %v1089
    %v1102 = vor.u32 %v1100, %v1101
    %v1103 = vshll.u32 920167782, %v1088
    %v1104 = vshrl.u32 1326507024, %v1089
    %v1105 = vor.u32 %v1103, %v1104
    %vm1106 = vcmp.lt.s32.totalorder %v1087, 1
    %vm1107 = vcmp.lt.s32.totalorder %v1087, 2
    %vm1108 = vcmp.lt.s32.totalorder %v1087, 3
    %vm1109 = vcmp.lt.s32.totalorder %v1087, 4
    %v1110 = vsel %vm1106, %v1090, %v1093
    %v1111 = vsel %vm1109, %v1099, 2102212464
    %v1112 = vsel %vm1108, %v1096, %v1111
    %v1113 = vsel %vm1107, %v1110, %v1112
    %v1114 = vsel %vm1106, %v1093, %v1096
    %v1115 = vsel %vm1109, %v1102, 920167782
    %v1116 = vsel %vm1108, %v1099, %v1115
    %v1117 = vsel %vm1107, %v1114, %v1116
    %v1118 = vsel %vm1106, %v1096, %v1099
    %v1119 = vsel %vm1109, %v1105, 1326507024
    %v1120 = vsel %vm1108, %v1102, %v1119
    %v1121 = vsel %vm1107, %v1118, %v1120
    %v1122 = vshll.u32 %v1082, 8
    %v1123 = vmul.u32.u64.compose %v1122, %v1121
    %v1124 = vextract.low.u32 %v1123
    %v1125 = vextract.high.u32 %v1123
    %v1126 = vmul.u32.u64.compose %v1122, %v1117
    %v1127 = vextract.low.u32 %v1126
    %v1128 = vextract.high.u32 %v1126
    %v1129 = vmul.u32 %v1122, %v1113
    %v1130 = vadd.s32 %v1125, %v1127
    %vm1131 = vc.u32 %v1125, %v1127
    %v1132 = vadd.s32 %v1128, 1
    %v1133 = vsel %vm1131, %v1132, %v1128
    %v1134 = vadd.s32 %v1129, %v1133
    %v1135 = vadd.s32 %v1134, 536870912
    %v1136 = vshrl.u32 %v1135, 30
    %v1137 = vshll.u32 %v1136, 30
    %v1138 = vsub.s32 %v1134, %v1137
    %vm1139 = vcmp.lt.s32.totalorder %v1138, 0
    %v1140 = vsub.s32 0, %v1138
    %v1141 = vsel %vm1139, %v1140, %v1138
    %v1142 = vclz %v1141
    %v1143 = vsub.s32 %v1142, 2
    %vm1144 = vcmp.gt.s32.totalorder 0, %v1143
    %v1145 = vsel %vm1144, 0, %v1143
    %v1146 = vsub.s32 32, %v1145
    %v1147 = vshll.u32 %v1138, %v1145
    %v1148 = vshrl.u32 %v1130, %v1146
    %v1149 = vor.u32 %v1147, %v1148
    %v1150 = vsub.s32 4294967266, %v1145
    %v1151 = vadd.s32 %v1150, 127
    %v1152 = vshll.u32 %v1151, 23
    %v1153 = vor.u32 4788187, %v1152
    %v1154 = vand.u32 2147483647, %v1153
    %v1156 = vcvt.s32.f32 %v1149
    %v1157 = vmul.f32 %v1156, %v1154
    %v1158 = vxor.u32 %v1157, 2147483648
    %v1159 = vsel %vm1076, %v1158, %v1157
    %v1160 = vsub.s32 4, %v1136
    %v1161 = vsel %vm1076, %v1160, %v1136
    %v1162 = vsel %vm1075, %v234, %v1159
    %v1163 = vsel %vm1075, 0, %v1161
    %v1164 = vcosq.f32.pop %v1162
    %v1165 = vsinq.f32.pop %v1162
    %vm1166 = vweird.f32 %v234
    %v1167 = vand.u32 %v1163, 3
    %vm1168 = vcmp.lt.s32.totalorder %v1167, 2
    %vm1169 = vcmp.eq.s32.totalorder %v1167, 0
    %v1170 = vxor.u32 %v1165, 2147483648
    %v1171 = vsel %vm1169, %v1164, %v1170
    %vm1172 = vcmp.eq.s32.totalorder %v1167, 2
    %v1173 = vxor.u32 %v1164, 2147483648
    %v1174 = vsel %vm1172, %v1173, %v1165
    %v1175 = vsel %vm1168, %v1171, %v1174
    %v1176 = vsel %vm1166, nan, %v1175
    %v1177 = vand.u32 2147483647, %v235
    %vm1178 = vcmp.le.f32.partialorder %v1177, 0.7853982
    %vm1179 = vcmp.lt.s32.totalorder %v235, 0
    %v1180 = vand.u32 %v235, 2139095040
    %v1181 = vshrl.u32 %v1180, 23
    %v1182 = vsub.s32 %v1181, 127
    %v1183 = vand.u32 2147483647, %v235
    %v1184 = vand.u32 %v1183, 8388607
    %v1185 = vor.u32 %v1184, 8388608
    %v1186 = vsub.s32 0, %v1185
    %v1187 = vadd.s32 %v1182, 1
    %vm1188 = vcmp.gt.s32.totalorder %v1187, 0
    %v1189 = vsel %vm1188, %v1187, 0
    %v1190 = vshrl.u32 %v1189, 5
    %v1191 = vand.u32 %v1189, 31
    %v1192 = vsub.s32 32, %v1191
    %v1193 = vshrl.u32 683565275, %v1192
    %v1194 = vshll.u32 683565275, %v1191
    %v1195 = vshrl.u32 2475754826, %v1192
    %v1196 = vor.u32 %v1194, %v1195
    %v1197 = vshll.u32 2475754826, %v1191
    %v1198 = vshrl.u32 2131351028, %v1192
    %v1199 = vor.u32 %v1197, %v1198
    %v1200 = vshll.u32 2131351028, %v1191
    %v1201 = vshrl.u32 2102212464, %v1192
    %v1202 = vor.u32 %v1200, %v1201
    %v1203 = vshll.u32 2102212464, %v1191
    %v1204 = vshrl.u32 920167782, %v1192
    %v1205 = vor.u32 %v1203, %v1204
    %v1206 = vshll.u32 920167782, %v1191
    %v1207 = vshrl.u32 1326507024, %v1192
    %v1208 = vor.u32 %v1206, %v1207
    %vm1209 = vcmp.lt.s32.totalorder %v1190, 1
    %vm1210 = vcmp.lt.s32.totalorder %v1190, 2
    %vm1211 = vcmp.lt.s32.totalorder %v1190, 3
    %vm1212 = vcmp.lt.s32.totalorder %v1190, 4
    %v1213 = vsel %vm1209, %v1193, %v1196
    %v1214 = vsel %vm1212, %v1202, 2102212464
    %v1215 = vsel %vm1211, %v1199, %v1214
    %v1216 = vsel %vm1210, %v1213, %v1215
    %v1217 = vsel %vm1209, %v1196, %v1199
    %v1218 = vsel %vm1212, %v1205, 920167782
    %v1219 = vsel %vm1211, %v1202, %v1218
    %v1220 = vsel %vm1210, %v1217, %v1219
    %v1221 = vsel %vm1209, %v1199, %v1202
    %v1222 = vsel %vm1212, %v1208, 1326507024
    %v1223 = vsel %vm1211, %v1205, %v1222
    %v1224 = vsel %vm1210, %v1221, %v1223
    %v1225 = vshll.u32 %v1185, 8
    %v1226 = vmul.u32.u64.compose %v1225, %v1224
    %v1227 = vextract.low.u32 %v1226
    %v1228 = vextract.high.u32 %v1226
    %v1229 = vmul.u32.u64.compose %v1225, %v1220
    %v1230 = vextract.low.u32 %v1229
    %v1231 = vextract.high.u32 %v1229
    %v1232 = vmul.u32 %v1225, %v1216
    %v1233 = vadd.s32 %v1228, %v1230
    %vm1234 = vc.u32 %v1228, %v1230
    %v1235 = vadd.s32 %v1231, 1
    %v1236 = vsel %vm1234, %v1235, %v1231
    %v1237 = vadd.s32 %v1232, %v1236
    %v1238 = vadd.s32 %v1237, 536870912
    %v1239 = vshrl.u32 %v1238, 30
    %v1240 = vshll.u32 %v1239, 30
    %v1241 = vsub.s32 %v1237, %v1240
    %vm1242 = vcmp.lt.s32.totalorder %v1241, 0
    %v1243 = vsub.s32 0, %v1241
    %v1244 = vsel %vm1242, %v1243, %v1241
    %v1245 = vclz %v1244
    %v1246 = vsub.s32 %v1245, 2
    %vm1247 = vcmp.gt.s32.totalorder 0, %v1246
    %v1248 = vsel %vm1247, 0, %v1246
    %v1249 = vsub.s32 32, %v1248
    %v1250 = vshll.u32 %v1241, %v1248
    %v1251 = vshrl.u32 %v1233, %v1249
    %v1252 = vor.u32 %v1250, %v1251
    %v1253 = vsub.s32 4294967266, %v1248
    %v1254 = vadd.s32 %v1253, 127
    %v1255 = vshll.u32 %v1254, 23
    %v1256 = vor.u32 4788187, %v1255
    %v1257 = vand.u32 2147483647, %v1256
    %v1259 = vcvt.s32.f32 %v1252
    %v1260 = vmul.f32 %v1259, %v1257
    %v1261 = vxor.u32 %v1260, 2147483648
    %v1262 = vsel %vm1179, %v1261, %v1260
    %v1263 = vsub.s32 4, %v1239
    %v1264 = vsel %vm1179, %v1263, %v1239
    %v1265 = vsel %vm1178, %v235, %v1262
    %v1266 = vsel %vm1178, 0, %v1264
    %v1267 = vcosq.f32.pop %v1265
    %v1268 = vsinq.f32.pop %v1265
    %vm1269 = vweird.f32 %v235
    %v1270 = vand.u32 %v1266, 3
    %vm1271 = vcmp.lt.s32.totalorder %v1270, 2
    %vm1272 = vcmp.eq.s32.totalorder %v1270, 0
    %v1273 = vxor.u32 %v1268, 2147483648
    %v1274 = vsel %vm1272, %v1267, %v1273
    %vm1275 = vcmp.eq.s32.totalorder %v1270, 2
    %v1276 = vxor.u32 %v1267, 2147483648
    %v1277 = vsel %vm1275, %v1276, %v1268
    %v1278 = vsel %vm1271, %v1274, %v1277
    %v1279 = vsel %vm1269, nan, %v1278
    %v1280 = vand.u32 2147483647, %v236
    %vm1281 = vcmp.le.f32.partialorder %v1280, 0.7853982
    %vm1282 = vcmp.lt.s32.totalorder %v236, 0
    %v1283 = vand.u32 %v236, 2139095040
    %v1284 = vshrl.u32 %v1283, 23
    %v1285 = vsub.s32 %v1284, 127
    %v1286 = vand.u32 2147483647, %v236
    %v1287 = vand.u32 %v1286, 8388607
    %v1288 = vor.u32 %v1287, 8388608
    %v1289 = vsub.s32 0, %v1288
    %v1290 = vadd.s32 %v1285, 1
    %vm1291 = vcmp.gt.s32.totalorder %v1290, 0
    %v1292 = vsel %vm1291, %v1290, 0
    %v1293 = vshrl.u32 %v1292, 5
    %v1294 = vand.u32 %v1292, 31
    %v1295 = vsub.s32 32, %v1294
    %v1296 = vshrl.u32 683565275, %v1295
    %v1297 = vshll.u32 683565275, %v1294
    %v1298 = vshrl.u32 2475754826, %v1295
    %v1299 = vor.u32 %v1297, %v1298
    %v1300 = vshll.u32 2475754826, %v1294
    %v1301 = vshrl.u32 2131351028, %v1295
    %v1302 = vor.u32 %v1300, %v1301
    %v1303 = vshll.u32 2131351028, %v1294
    %v1304 = vshrl.u32 2102212464, %v1295
    %v1305 = vor.u32 %v1303, %v1304
    %v1306 = vshll.u32 2102212464, %v1294
    %v1307 = vshrl.u32 920167782, %v1295
    %v1308 = vor.u32 %v1306, %v1307
    %v1309 = vshll.u32 920167782, %v1294
    %v1310 = vshrl.u32 1326507024, %v1295
    %v1311 = vor.u32 %v1309, %v1310
    %vm1312 = vcmp.lt.s32.totalorder %v1293, 1
    %vm1313 = vcmp.lt.s32.totalorder %v1293, 2
    %vm1314 = vcmp.lt.s32.totalorder %v1293, 3
    %vm1315 = vcmp.lt.s32.totalorder %v1293, 4
    %v1316 = vsel %vm1312, %v1296, %v1299
    %v1317 = vsel %vm1315, %v1305, 2102212464
    %v1318 = vsel %vm1314, %v1302, %v1317
    %v1319 = vsel %vm1313, %v1316, %v1318
    %v1320 = vsel %vm1312, %v1299, %v1302
    %v1321 = vsel %vm1315, %v1308, 920167782
    %v1322 = vsel %vm1314, %v1305, %v1321
    %v1323 = vsel %vm1313, %v1320, %v1322
    %v1324 = vsel %vm1312, %v1302, %v1305
    %v1325 = vsel %vm1315, %v1311, 1326507024
    %v1326 = vsel %vm1314, %v1308, %v1325
    %v1327 = vsel %vm1313, %v1324, %v1326
    %v1328 = vshll.u32 %v1288, 8
    %v1329 = vmul.u32.u64.compose %v1328, %v1327
    %v1330 = vextract.low.u32 %v1329
    %v1331 = vextract.high.u32 %v1329
    %v1332 = vmul.u32.u64.compose %v1328, %v1323
    %v1333 = vextract.low.u32 %v1332
    %v1334 = vextract.high.u32 %v1332
    %v1335 = vmul.u32 %v1328, %v1319
    %v1336 = vadd.s32 %v1331, %v1333
    %vm1337 = vc.u32 %v1331, %v1333
    %v1338 = vadd.s32 %v1334, 1
    %v1339 = vsel %vm1337, %v1338, %v1334
    %v1340 = vadd.s32 %v1335, %v1339
    %v1341 = vadd.s32 %v1340, 536870912
    %v1342 = vshrl.u32 %v1341, 30
    %v1343 = vshll.u32 %v1342, 30
    %v1344 = vsub.s32 %v1340, %v1343
    %vm1345 = vcmp.lt.s32.totalorder %v1344, 0
    %v1346 = vsub.s32 0, %v1344
    %v1347 = vsel %vm1345, %v1346, %v1344
    %v1348 = vclz %v1347
    %v1349 = vsub.s32 %v1348, 2
    %vm1350 = vcmp.gt.s32.totalorder 0, %v1349
    %v1351 = vsel %vm1350, 0, %v1349
    %v1352 = vsub.s32 32, %v1351
    %v1353 = vshll.u32 %v1344, %v1351
    %v1354 = vshrl.u32 %v1336, %v1352
    %v1355 = vor.u32 %v1353, %v1354
    %v1356 = vsub.s32 4294967266, %v1351
    %v1357 = vadd.s32 %v1356, 127
    %v1358 = vshll.u32 %v1357, 23
    %v1359 = vor.u32 4788187, %v1358
    %v1360 = vand.u32 2147483647, %v1359
    %v1362 = vcvt.s32.f32 %v1355
    %v1363 = vmul.f32 %v1362, %v1360
    %v1364 = vxor.u32 %v1363, 2147483648
    %v1365 = vsel %vm1282, %v1364, %v1363
    %v1366 = vsub.s32 4, %v1342
    %v1367 = vsel %vm1282, %v1366, %v1342
    %v1368 = vsel %vm1281, %v236, %v1365
    %v1369 = vsel %vm1281, 0, %v1367
    %v1370 = vcosq.f32.pop %v1368
    %v1371 = vsinq.f32.pop %v1368
    %vm1372 = vweird.f32 %v236
    %v1373 = vand.u32 %v1369, 3
    %vm1374 = vcmp.lt.s32.totalorder %v1373, 2
    %vm1375 = vcmp.eq.s32.totalorder %v1373, 0
    %v1376 = vxor.u32 %v1371, 2147483648
    %v1377 = vsel %vm1375, %v1370, %v1376
    %vm1378 = vcmp.eq.s32.totalorder %v1373, 2
    %v1379 = vxor.u32 %v1370, 2147483648
    %v1380 = vsel %vm1378, %v1379, %v1371
    %v1381 = vsel %vm1374, %v1377, %v1380
    %v1382 = vsel %vm1372, nan, %v1381
    %v1383 = vand.u32 2147483647, %v237
    %vm1384 = vcmp.le.f32.partialorder %v1383, 0.7853982
    %vm1385 = vcmp.lt.s32.totalorder %v237, 0
    %v1386 = vand.u32 %v237, 2139095040
    %v1387 = vshrl.u32 %v1386, 23
    %v1388 = vsub.s32 %v1387, 127
    %v1389 = vand.u32 2147483647, %v237
    %v1390 = vand.u32 %v1389, 8388607
    %v1391 = vor.u32 %v1390, 8388608
    %v1392 = vsub.s32 0, %v1391
    %v1393 = vadd.s32 %v1388, 1
    %vm1394 = vcmp.gt.s32.totalorder %v1393, 0
    %v1395 = vsel %vm1394, %v1393, 0
    %v1396 = vshrl.u32 %v1395, 5
    %v1397 = vand.u32 %v1395, 31
    %v1398 = vsub.s32 32, %v1397
    %v1399 = vshrl.u32 683565275, %v1398
    %v1400 = vshll.u32 683565275, %v1397
    %v1401 = vshrl.u32 2475754826, %v1398
    %v1402 = vor.u32 %v1400, %v1401
    %v1403 = vshll.u32 2475754826, %v1397
    %v1404 = vshrl.u32 2131351028, %v1398
    %v1405 = vor.u32 %v1403, %v1404
    %v1406 = vshll.u32 2131351028, %v1397
    %v1407 = vshrl.u32 2102212464, %v1398
    %v1408 = vor.u32 %v1406, %v1407
    %v1409 = vshll.u32 2102212464, %v1397
    %v1410 = vshrl.u32 920167782, %v1398
    %v1411 = vor.u32 %v1409, %v1410
    %v1412 = vshll.u32 920167782, %v1397
    %v1413 = vshrl.u32 1326507024, %v1398
    %v1414 = vor.u32 %v1412, %v1413
    %vm1415 = vcmp.lt.s32.totalorder %v1396, 1
    %vm1416 = vcmp.lt.s32.totalorder %v1396, 2
    %vm1417 = vcmp.lt.s32.totalorder %v1396, 3
    %vm1418 = vcmp.lt.s32.totalorder %v1396, 4
    %v1419 = vsel %vm1415, %v1399, %v1402
    %v1420 = vsel %vm1418, %v1408, 2102212464
    %v1421 = vsel %vm1417, %v1405, %v1420
    %v1422 = vsel %vm1416, %v1419, %v1421
    %v1423 = vsel %vm1415, %v1402, %v1405
    %v1424 = vsel %vm1418, %v1411, 920167782
    %v1425 = vsel %vm1417, %v1408, %v1424
    %v1426 = vsel %vm1416, %v1423, %v1425
    %v1427 = vsel %vm1415, %v1405, %v1408
    %v1428 = vsel %vm1418, %v1414, 1326507024
    %v1429 = vsel %vm1417, %v1411, %v1428
    %v1430 = vsel %vm1416, %v1427, %v1429
    %v1431 = vshll.u32 %v1391, 8
    %v1432 = vmul.u32.u64.compose %v1431, %v1430
    %v1433 = vextract.low.u32 %v1432
    %v1434 = vextract.high.u32 %v1432
    %v1435 = vmul.u32.u64.compose %v1431, %v1426
    %v1436 = vextract.low.u32 %v1435
    %v1437 = vextract.high.u32 %v1435
    %v1438 = vmul.u32 %v1431, %v1422
    %v1439 = vadd.s32 %v1434, %v1436
    %vm1440 = vc.u32 %v1434, %v1436
    %v1441 = vadd.s32 %v1437, 1
    %v1442 = vsel %vm1440, %v1441, %v1437
    %v1443 = vadd.s32 %v1438, %v1442
    %v1444 = vadd.s32 %v1443, 536870912
    %v1445 = vshrl.u32 %v1444, 30
    %v1446 = vshll.u32 %v1445, 30
    %v1447 = vsub.s32 %v1443, %v1446
    %vm1448 = vcmp.lt.s32.totalorder %v1447, 0
    %v1449 = vsub.s32 0, %v1447
    %v1450 = vsel %vm1448, %v1449, %v1447
    %v1451 = vclz %v1450
    %v1452 = vsub.s32 %v1451, 2
    %vm1453 = vcmp.gt.s32.totalorder 0, %v1452
    %v1454 = vsel %vm1453, 0, %v1452
    %v1455 = vsub.s32 32, %v1454
    %v1456 = vshll.u32 %v1447, %v1454
    %v1457 = vshrl.u32 %v1439, %v1455
    %v1458 = vor.u32 %v1456, %v1457
    %v1459 = vsub.s32 4294967266, %v1454
    %v1460 = vadd.s32 %v1459, 127
    %v1461 = vshll.u32 %v1460, 23
    %v1462 = vor.u32 4788187, %v1461
    %v1463 = vand.u32 2147483647, %v1462
    %v1465 = vcvt.s32.f32 %v1458
    %v1466 = vmul.f32 %v1465, %v1463
    %v1467 = vxor.u32 %v1466, 2147483648
    %v1468 = vsel %vm1385, %v1467, %v1466
    %v1469 = vsub.s32 4, %v1445
    %v1470 = vsel %vm1385, %v1469, %v1445
    %v1471 = vsel %vm1384, %v237, %v1468
    %v1472 = vsel %vm1384, 0, %v1470
    %v1473 = vcosq.f32.pop %v1471
    %v1474 = vsinq.f32.pop %v1471
    %vm1475 = vweird.f32 %v237
    %v1476 = vand.u32 %v1472, 3
    %vm1477 = vcmp.lt.s32.totalorder %v1476, 2
    %vm1478 = vcmp.eq.s32.totalorder %v1476, 0
    %v1479 = vxor.u32 %v1474, 2147483648
    %v1480 = vsel %vm1478, %v1473, %v1479
    %vm1481 = vcmp.eq.s32.totalorder %v1476, 2
    %v1482 = vxor.u32 %v1473, 2147483648
    %v1483 = vsel %vm1481, %v1482, %v1474
    %v1484 = vsel %vm1477, %v1480, %v1483
    %v1485 = vsel %vm1475, nan, %v1484
    %v1486 = vand.u32 2147483647, %v238
    %vm1487 = vcmp.le.f32.partialorder %v1486, 0.7853982
    %vm1488 = vcmp.lt.s32.totalorder %v238, 0
    %v1489 = vand.u32 %v238, 2139095040
    %v1490 = vshrl.u32 %v1489, 23
    %v1491 = vsub.s32 %v1490, 127
    %v1492 = vand.u32 2147483647, %v238
    %v1493 = vand.u32 %v1492, 8388607
    %v1494 = vor.u32 %v1493, 8388608
    %v1495 = vsub.s32 0, %v1494
    %v1496 = vadd.s32 %v1491, 1
    %vm1497 = vcmp.gt.s32.totalorder %v1496, 0
    %v1498 = vsel %vm1497, %v1496, 0
    %v1499 = vshrl.u32 %v1498, 5
    %v1500 = vand.u32 %v1498, 31
    %v1501 = vsub.s32 32, %v1500
    %v1502 = vshrl.u32 683565275, %v1501
    %v1503 = vshll.u32 683565275, %v1500
    %v1504 = vshrl.u32 2475754826, %v1501
    %v1505 = vor.u32 %v1503, %v1504
    %v1506 = vshll.u32 2475754826, %v1500
    %v1507 = vshrl.u32 2131351028, %v1501
    %v1508 = vor.u32 %v1506, %v1507
    %v1509 = vshll.u32 2131351028, %v1500
    %v1510 = vshrl.u32 2102212464, %v1501
    %v1511 = vor.u32 %v1509, %v1510
    %v1512 = vshll.u32 2102212464, %v1500
    %v1513 = vshrl.u32 920167782, %v1501
    %v1514 = vor.u32 %v1512, %v1513
    %v1515 = vshll.u32 920167782, %v1500
    %v1516 = vshrl.u32 1326507024, %v1501
    %v1517 = vor.u32 %v1515, %v1516
    %vm1518 = vcmp.lt.s32.totalorder %v1499, 1
    %vm1519 = vcmp.lt.s32.totalorder %v1499, 2
    %vm1520 = vcmp.lt.s32.totalorder %v1499, 3
    %vm1521 = vcmp.lt.s32.totalorder %v1499, 4
    %v1522 = vsel %vm1518, %v1502, %v1505
    %v1523 = vsel %vm1521, %v1511, 2102212464
    %v1524 = vsel %vm1520, %v1508, %v1523
    %v1525 = vsel %vm1519, %v1522, %v1524
    %v1526 = vsel %vm1518, %v1505, %v1508
    %v1527 = vsel %vm1521, %v1514, 920167782
    %v1528 = vsel %vm1520, %v1511, %v1527
    %v1529 = vsel %vm1519, %v1526, %v1528
    %v1530 = vsel %vm1518, %v1508, %v1511
    %v1531 = vsel %vm1521, %v1517, 1326507024
    %v1532 = vsel %vm1520, %v1514, %v1531
    %v1533 = vsel %vm1519, %v1530, %v1532
    %v1534 = vshll.u32 %v1494, 8
    %v1535 = vmul.u32.u64.compose %v1534, %v1533
    %v1536 = vextract.low.u32 %v1535
    %v1537 = vextract.high.u32 %v1535
    %v1538 = vmul.u32.u64.compose %v1534, %v1529
    %v1539 = vextract.low.u32 %v1538
    %v1540 = vextract.high.u32 %v1538
    %v1541 = vmul.u32 %v1534, %v1525
    %v1542 = vadd.s32 %v1537, %v1539
    %vm1543 = vc.u32 %v1537, %v1539
    %v1544 = vadd.s32 %v1540, 1
    %v1545 = vsel %vm1543, %v1544, %v1540
    %v1546 = vadd.s32 %v1541, %v1545
    %v1547 = vadd.s32 %v1546, 536870912
    %v1548 = vshrl.u32 %v1547, 30
    %v1549 = vshll.u32 %v1548, 30
    %v1550 = vsub.s32 %v1546, %v1549
    %vm1551 = vcmp.lt.s32.totalorder %v1550, 0
    %v1552 = vsub.s32 0, %v1550
    %v1553 = vsel %vm1551, %v1552, %v1550
    %v1554 = vclz %v1553
    %v1555 = vsub.s32 %v1554, 2
    %vm1556 = vcmp.gt.s32.totalorder 0, %v1555
    %v1557 = vsel %vm1556, 0, %v1555
    %v1558 = vsub.s32 32, %v1557
    %v1559 = vshll.u32 %v1550, %v1557
    %v1560 = vshrl.u32 %v1542, %v1558
    %v1561 = vor.u32 %v1559, %v1560
    %v1562 = vsub.s32 4294967266, %v1557
    %v1563 = vadd.s32 %v1562, 127
    %v1564 = vshll.u32 %v1563, 23
    %v1565 = vor.u32 4788187, %v1564
    %v1566 = vand.u32 2147483647, %v1565
    %v1568 = vcvt.s32.f32 %v1561
    %v1569 = vmul.f32 %v1568, %v1566
    %v1570 = vxor.u32 %v1569, 2147483648
    %v1571 = vsel %vm1488, %v1570, %v1569
    %v1572 = vsub.s32 4, %v1548
    %v1573 = vsel %vm1488, %v1572, %v1548
    %v1574 = vsel %vm1487, %v238, %v1571
    %v1575 = vsel %vm1487, 0, %v1573
    %v1576 = vcosq.f32.pop %v1574
    %v1577 = vsinq.f32.pop %v1574
    %vm1578 = vweird.f32 %v238
    %v1579 = vand.u32 %v1575, 3
    %vm1580 = vcmp.lt.s32.totalorder %v1579, 2
    %vm1581 = vcmp.eq.s32.totalorder %v1579, 0
    %v1582 = vxor.u32 %v1577, 2147483648
    %v1583 = vsel %vm1581, %v1576, %v1582
    %vm1584 = vcmp.eq.s32.totalorder %v1579, 2
    %v1585 = vxor.u32 %v1576, 2147483648
    %v1586 = vsel %vm1584, %v1585, %v1577
    %v1587 = vsel %vm1580, %v1583, %v1586
    %v1588 = vsel %vm1578, nan, %v1587
    %v1589 = vand.u32 2147483647, %v239
    %vm1590 = vcmp.le.f32.partialorder %v1589, 0.7853982
    %vm1591 = vcmp.lt.s32.totalorder %v239, 0
    %v1592 = vand.u32 %v239, 2139095040
    %v1593 = vshrl.u32 %v1592, 23
    %v1594 = vsub.s32 %v1593, 127
    %v1595 = vand.u32 2147483647, %v239
    %v1596 = vand.u32 %v1595, 8388607
    %v1597 = vor.u32 %v1596, 8388608
    %v1598 = vsub.s32 0, %v1597
    %v1599 = vadd.s32 %v1594, 1
    %vm1600 = vcmp.gt.s32.totalorder %v1599, 0
    %v1601 = vsel %vm1600, %v1599, 0
    %v1602 = vshrl.u32 %v1601, 5
    %v1603 = vand.u32 %v1601, 31
    %v1604 = vsub.s32 32, %v1603
    %v1605 = vshrl.u32 683565275, %v1604
    %v1606 = vshll.u32 683565275, %v1603
    %v1607 = vshrl.u32 2475754826, %v1604
    %v1608 = vor.u32 %v1606, %v1607
    %v1609 = vshll.u32 2475754826, %v1603
    %v1610 = vshrl.u32 2131351028, %v1604
    %v1611 = vor.u32 %v1609, %v1610
    %v1612 = vshll.u32 2131351028, %v1603
    %v1613 = vshrl.u32 2102212464, %v1604
    %v1614 = vor.u32 %v1612, %v1613
    %v1615 = vshll.u32 2102212464, %v1603
    %v1616 = vshrl.u32 920167782, %v1604
    %v1617 = vor.u32 %v1615, %v1616
    %v1618 = vshll.u32 920167782, %v1603
    %v1619 = vshrl.u32 1326507024, %v1604
    %v1620 = vor.u32 %v1618, %v1619
    %vm1621 = vcmp.lt.s32.totalorder %v1602, 1
    %vm1622 = vcmp.lt.s32.totalorder %v1602, 2
    %vm1623 = vcmp.lt.s32.totalorder %v1602, 3
    %vm1624 = vcmp.lt.s32.totalorder %v1602, 4
    %v1625 = vsel %vm1621, %v1605, %v1608
    %v1626 = vsel %vm1624, %v1614, 2102212464
    %v1627 = vsel %vm1623, %v1611, %v1626
    %v1628 = vsel %vm1622, %v1625, %v1627
    %v1629 = vsel %vm1621, %v1608, %v1611
    %v1630 = vsel %vm1624, %v1617, 920167782
    %v1631 = vsel %vm1623, %v1614, %v1630
    %v1632 = vsel %vm1622, %v1629, %v1631
    %v1633 = vsel %vm1621, %v1611, %v1614
    %v1634 = vsel %vm1624, %v1620, 1326507024
    %v1635 = vsel %vm1623, %v1617, %v1634
    %v1636 = vsel %vm1622, %v1633, %v1635
    %v1637 = vshll.u32 %v1597, 8
    %v1638 = vmul.u32.u64.compose %v1637, %v1636
    %v1639 = vextract.low.u32 %v1638
    %v1640 = vextract.high.u32 %v1638
    %v1641 = vmul.u32.u64.compose %v1637, %v1632
    %v1642 = vextract.low.u32 %v1641
    %v1643 = vextract.high.u32 %v1641
    %v1644 = vmul.u32 %v1637, %v1628
    %v1645 = vadd.s32 %v1640, %v1642
    %vm1646 = vc.u32 %v1640, %v1642
    %v1647 = vadd.s32 %v1643, 1
    %v1648 = vsel %vm1646, %v1647, %v1643
    %v1649 = vadd.s32 %v1644, %v1648
    %v1650 = vadd.s32 %v1649, 536870912
    %v1651 = vshrl.u32 %v1650, 30
    %v1652 = vshll.u32 %v1651, 30
    %v1653 = vsub.s32 %v1649, %v1652
    %vm1654 = vcmp.lt.s32.totalorder %v1653, 0
    %v1655 = vsub.s32 0, %v1653
    %v1656 = vsel %vm1654, %v1655, %v1653
    %v1657 = vclz %v1656
    %v1658 = vsub.s32 %v1657, 2
    %vm1659 = vcmp.gt.s32.totalorder 0, %v1658
    %v1660 = vsel %vm1659, 0, %v1658
    %v1661 = vsub.s32 32, %v1660
    %v1662 = vshll.u32 %v1653, %v1660
    %v1663 = vshrl.u32 %v1645, %v1661
    %v1664 = vor.u32 %v1662, %v1663
    %v1665 = vsub.s32 4294967266, %v1660
    %v1666 = vadd.s32 %v1665, 127
    %v1667 = vshll.u32 %v1666, 23
    %v1668 = vor.u32 4788187, %v1667
    %v1669 = vand.u32 2147483647, %v1668
    %v1671 = vcvt.s32.f32 %v1664
    %v1672 = vmul.f32 %v1671, %v1669
    %v1673 = vxor.u32 %v1672, 2147483648
    %v1674 = vsel %vm1591, %v1673, %v1672
    %v1675 = vsub.s32 4, %v1651
    %v1676 = vsel %vm1591, %v1675, %v1651
    %v1677 = vsel %vm1590, %v239, %v1674
    %v1678 = vsel %vm1590, 0, %v1676
    %v1679 = vcosq.f32.pop %v1677
    %v1680 = vsinq.f32.pop %v1677
    %vm1681 = vweird.f32 %v239
    %v1682 = vand.u32 %v1678, 3
    %vm1683 = vcmp.lt.s32.totalorder %v1682, 2
    %vm1684 = vcmp.eq.s32.totalorder %v1682, 0
    %v1685 = vxor.u32 %v1680, 2147483648
    %v1686 = vsel %vm1684, %v1679, %v1685
    %vm1687 = vcmp.eq.s32.totalorder %v1682, 2
    %v1688 = vxor.u32 %v1679, 2147483648
    %v1689 = vsel %vm1687, %v1688, %v1680
    %v1690 = vsel %vm1683, %v1686, %v1689
    %v1691 = vsel %vm1681, nan, %v1690
    %v1692 = vand.u32 2147483647, %v240
    %vm1693 = vcmp.le.f32.partialorder %v1692, 0.7853982
    %vm1694 = vcmp.lt.s32.totalorder %v240, 0
    %v1695 = vand.u32 %v240, 2139095040
    %v1696 = vshrl.u32 %v1695, 23
    %v1697 = vsub.s32 %v1696, 127
    %v1698 = vand.u32 2147483647, %v240
    %v1699 = vand.u32 %v1698, 8388607
    %v1700 = vor.u32 %v1699, 8388608
    %v1701 = vsub.s32 0, %v1700
    %v1702 = vadd.s32 %v1697, 1
    %vm1703 = vcmp.gt.s32.totalorder %v1702, 0
    %v1704 = vsel %vm1703, %v1702, 0
    %v1705 = vshrl.u32 %v1704, 5
    %v1706 = vand.u32 %v1704, 31
    %v1707 = vsub.s32 32, %v1706
    %v1708 = vshrl.u32 683565275, %v1707
    %v1709 = vshll.u32 683565275, %v1706
    %v1710 = vshrl.u32 2475754826, %v1707
    %v1711 = vor.u32 %v1709, %v1710
    %v1712 = vshll.u32 2475754826, %v1706
    %v1713 = vshrl.u32 2131351028, %v1707
    %v1714 = vor.u32 %v1712, %v1713
    %v1715 = vshll.u32 2131351028, %v1706
    %v1716 = vshrl.u32 2102212464, %v1707
    %v1717 = vor.u32 %v1715, %v1716
    %v1718 = vshll.u32 2102212464, %v1706
    %v1719 = vshrl.u32 920167782, %v1707
    %v1720 = vor.u32 %v1718, %v1719
    %v1721 = vshll.u32 920167782, %v1706
    %v1722 = vshrl.u32 1326507024, %v1707
    %v1723 = vor.u32 %v1721, %v1722
    %vm1724 = vcmp.lt.s32.totalorder %v1705, 1
    %vm1725 = vcmp.lt.s32.totalorder %v1705, 2
    %vm1726 = vcmp.lt.s32.totalorder %v1705, 3
    %vm1727 = vcmp.lt.s32.totalorder %v1705, 4
    %v1728 = vsel %vm1724, %v1708, %v1711
    %v1729 = vsel %vm1727, %v1717, 2102212464
    %v1730 = vsel %vm1726, %v1714, %v1729
    %v1731 = vsel %vm1725, %v1728, %v1730
    %v1732 = vsel %vm1724, %v1711, %v1714
    %v1733 = vsel %vm1727, %v1720, 920167782
    %v1734 = vsel %vm1726, %v1717, %v1733
    %v1735 = vsel %vm1725, %v1732, %v1734
    %v1736 = vsel %vm1724, %v1714, %v1717
    %v1737 = vsel %vm1727, %v1723, 1326507024
    %v1738 = vsel %vm1726, %v1720, %v1737
    %v1739 = vsel %vm1725, %v1736, %v1738
    %v1740 = vshll.u32 %v1700, 8
    %v1741 = vmul.u32.u64.compose %v1740, %v1739
    %v1742 = vextract.low.u32 %v1741
    %v1743 = vextract.high.u32 %v1741
    %v1744 = vmul.u32.u64.compose %v1740, %v1735
    %v1745 = vextract.low.u32 %v1744
    %v1746 = vextract.high.u32 %v1744
    %v1747 = vmul.u32 %v1740, %v1731
    %v1748 = vadd.s32 %v1743, %v1745
    %vm1749 = vc.u32 %v1743, %v1745
    %v1750 = vadd.s32 %v1746, 1
    %v1751 = vsel %vm1749, %v1750, %v1746
    %v1752 = vadd.s32 %v1747, %v1751
    %v1753 = vadd.s32 %v1752, 536870912
    %v1754 = vshrl.u32 %v1753, 30
    %v1755 = vshll.u32 %v1754, 30
    %v1756 = vsub.s32 %v1752, %v1755
    %vm1757 = vcmp.lt.s32.totalorder %v1756, 0
    %v1758 = vsub.s32 0, %v1756
    %v1759 = vsel %vm1757, %v1758, %v1756
    %v1760 = vclz %v1759
    %v1761 = vsub.s32 %v1760, 2
    %vm1762 = vcmp.gt.s32.totalorder 0, %v1761
    %v1763 = vsel %vm1762, 0, %v1761
    %v1764 = vsub.s32 32, %v1763
    %v1765 = vshll.u32 %v1756, %v1763
    %v1766 = vshrl.u32 %v1748, %v1764
    %v1767 = vor.u32 %v1765, %v1766
    %v1768 = vsub.s32 4294967266, %v1763
    %v1769 = vadd.s32 %v1768, 127
    %v1770 = vshll.u32 %v1769, 23
    %v1771 = vor.u32 4788187, %v1770
    %v1772 = vand.u32 2147483647, %v1771
    %v1774 = vcvt.s32.f32 %v1767
    %v1775 = vmul.f32 %v1774, %v1772
    %v1776 = vxor.u32 %v1775, 2147483648
    %v1777 = vsel %vm1694, %v1776, %v1775
    %v1778 = vsub.s32 4, %v1754
    %v1779 = vsel %vm1694, %v1778, %v1754
    %v1780 = vsel %vm1693, %v240, %v1777
    %v1781 = vsel %vm1693, 0, %v1779
    %v1782 = vcosq.f32.pop %v1780
    %v1783 = vsinq.f32.pop %v1780
    %vm1784 = vweird.f32 %v240
    %v1785 = vand.u32 %v1781, 3
    %vm1786 = vcmp.lt.s32.totalorder %v1785, 2
    %vm1787 = vcmp.eq.s32.totalorder %v1785, 0
    %v1788 = vxor.u32 %v1783, 2147483648
    %v1789 = vsel %vm1787, %v1782, %v1788
    %vm1790 = vcmp.eq.s32.totalorder %v1785, 2
    %v1791 = vxor.u32 %v1782, 2147483648
    %v1792 = vsel %vm1790, %v1791, %v1783
    %v1793 = vsel %vm1786, %v1789, %v1792
    %v1794 = vsel %vm1784, nan, %v1793
    %v1795 = vand.u32 2147483647, %v241
    %vm1796 = vcmp.le.f32.partialorder %v1795, 0.7853982
    %vm1797 = vcmp.lt.s32.totalorder %v241, 0
    %v1798 = vand.u32 %v241, 2139095040
    %v1799 = vshrl.u32 %v1798, 23
    %v1800 = vsub.s32 %v1799, 127
    %v1801 = vand.u32 2147483647, %v241
    %v1802 = vand.u32 %v1801, 8388607
    %v1803 = vor.u32 %v1802, 8388608
    %v1804 = vsub.s32 0, %v1803
    %v1805 = vadd.s32 %v1800, 1
    %vm1806 = vcmp.gt.s32.totalorder %v1805, 0
    %v1807 = vsel %vm1806, %v1805, 0
    %v1808 = vshrl.u32 %v1807, 5
    %v1809 = vand.u32 %v1807, 31
    %v1810 = vsub.s32 32, %v1809
    %v1811 = vshrl.u32 683565275, %v1810
    %v1812 = vshll.u32 683565275, %v1809
    %v1813 = vshrl.u32 2475754826, %v1810
    %v1814 = vor.u32 %v1812, %v1813
    %v1815 = vshll.u32 2475754826, %v1809
    %v1816 = vshrl.u32 2131351028, %v1810
    %v1817 = vor.u32 %v1815, %v1816
    %v1818 = vshll.u32 2131351028, %v1809
    %v1819 = vshrl.u32 2102212464, %v1810
    %v1820 = vor.u32 %v1818, %v1819
    %v1821 = vshll.u32 2102212464, %v1809
    %v1822 = vshrl.u32 920167782, %v1810
    %v1823 = vor.u32 %v1821, %v1822
    %v1824 = vshll.u32 920167782, %v1809
    %v1825 = vshrl.u32 1326507024, %v1810
    %v1826 = vor.u32 %v1824, %v1825
    %vm1827 = vcmp.lt.s32.totalorder %v1808, 1
    %vm1828 = vcmp.lt.s32.totalorder %v1808, 2
    %vm1829 = vcmp.lt.s32.totalorder %v1808, 3
    %vm1830 = vcmp.lt.s32.totalorder %v1808, 4
    %v1831 = vsel %vm1827, %v1811, %v1814
    %v1832 = vsel %vm1830, %v1820, 2102212464
    %v1833 = vsel %vm1829, %v1817, %v1832
    %v1834 = vsel %vm1828, %v1831, %v1833
    %v1835 = vsel %vm1827, %v1814, %v1817
    %v1836 = vsel %vm1830, %v1823, 920167782
    %v1837 = vsel %vm1829, %v1820, %v1836
    %v1838 = vsel %vm1828, %v1835, %v1837
    %v1839 = vsel %vm1827, %v1817, %v1820
    %v1840 = vsel %vm1830, %v1826, 1326507024
    %v1841 = vsel %vm1829, %v1823, %v1840
    %v1842 = vsel %vm1828, %v1839, %v1841
    %v1843 = vshll.u32 %v1803, 8
    %v1844 = vmul.u32.u64.compose %v1843, %v1842
    %v1845 = vextract.low.u32 %v1844
    %v1846 = vextract.high.u32 %v1844
    %v1847 = vmul.u32.u64.compose %v1843, %v1838
    %v1848 = vextract.low.u32 %v1847
    %v1849 = vextract.high.u32 %v1847
    %v1850 = vmul.u32 %v1843, %v1834
    %v1851 = vadd.s32 %v1846, %v1848
    %vm1852 = vc.u32 %v1846, %v1848
    %v1853 = vadd.s32 %v1849, 1
    %v1854 = vsel %vm1852, %v1853, %v1849
    %v1855 = vadd.s32 %v1850, %v1854
    %v1856 = vadd.s32 %v1855, 536870912
    %v1857 = vshrl.u32 %v1856, 30
    %v1858 = vshll.u32 %v1857, 30
    %v1859 = vsub.s32 %v1855, %v1858
    %vm1860 = vcmp.lt.s32.totalorder %v1859, 0
    %v1861 = vsub.s32 0, %v1859
    %v1862 = vsel %vm1860, %v1861, %v1859
    %v1863 = vclz %v1862
    %v1864 = vsub.s32 %v1863, 2
    %vm1865 = vcmp.gt.s32.totalorder 0, %v1864
    %v1866 = vsel %vm1865, 0, %v1864
    %v1867 = vsub.s32 32, %v1866
    %v1868 = vshll.u32 %v1859, %v1866
    %v1869 = vshrl.u32 %v1851, %v1867
    %v1870 = vor.u32 %v1868, %v1869
    %v1871 = vsub.s32 4294967266, %v1866
    %v1872 = vadd.s32 %v1871, 127
    %v1873 = vshll.u32 %v1872, 23
    %v1874 = vor.u32 4788187, %v1873
    %v1875 = vand.u32 2147483647, %v1874
    %v1877 = vcvt.s32.f32 %v1870
    %v1878 = vmul.f32 %v1877, %v1875
    %v1879 = vxor.u32 %v1878, 2147483648
    %v1880 = vsel %vm1797, %v1879, %v1878
    %v1881 = vsub.s32 4, %v1857
    %v1882 = vsel %vm1797, %v1881, %v1857
    %v1883 = vsel %vm1796, %v241, %v1880
    %v1884 = vsel %vm1796, 0, %v1882
    %v1885 = vcosq.f32.pop %v1883
    %v1886 = vsinq.f32.pop %v1883
    %vm1887 = vweird.f32 %v241
    %v1888 = vand.u32 %v1884, 3
    %vm1889 = vcmp.lt.s32.totalorder %v1888, 2
    %vm1890 = vcmp.eq.s32.totalorder %v1888, 0
    %v1891 = vxor.u32 %v1886, 2147483648
    %v1892 = vsel %vm1890, %v1885, %v1891
    %vm1893 = vcmp.eq.s32.totalorder %v1888, 2
    %v1894 = vxor.u32 %v1885, 2147483648
    %v1895 = vsel %vm1893, %v1894, %v1886
    %v1896 = vsel %vm1889, %v1892, %v1895
    %v1897 = vsel %vm1887, nan, %v1896
    %v1898 = vand.u32 2147483647, %v242
    %vm1899 = vcmp.le.f32.partialorder %v1898, 0.7853982
    %vm1900 = vcmp.lt.s32.totalorder %v242, 0
    %v1901 = vand.u32 %v242, 2139095040
    %v1902 = vshrl.u32 %v1901, 23
    %v1903 = vsub.s32 %v1902, 127
    %v1904 = vand.u32 2147483647, %v242
    %v1905 = vand.u32 %v1904, 8388607
    %v1906 = vor.u32 %v1905, 8388608
    %v1907 = vsub.s32 0, %v1906
    %v1908 = vadd.s32 %v1903, 1
    %vm1909 = vcmp.gt.s32.totalorder %v1908, 0
    %v1910 = vsel %vm1909, %v1908, 0
    %v1911 = vshrl.u32 %v1910, 5
    %v1912 = vand.u32 %v1910, 31
    %v1913 = vsub.s32 32, %v1912
    %v1914 = vshrl.u32 683565275, %v1913
    %v1915 = vshll.u32 683565275, %v1912
    %v1916 = vshrl.u32 2475754826, %v1913
    %v1917 = vor.u32 %v1915, %v1916
    %v1918 = vshll.u32 2475754826, %v1912
    %v1919 = vshrl.u32 2131351028, %v1913
    %v1920 = vor.u32 %v1918, %v1919
    %v1921 = vshll.u32 2131351028, %v1912
    %v1922 = vshrl.u32 2102212464, %v1913
    %v1923 = vor.u32 %v1921, %v1922
    %v1924 = vshll.u32 2102212464, %v1912
    %v1925 = vshrl.u32 920167782, %v1913
    %v1926 = vor.u32 %v1924, %v1925
    %v1927 = vshll.u32 920167782, %v1912
    %v1928 = vshrl.u32 1326507024, %v1913
    %v1929 = vor.u32 %v1927, %v1928
    %vm1930 = vcmp.lt.s32.totalorder %v1911, 1
    %vm1931 = vcmp.lt.s32.totalorder %v1911, 2
    %vm1932 = vcmp.lt.s32.totalorder %v1911, 3
    %vm1933 = vcmp.lt.s32.totalorder %v1911, 4
    %v1934 = vsel %vm1930, %v1914, %v1917
    %v1935 = vsel %vm1933, %v1923, 2102212464
    %v1936 = vsel %vm1932, %v1920, %v1935
    %v1937 = vsel %vm1931, %v1934, %v1936
    %v1938 = vsel %vm1930, %v1917, %v1920
    %v1939 = vsel %vm1933, %v1926, 920167782
    %v1940 = vsel %vm1932, %v1923, %v1939
    %v1941 = vsel %vm1931, %v1938, %v1940
    %v1942 = vsel %vm1930, %v1920, %v1923
    %v1943 = vsel %vm1933, %v1929, 1326507024
    %v1944 = vsel %vm1932, %v1926, %v1943
    %v1945 = vsel %vm1931, %v1942, %v1944
    %v1946 = vshll.u32 %v1906, 8
    %v1947 = vmul.u32.u64.compose %v1946, %v1945
    %v1948 = vextract.low.u32 %v1947
    %v1949 = vextract.high.u32 %v1947
    %v1950 = vmul.u32.u64.compose %v1946, %v1941
    %v1951 = vextract.low.u32 %v1950
    %v1952 = vextract.high.u32 %v1950
    %v1953 = vmul.u32 %v1946, %v1937
    %v1954 = vadd.s32 %v1949, %v1951
    %vm1955 = vc.u32 %v1949, %v1951
    %v1956 = vadd.s32 %v1952, 1
    %v1957 = vsel %vm1955, %v1956, %v1952
    %v1958 = vadd.s32 %v1953, %v1957
    %v1959 = vadd.s32 %v1958, 536870912
    %v1960 = vshrl.u32 %v1959, 30
    %v1961 = vshll.u32 %v1960, 30
    %v1962 = vsub.s32 %v1958, %v1961
    %vm1963 = vcmp.lt.s32.totalorder %v1962, 0
    %v1964 = vsub.s32 0, %v1962
    %v1965 = vsel %vm1963, %v1964, %v1962
    %v1966 = vclz %v1965
    %v1967 = vsub.s32 %v1966, 2
    %vm1968 = vcmp.gt.s32.totalorder 0, %v1967
    %v1969 = vsel %vm1968, 0, %v1967
    %v1970 = vsub.s32 32, %v1969
    %v1971 = vshll.u32 %v1962, %v1969
    %v1972 = vshrl.u32 %v1954, %v1970
    %v1973 = vor.u32 %v1971, %v1972
    %v1974 = vsub.s32 4294967266, %v1969
    %v1975 = vadd.s32 %v1974, 127
    %v1976 = vshll.u32 %v1975, 23
    %v1977 = vor.u32 4788187, %v1976
    %v1978 = vand.u32 2147483647, %v1977
    %v1980 = vcvt.s32.f32 %v1973
    %v1981 = vmul.f32 %v1980, %v1978
    %v1982 = vxor.u32 %v1981, 2147483648
    %v1983 = vsel %vm1900, %v1982, %v1981
    %v1984 = vsub.s32 4, %v1960
    %v1985 = vsel %vm1900, %v1984, %v1960
    %v1986 = vsel %vm1899, %v242, %v1983
    %v1987 = vsel %vm1899, 0, %v1985
    %v1988 = vcosq.f32.pop %v1986
    %v1989 = vsinq.f32.pop %v1986
    %vm1990 = vweird.f32 %v242
    %v1991 = vand.u32 %v1987, 3
    %vm1992 = vcmp.lt.s32.totalorder %v1991, 2
    %vm1993 = vcmp.eq.s32.totalorder %v1991, 0
    %v1994 = vxor.u32 %v1989, 2147483648
    %v1995 = vsel %vm1993, %v1988, %v1994
    %vm1996 = vcmp.eq.s32.totalorder %v1991, 2
    %v1997 = vxor.u32 %v1988, 2147483648
    %v1998 = vsel %vm1996, %v1997, %v1989
    %v1999 = vsel %vm1992, %v1995, %v1998
    %v2000 = vsel %vm1990, nan, %v1999
    %v2001 = vand.u32 2147483647, %v243
    %vm2002 = vcmp.le.f32.partialorder %v2001, 0.7853982
    %vm2003 = vcmp.lt.s32.totalorder %v243, 0
    %v2004 = vand.u32 %v243, 2139095040
    %v2005 = vshrl.u32 %v2004, 23
    %v2006 = vsub.s32 %v2005, 127
    %v2007 = vand.u32 2147483647, %v243
    %v2008 = vand.u32 %v2007, 8388607
    %v2009 = vor.u32 %v2008, 8388608
    %v2010 = vsub.s32 0, %v2009
    %v2011 = vadd.s32 %v2006, 1
    %vm2012 = vcmp.gt.s32.totalorder %v2011, 0
    %v2013 = vsel %vm2012, %v2011, 0
    %v2014 = vshrl.u32 %v2013, 5
    %v2015 = vand.u32 %v2013, 31
    %v2016 = vsub.s32 32, %v2015
    %v2017 = vshrl.u32 683565275, %v2016
    %v2018 = vshll.u32 683565275, %v2015
    %v2019 = vshrl.u32 2475754826, %v2016
    %v2020 = vor.u32 %v2018, %v2019
    %v2021 = vshll.u32 2475754826, %v2015
    %v2022 = vshrl.u32 2131351028, %v2016
    %v2023 = vor.u32 %v2021, %v2022
    %v2024 = vshll.u32 2131351028, %v2015
    %v2025 = vshrl.u32 2102212464, %v2016
    %v2026 = vor.u32 %v2024, %v2025
    %v2027 = vshll.u32 2102212464, %v2015
    %v2028 = vshrl.u32 920167782, %v2016
    %v2029 = vor.u32 %v2027, %v2028
    %v2030 = vshll.u32 920167782, %v2015
    %v2031 = vshrl.u32 1326507024, %v2016
    %v2032 = vor.u32 %v2030, %v2031
    %vm2033 = vcmp.lt.s32.totalorder %v2014, 1
    %vm2034 = vcmp.lt.s32.totalorder %v2014, 2
    %vm2035 = vcmp.lt.s32.totalorder %v2014, 3
    %vm2036 = vcmp.lt.s32.totalorder %v2014, 4
    %v2037 = vsel %vm2033, %v2017, %v2020
    %v2038 = vsel %vm2036, %v2026, 2102212464
    %v2039 = vsel %vm2035, %v2023, %v2038
    %v2040 = vsel %vm2034, %v2037, %v2039
    %v2041 = vsel %vm2033, %v2020, %v2023
    %v2042 = vsel %vm2036, %v2029, 920167782
    %v2043 = vsel %vm2035, %v2026, %v2042
    %v2044 = vsel %vm2034, %v2041, %v2043
    %v2045 = vsel %vm2033, %v2023, %v2026
    %v2046 = vsel %vm2036, %v2032, 1326507024
    %v2047 = vsel %vm2035, %v2029, %v2046
    %v2048 = vsel %vm2034, %v2045, %v2047
    %v2049 = vshll.u32 %v2009, 8
    %v2050 = vmul.u32.u64.compose %v2049, %v2048
    %v2051 = vextract.low.u32 %v2050
    %v2052 = vextract.high.u32 %v2050
    %v2053 = vmul.u32.u64.compose %v2049, %v2044
    %v2054 = vextract.low.u32 %v2053
    %v2055 = vextract.high.u32 %v2053
    %v2056 = vmul.u32 %v2049, %v2040
    %v2057 = vadd.s32 %v2052, %v2054
    %vm2058 = vc.u32 %v2052, %v2054
    %v2059 = vadd.s32 %v2055, 1
    %v2060 = vsel %vm2058, %v2059, %v2055
    %v2061 = vadd.s32 %v2056, %v2060
    %v2062 = vadd.s32 %v2061, 536870912
    %v2063 = vshrl.u32 %v2062, 30
    %v2064 = vshll.u32 %v2063, 30
    %v2065 = vsub.s32 %v2061, %v2064
    %vm2066 = vcmp.lt.s32.totalorder %v2065, 0
    %v2067 = vsub.s32 0, %v2065
    %v2068 = vsel %vm2066, %v2067, %v2065
    %v2069 = vclz %v2068
    %v2070 = vsub.s32 %v2069, 2
    %vm2071 = vcmp.gt.s32.totalorder 0, %v2070
    %v2072 = vsel %vm2071, 0, %v2070
    %v2073 = vsub.s32 32, %v2072
    %v2074 = vshll.u32 %v2065, %v2072
    %v2075 = vshrl.u32 %v2057, %v2073
    %v2076 = vor.u32 %v2074, %v2075
    %v2077 = vsub.s32 4294967266, %v2072
    %v2078 = vadd.s32 %v2077, 127
    %v2079 = vshll.u32 %v2078, 23
    %v2080 = vor.u32 4788187, %v2079
    %v2081 = vand.u32 2147483647, %v2080
    %v2083 = vcvt.s32.f32 %v2076
    %v2084 = vmul.f32 %v2083, %v2081
    %v2085 = vxor.u32 %v2084, 2147483648
    %v2086 = vsel %vm2003, %v2085, %v2084
    %v2087 = vsub.s32 4, %v2063
    %v2088 = vsel %vm2003, %v2087, %v2063
    %v2089 = vsel %vm2002, %v243, %v2086
    %v2090 = vsel %vm2002, 0, %v2088
    %v2091 = vcosq.f32.pop %v2089
    %v2092 = vsinq.f32.pop %v2089
    %vm2093 = vweird.f32 %v243
    %v2094 = vand.u32 %v2090, 3
    %vm2095 = vcmp.lt.s32.totalorder %v2094, 2
    %vm2096 = vcmp.eq.s32.totalorder %v2094, 0
    %v2097 = vxor.u32 %v2092, 2147483648
    %v2098 = vsel %vm2096, %v2091, %v2097
    %vm2099 = vcmp.eq.s32.totalorder %v2094, 2
    %v2100 = vxor.u32 %v2091, 2147483648
    %v2101 = vsel %vm2099, %v2100, %v2092
    %v2102 = vsel %vm2095, %v2098, %v2101
    %v2103 = vsel %vm2093, nan, %v2102
    %v2104 = vand.u32 2147483647, %v244
    %vm2105 = vcmp.le.f32.partialorder %v2104, 0.7853982
    %vm2106 = vcmp.lt.s32.totalorder %v244, 0
    %v2107 = vand.u32 %v244, 2139095040
    %v2108 = vshrl.u32 %v2107, 23
    %v2109 = vsub.s32 %v2108, 127
    %v2110 = vand.u32 2147483647, %v244
    %v2111 = vand.u32 %v2110, 8388607
    %v2112 = vor.u32 %v2111, 8388608
    %v2113 = vsub.s32 0, %v2112
    %v2114 = vadd.s32 %v2109, 1
    %vm2115 = vcmp.gt.s32.totalorder %v2114, 0
    %v2116 = vsel %vm2115, %v2114, 0
    %v2117 = vshrl.u32 %v2116, 5
    %v2118 = vand.u32 %v2116, 31
    %v2119 = vsub.s32 32, %v2118
    %v2120 = vshrl.u32 683565275, %v2119
    %v2121 = vshll.u32 683565275, %v2118
    %v2122 = vshrl.u32 2475754826, %v2119
    %v2123 = vor.u32 %v2121, %v2122
    %v2124 = vshll.u32 2475754826, %v2118
    %v2125 = vshrl.u32 2131351028, %v2119
    %v2126 = vor.u32 %v2124, %v2125
    %v2127 = vshll.u32 2131351028, %v2118
    %v2128 = vshrl.u32 2102212464, %v2119
    %v2129 = vor.u32 %v2127, %v2128
    %v2130 = vshll.u32 2102212464, %v2118
    %v2131 = vshrl.u32 920167782, %v2119
    %v2132 = vor.u32 %v2130, %v2131
    %v2133 = vshll.u32 920167782, %v2118
    %v2134 = vshrl.u32 1326507024, %v2119
    %v2135 = vor.u32 %v2133, %v2134
    %vm2136 = vcmp.lt.s32.totalorder %v2117, 1
    %vm2137 = vcmp.lt.s32.totalorder %v2117, 2
    %vm2138 = vcmp.lt.s32.totalorder %v2117, 3
    %vm2139 = vcmp.lt.s32.totalorder %v2117, 4
    %v2140 = vsel %vm2136, %v2120, %v2123
    %v2141 = vsel %vm2139, %v2129, 2102212464
    %v2142 = vsel %vm2138, %v2126, %v2141
    %v2143 = vsel %vm2137, %v2140, %v2142
    %v2144 = vsel %vm2136, %v2123, %v2126
    %v2145 = vsel %vm2139, %v2132, 920167782
    %v2146 = vsel %vm2138, %v2129, %v2145
    %v2147 = vsel %vm2137, %v2144, %v2146
    %v2148 = vsel %vm2136, %v2126, %v2129
    %v2149 = vsel %vm2139, %v2135, 1326507024
    %v2150 = vsel %vm2138, %v2132, %v2149
    %v2151 = vsel %vm2137, %v2148, %v2150
    %v2152 = vshll.u32 %v2112, 8
    %v2153 = vmul.u32.u64.compose %v2152, %v2151
    %v2154 = vextract.low.u32 %v2153
    %v2155 = vextract.high.u32 %v2153
    %v2156 = vmul.u32.u64.compose %v2152, %v2147
    %v2157 = vextract.low.u32 %v2156
    %v2158 = vextract.high.u32 %v2156
    %v2159 = vmul.u32 %v2152, %v2143
    %v2160 = vadd.s32 %v2155, %v2157
    %vm2161 = vc.u32 %v2155, %v2157
    %v2162 = vadd.s32 %v2158, 1
    %v2163 = vsel %vm2161, %v2162, %v2158
    %v2164 = vadd.s32 %v2159, %v2163
    %v2165 = vadd.s32 %v2164, 536870912
    %v2166 = vshrl.u32 %v2165, 30
    %v2167 = vshll.u32 %v2166, 30
    %v2168 = vsub.s32 %v2164, %v2167
    %vm2169 = vcmp.lt.s32.totalorder %v2168, 0
    %v2170 = vsub.s32 0, %v2168
    %v2171 = vsel %vm2169, %v2170, %v2168
    %v2172 = vclz %v2171
    %v2173 = vsub.s32 %v2172, 2
    %vm2174 = vcmp.gt.s32.totalorder 0, %v2173
    %v2175 = vsel %vm2174, 0, %v2173
    %v2176 = vsub.s32 32, %v2175
    %v2177 = vshll.u32 %v2168, %v2175
    %v2178 = vshrl.u32 %v2160, %v2176
    %v2179 = vor.u32 %v2177, %v2178
    %v2180 = vsub.s32 4294967266, %v2175
    %v2181 = vadd.s32 %v2180, 127
    %v2182 = vshll.u32 %v2181, 23
    %v2183 = vor.u32 4788187, %v2182
    %v2184 = vand.u32 2147483647, %v2183
    %v2186 = vcvt.s32.f32 %v2179
    %v2187 = vmul.f32 %v2186, %v2184
    %v2188 = vxor.u32 %v2187, 2147483648
    %v2189 = vsel %vm2106, %v2188, %v2187
    %v2190 = vsub.s32 4, %v2166
    %v2191 = vsel %vm2106, %v2190, %v2166
    %v2192 = vsel %vm2105, %v244, %v2189
    %v2193 = vsel %vm2105, 0, %v2191
    %v2194 = vcosq.f32.pop %v2192
    %v2195 = vsinq.f32.pop %v2192
    %vm2196 = vweird.f32 %v244
    %v2197 = vand.u32 %v2193, 3
    %vm2198 = vcmp.lt.s32.totalorder %v2197, 2
    %vm2199 = vcmp.eq.s32.totalorder %v2197, 0
    %v2200 = vxor.u32 %v2195, 2147483648
    %v2201 = vsel %vm2199, %v2194, %v2200
    %vm2202 = vcmp.eq.s32.totalorder %v2197, 2
    %v2203 = vxor.u32 %v2194, 2147483648
    %v2204 = vsel %vm2202, %v2203, %v2195
    %v2205 = vsel %vm2198, %v2201, %v2204
    %v2206 = vsel %vm2196, nan, %v2205
    %v2207 = vand.u32 2147483647, %v245
    %vm2208 = vcmp.le.f32.partialorder %v2207, 0.7853982
    %vm2209 = vcmp.lt.s32.totalorder %v245, 0
    %v2210 = vand.u32 %v245, 2139095040
    %v2211 = vshrl.u32 %v2210, 23
    %v2212 = vsub.s32 %v2211, 127
    %v2213 = vand.u32 2147483647, %v245
    %v2214 = vand.u32 %v2213, 8388607
    %v2215 = vor.u32 %v2214, 8388608
    %v2216 = vsub.s32 0, %v2215
    %v2217 = vadd.s32 %v2212, 1
    %vm2218 = vcmp.gt.s32.totalorder %v2217, 0
    %v2219 = vsel %vm2218, %v2217, 0
    %v2220 = vshrl.u32 %v2219, 5
    %v2221 = vand.u32 %v2219, 31
    %v2222 = vsub.s32 32, %v2221
    %v2223 = vshrl.u32 683565275, %v2222
    %v2224 = vshll.u32 683565275, %v2221
    %v2225 = vshrl.u32 2475754826, %v2222
    %v2226 = vor.u32 %v2224, %v2225
    %v2227 = vshll.u32 2475754826, %v2221
    %v2228 = vshrl.u32 2131351028, %v2222
    %v2229 = vor.u32 %v2227, %v2228
    %v2230 = vshll.u32 2131351028, %v2221
    %v2231 = vshrl.u32 2102212464, %v2222
    %v2232 = vor.u32 %v2230, %v2231
    %v2233 = vshll.u32 2102212464, %v2221
    %v2234 = vshrl.u32 920167782, %v2222
    %v2235 = vor.u32 %v2233, %v2234
    %v2236 = vshll.u32 920167782, %v2221
    %v2237 = vshrl.u32 1326507024, %v2222
    %v2238 = vor.u32 %v2236, %v2237
    %vm2239 = vcmp.lt.s32.totalorder %v2220, 1
    %vm2240 = vcmp.lt.s32.totalorder %v2220, 2
    %vm2241 = vcmp.lt.s32.totalorder %v2220, 3
    %vm2242 = vcmp.lt.s32.totalorder %v2220, 4
    %v2243 = vsel %vm2239, %v2223, %v2226
    %v2244 = vsel %vm2242, %v2232, 2102212464
    %v2245 = vsel %vm2241, %v2229, %v2244
    %v2246 = vsel %vm2240, %v2243, %v2245
    %v2247 = vsel %vm2239, %v2226, %v2229
    %v2248 = vsel %vm2242, %v2235, 920167782
    %v2249 = vsel %vm2241, %v2232, %v2248
    %v2250 = vsel %vm2240, %v2247, %v2249
    %v2251 = vsel %vm2239, %v2229, %v2232
    %v2252 = vsel %vm2242, %v2238, 1326507024
    %v2253 = vsel %vm2241, %v2235, %v2252
    %v2254 = vsel %vm2240, %v2251, %v2253
    %v2255 = vshll.u32 %v2215, 8
    %v2256 = vmul.u32.u64.compose %v2255, %v2254
    %v2257 = vextract.low.u32 %v2256
    %v2258 = vextract.high.u32 %v2256
    %v2259 = vmul.u32.u64.compose %v2255, %v2250
    %v2260 = vextract.low.u32 %v2259
    %v2261 = vextract.high.u32 %v2259
    %v2262 = vmul.u32 %v2255, %v2246
    %v2263 = vadd.s32 %v2258, %v2260
    %vm2264 = vc.u32 %v2258, %v2260
    %v2265 = vadd.s32 %v2261, 1
    %v2266 = vsel %vm2264, %v2265, %v2261
    %v2267 = vadd.s32 %v2262, %v2266
    %v2268 = vadd.s32 %v2267, 536870912
    %v2269 = vshrl.u32 %v2268, 30
    %v2270 = vshll.u32 %v2269, 30
    %v2271 = vsub.s32 %v2267, %v2270
    %vm2272 = vcmp.lt.s32.totalorder %v2271, 0
    %v2273 = vsub.s32 0, %v2271
    %v2274 = vsel %vm2272, %v2273, %v2271
    %v2275 = vclz %v2274
    %v2276 = vsub.s32 %v2275, 2
    %vm2277 = vcmp.gt.s32.totalorder 0, %v2276
    %v2278 = vsel %vm2277, 0, %v2276
    %v2279 = vsub.s32 32, %v2278
    %v2280 = vshll.u32 %v2271, %v2278
    %v2281 = vshrl.u32 %v2263, %v2279
    %v2282 = vor.u32 %v2280, %v2281
    %v2283 = vsub.s32 4294967266, %v2278
    %v2284 = vadd.s32 %v2283, 127
    %v2285 = vshll.u32 %v2284, 23
    %v2286 = vor.u32 4788187, %v2285
    %v2287 = vand.u32 2147483647, %v2286
    %v2289 = vcvt.s32.f32 %v2282
    %v2290 = vmul.f32 %v2289, %v2287
    %v2291 = vxor.u32 %v2290, 2147483648
    %v2292 = vsel %vm2209, %v2291, %v2290
    %v2293 = vsub.s32 4, %v2269
    %v2294 = vsel %vm2209, %v2293, %v2269
    %v2295 = vsel %vm2208, %v245, %v2292
    %v2296 = vsel %vm2208, 0, %v2294
    %v2297 = vcosq.f32.pop %v2295
    %v2298 = vsinq.f32.pop %v2295
    %vm2299 = vweird.f32 %v245
    %v2300 = vand.u32 %v2296, 3
    %vm2301 = vcmp.lt.s32.totalorder %v2300, 2
    %vm2302 = vcmp.eq.s32.totalorder %v2300, 0
    %v2303 = vxor.u32 %v2298, 2147483648
    %v2304 = vsel %vm2302, %v2297, %v2303
    %vm2305 = vcmp.eq.s32.totalorder %v2300, 2
    %v2306 = vxor.u32 %v2297, 2147483648
    %v2307 = vsel %vm2305, %v2306, %v2298
    %v2308 = vsel %vm2301, %v2304, %v2307
    %v2309 = vsel %vm2299, nan, %v2308
    %v2310 = vand.u32 2147483647, %v246
    %vm2311 = vcmp.le.f32.partialorder %v2310, 0.7853982
    %vm2312 = vcmp.lt.s32.totalorder %v246, 0
    %v2313 = vand.u32 %v246, 2139095040
    %v2314 = vshrl.u32 %v2313, 23
    %v2315 = vsub.s32 %v2314, 127
    %v2316 = vand.u32 2147483647, %v246
    %v2317 = vand.u32 %v2316, 8388607
    %v2318 = vor.u32 %v2317, 8388608
    %v2319 = vsub.s32 0, %v2318
    %v2320 = vadd.s32 %v2315, 1
    %vm2321 = vcmp.gt.s32.totalorder %v2320, 0
    %v2322 = vsel %vm2321, %v2320, 0
    %v2323 = vshrl.u32 %v2322, 5
    %v2324 = vand.u32 %v2322, 31
    %v2325 = vsub.s32 32, %v2324
    %v2326 = vshrl.u32 683565275, %v2325
    %v2327 = vshll.u32 683565275, %v2324
    %v2328 = vshrl.u32 2475754826, %v2325
    %v2329 = vor.u32 %v2327, %v2328
    %v2330 = vshll.u32 2475754826, %v2324
    %v2331 = vshrl.u32 2131351028, %v2325
    %v2332 = vor.u32 %v2330, %v2331
    %v2333 = vshll.u32 2131351028, %v2324
    %v2334 = vshrl.u32 2102212464, %v2325
    %v2335 = vor.u32 %v2333, %v2334
    %v2336 = vshll.u32 2102212464, %v2324
    %v2337 = vshrl.u32 920167782, %v2325
    %v2338 = vor.u32 %v2336, %v2337
    %v2339 = vshll.u32 920167782, %v2324
    %v2340 = vshrl.u32 1326507024, %v2325
    %v2341 = vor.u32 %v2339, %v2340
    %vm2342 = vcmp.lt.s32.totalorder %v2323, 1
    %vm2343 = vcmp.lt.s32.totalorder %v2323, 2
    %vm2344 = vcmp.lt.s32.totalorder %v2323, 3
    %vm2345 = vcmp.lt.s32.totalorder %v2323, 4
    %v2346 = vsel %vm2342, %v2326, %v2329
    %v2347 = vsel %vm2345, %v2335, 2102212464
    %v2348 = vsel %vm2344, %v2332, %v2347
    %v2349 = vsel %vm2343, %v2346, %v2348
    %v2350 = vsel %vm2342, %v2329, %v2332
    %v2351 = vsel %vm2345, %v2338, 920167782
    %v2352 = vsel %vm2344, %v2335, %v2351
    %v2353 = vsel %vm2343, %v2350, %v2352
    %v2354 = vsel %vm2342, %v2332, %v2335
    %v2355 = vsel %vm2345, %v2341, 1326507024
    %v2356 = vsel %vm2344, %v2338, %v2355
    %v2357 = vsel %vm2343, %v2354, %v2356
    %v2358 = vshll.u32 %v2318, 8
    %v2359 = vmul.u32.u64.compose %v2358, %v2357
    %v2360 = vextract.low.u32 %v2359
    %v2361 = vextract.high.u32 %v2359
    %v2362 = vmul.u32.u64.compose %v2358, %v2353
    %v2363 = vextract.low.u32 %v2362
    %v2364 = vextract.high.u32 %v2362
    %v2365 = vmul.u32 %v2358, %v2349
    %v2366 = vadd.s32 %v2361, %v2363
    %vm2367 = vc.u32 %v2361, %v2363
    %v2368 = vadd.s32 %v2364, 1
    %v2369 = vsel %vm2367, %v2368, %v2364
    %v2370 = vadd.s32 %v2365, %v2369
    %v2371 = vadd.s32 %v2370, 536870912
    %v2372 = vshrl.u32 %v2371, 30
    %v2373 = vshll.u32 %v2372, 30
    %v2374 = vsub.s32 %v2370, %v2373
    %vm2375 = vcmp.lt.s32.totalorder %v2374, 0
    %v2376 = vsub.s32 0, %v2374
    %v2377 = vsel %vm2375, %v2376, %v2374
    %v2378 = vclz %v2377
    %v2379 = vsub.s32 %v2378, 2
    %vm2380 = vcmp.gt.s32.totalorder 0, %v2379
    %v2381 = vsel %vm2380, 0, %v2379
    %v2382 = vsub.s32 32, %v2381
    %v2383 = vshll.u32 %v2374, %v2381
    %v2384 = vshrl.u32 %v2366, %v2382
    %v2385 = vor.u32 %v2383, %v2384
    %v2386 = vsub.s32 4294967266, %v2381
    %v2387 = vadd.s32 %v2386, 127
    %v2388 = vshll.u32 %v2387, 23
    %v2389 = vor.u32 4788187, %v2388
    %v2390 = vand.u32 2147483647, %v2389
    %v2392 = vcvt.s32.f32 %v2385
    %v2393 = vmul.f32 %v2392, %v2390
    %v2394 = vxor.u32 %v2393, 2147483648
    %v2395 = vsel %vm2312, %v2394, %v2393
    %v2396 = vsub.s32 4, %v2372
    %v2397 = vsel %vm2312, %v2396, %v2372
    %v2398 = vsel %vm2311, %v246, %v2395
    %v2399 = vsel %vm2311, 0, %v2397
    %v2400 = vcosq.f32.pop %v2398
    %v2401 = vsinq.f32.pop %v2398
    %vm2402 = vweird.f32 %v246
    %v2403 = vand.u32 %v2399, 3
    %vm2404 = vcmp.lt.s32.totalorder %v2403, 2
    %vm2405 = vcmp.eq.s32.totalorder %v2403, 0
    %v2406 = vxor.u32 %v2401, 2147483648
    %v2407 = vsel %vm2405, %v2400, %v2406
    %vm2408 = vcmp.eq.s32.totalorder %v2403, 2
    %v2409 = vxor.u32 %v2400, 2147483648
    %v2410 = vsel %vm2408, %v2409, %v2401
    %v2411 = vsel %vm2404, %v2407, %v2410
    %v2412 = vsel %vm2402, nan, %v2411
    %v2413 = vand.u32 2147483647, %v247
    %vm2414 = vcmp.le.f32.partialorder %v2413, 0.7853982
    %vm2415 = vcmp.lt.s32.totalorder %v247, 0
    %v2416 = vand.u32 %v247, 2139095040
    %v2417 = vshrl.u32 %v2416, 23
    %v2418 = vsub.s32 %v2417, 127
    %v2419 = vand.u32 2147483647, %v247
    %v2420 = vand.u32 %v2419, 8388607
    %v2421 = vor.u32 %v2420, 8388608
    %v2422 = vsub.s32 0, %v2421
    %v2423 = vadd.s32 %v2418, 1
    %vm2424 = vcmp.gt.s32.totalorder %v2423, 0
    %v2425 = vsel %vm2424, %v2423, 0
    %v2426 = vshrl.u32 %v2425, 5
    %v2427 = vand.u32 %v2425, 31
    %v2428 = vsub.s32 32, %v2427
    %v2429 = vshrl.u32 683565275, %v2428
    %v2430 = vshll.u32 683565275, %v2427
    %v2431 = vshrl.u32 2475754826, %v2428
    %v2432 = vor.u32 %v2430, %v2431
    %v2433 = vshll.u32 2475754826, %v2427
    %v2434 = vshrl.u32 2131351028, %v2428
    %v2435 = vor.u32 %v2433, %v2434
    %v2436 = vshll.u32 2131351028, %v2427
    %v2437 = vshrl.u32 2102212464, %v2428
    %v2438 = vor.u32 %v2436, %v2437
    %v2439 = vshll.u32 2102212464, %v2427
    %v2440 = vshrl.u32 920167782, %v2428
    %v2441 = vor.u32 %v2439, %v2440
    %v2442 = vshll.u32 920167782, %v2427
    %v2443 = vshrl.u32 1326507024, %v2428
    %v2444 = vor.u32 %v2442, %v2443
    %vm2445 = vcmp.lt.s32.totalorder %v2426, 1
    %vm2446 = vcmp.lt.s32.totalorder %v2426, 2
    %vm2447 = vcmp.lt.s32.totalorder %v2426, 3
    %vm2448 = vcmp.lt.s32.totalorder %v2426, 4
    %v2449 = vsel %vm2445, %v2429, %v2432
    %v2450 = vsel %vm2448, %v2438, 2102212464
    %v2451 = vsel %vm2447, %v2435, %v2450
    %v2452 = vsel %vm2446, %v2449, %v2451
    %v2453 = vsel %vm2445, %v2432, %v2435
    %v2454 = vsel %vm2448, %v2441, 920167782
    %v2455 = vsel %vm2447, %v2438, %v2454
    %v2456 = vsel %vm2446, %v2453, %v2455
    %v2457 = vsel %vm2445, %v2435, %v2438
    %v2458 = vsel %vm2448, %v2444, 1326507024
    %v2459 = vsel %vm2447, %v2441, %v2458
    %v2460 = vsel %vm2446, %v2457, %v2459
    %v2461 = vshll.u32 %v2421, 8
    %v2462 = vmul.u32.u64.compose %v2461, %v2460
    %v2463 = vextract.low.u32 %v2462
    %v2464 = vextract.high.u32 %v2462
    %v2465 = vmul.u32.u64.compose %v2461, %v2456
    %v2466 = vextract.low.u32 %v2465
    %v2467 = vextract.high.u32 %v2465
    %v2468 = vmul.u32 %v2461, %v2452
    %v2469 = vadd.s32 %v2464, %v2466
    %vm2470 = vc.u32 %v2464, %v2466
    %v2471 = vadd.s32 %v2467, 1
    %v2472 = vsel %vm2470, %v2471, %v2467
    %v2473 = vadd.s32 %v2468, %v2472
    %v2474 = vadd.s32 %v2473, 536870912
    %v2475 = vshrl.u32 %v2474, 30
    %v2476 = vshll.u32 %v2475, 30
    %v2477 = vsub.s32 %v2473, %v2476
    %vm2478 = vcmp.lt.s32.totalorder %v2477, 0
    %v2479 = vsub.s32 0, %v2477
    %v2480 = vsel %vm2478, %v2479, %v2477
    %v2481 = vclz %v2480
    %v2482 = vsub.s32 %v2481, 2
    %vm2483 = vcmp.gt.s32.totalorder 0, %v2482
    %v2484 = vsel %vm2483, 0, %v2482
    %v2485 = vsub.s32 32, %v2484
    %v2486 = vshll.u32 %v2477, %v2484
    %v2487 = vshrl.u32 %v2469, %v2485
    %v2488 = vor.u32 %v2486, %v2487
    %v2489 = vsub.s32 4294967266, %v2484
    %v2490 = vadd.s32 %v2489, 127
    %v2491 = vshll.u32 %v2490, 23
    %v2492 = vor.u32 4788187, %v2491
    %v2493 = vand.u32 2147483647, %v2492
    %v2495 = vcvt.s32.f32 %v2488
    %v2496 = vmul.f32 %v2495, %v2493
    %v2497 = vxor.u32 %v2496, 2147483648
    %v2498 = vsel %vm2415, %v2497, %v2496
    %v2499 = vsub.s32 4, %v2475
    %v2500 = vsel %vm2415, %v2499, %v2475
    %v2501 = vsel %vm2414, %v247, %v2498
    %v2502 = vsel %vm2414, 0, %v2500
    %v2503 = vcosq.f32.pop %v2501
    %v2504 = vsinq.f32.pop %v2501
    %vm2505 = vweird.f32 %v247
    %v2506 = vand.u32 %v2502, 3
    %vm2507 = vcmp.lt.s32.totalorder %v2506, 2
    %vm2508 = vcmp.eq.s32.totalorder %v2506, 0
    %v2509 = vxor.u32 %v2504, 2147483648
    %v2510 = vsel %vm2508, %v2503, %v2509
    %vm2511 = vcmp.eq.s32.totalorder %v2506, 2
    %v2512 = vxor.u32 %v2503, 2147483648
    %v2513 = vsel %vm2511, %v2512, %v2504
    %v2514 = vsel %vm2507, %v2510, %v2513
    %v2515 = vsel %vm2505, nan, %v2514
    %v2516 = vand.u32 2147483647, %v248
    %vm2517 = vcmp.le.f32.partialorder %v2516, 0.7853982
    %vm2518 = vcmp.lt.s32.totalorder %v248, 0
    %v2519 = vand.u32 %v248, 2139095040
    %v2520 = vshrl.u32 %v2519, 23
    %v2521 = vsub.s32 %v2520, 127
    %v2522 = vand.u32 2147483647, %v248
    %v2523 = vand.u32 %v2522, 8388607
    %v2524 = vor.u32 %v2523, 8388608
    %v2525 = vsub.s32 0, %v2524
    %v2526 = vadd.s32 %v2521, 1
    %vm2527 = vcmp.gt.s32.totalorder %v2526, 0
    %v2528 = vsel %vm2527, %v2526, 0
    %v2529 = vshrl.u32 %v2528, 5
    %v2530 = vand.u32 %v2528, 31
    %v2531 = vsub.s32 32, %v2530
    %v2532 = vshrl.u32 683565275, %v2531
    %v2533 = vshll.u32 683565275, %v2530
    %v2534 = vshrl.u32 2475754826, %v2531
    %v2535 = vor.u32 %v2533, %v2534
    %v2536 = vshll.u32 2475754826, %v2530
    %v2537 = vshrl.u32 2131351028, %v2531
    %v2538 = vor.u32 %v2536, %v2537
    %v2539 = vshll.u32 2131351028, %v2530
    %v2540 = vshrl.u32 2102212464, %v2531
    %v2541 = vor.u32 %v2539, %v2540
    %v2542 = vshll.u32 2102212464, %v2530
    %v2543 = vshrl.u32 920167782, %v2531
    %v2544 = vor.u32 %v2542, %v2543
    %v2545 = vshll.u32 920167782, %v2530
    %v2546 = vshrl.u32 1326507024, %v2531
    %v2547 = vor.u32 %v2545, %v2546
    %vm2548 = vcmp.lt.s32.totalorder %v2529, 1
    %vm2549 = vcmp.lt.s32.totalorder %v2529, 2
    %vm2550 = vcmp.lt.s32.totalorder %v2529, 3
    %vm2551 = vcmp.lt.s32.totalorder %v2529, 4
    %v2552 = vsel %vm2548, %v2532, %v2535
    %v2553 = vsel %vm2551, %v2541, 2102212464
    %v2554 = vsel %vm2550, %v2538, %v2553
    %v2555 = vsel %vm2549, %v2552, %v2554
    %v2556 = vsel %vm2548, %v2535, %v2538
    %v2557 = vsel %vm2551, %v2544, 920167782
    %v2558 = vsel %vm2550, %v2541, %v2557
    %v2559 = vsel %vm2549, %v2556, %v2558
    %v2560 = vsel %vm2548, %v2538, %v2541
    %v2561 = vsel %vm2551, %v2547, 1326507024
    %v2562 = vsel %vm2550, %v2544, %v2561
    %v2563 = vsel %vm2549, %v2560, %v2562
    %v2564 = vshll.u32 %v2524, 8
    %v2565 = vmul.u32.u64.compose %v2564, %v2563
    %v2566 = vextract.low.u32 %v2565
    %v2567 = vextract.high.u32 %v2565
    %v2568 = vmul.u32.u64.compose %v2564, %v2559
    %v2569 = vextract.low.u32 %v2568
    %v2570 = vextract.high.u32 %v2568
    %v2571 = vmul.u32 %v2564, %v2555
    %v2572 = vadd.s32 %v2567, %v2569
    %vm2573 = vc.u32 %v2567, %v2569
    %v2574 = vadd.s32 %v2570, 1
    %v2575 = vsel %vm2573, %v2574, %v2570
    %v2576 = vadd.s32 %v2571, %v2575
    %v2577 = vadd.s32 %v2576, 536870912
    %v2578 = vshrl.u32 %v2577, 30
    %v2579 = vshll.u32 %v2578, 30
    %v2580 = vsub.s32 %v2576, %v2579
    %vm2581 = vcmp.lt.s32.totalorder %v2580, 0
    %v2582 = vsub.s32 0, %v2580
    %v2583 = vsel %vm2581, %v2582, %v2580
    %v2584 = vclz %v2583
    %v2585 = vsub.s32 %v2584, 2
    %vm2586 = vcmp.gt.s32.totalorder 0, %v2585
    %v2587 = vsel %vm2586, 0, %v2585
    %v2588 = vsub.s32 32, %v2587
    %v2589 = vshll.u32 %v2580, %v2587
    %v2590 = vshrl.u32 %v2572, %v2588
    %v2591 = vor.u32 %v2589, %v2590
    %v2592 = vsub.s32 4294967266, %v2587
    %v2593 = vadd.s32 %v2592, 127
    %v2594 = vshll.u32 %v2593, 23
    %v2595 = vor.u32 4788187, %v2594
    %v2596 = vand.u32 2147483647, %v2595
    %v2598 = vcvt.s32.f32 %v2591
    %v2599 = vmul.f32 %v2598, %v2596
    %v2600 = vxor.u32 %v2599, 2147483648
    %v2601 = vsel %vm2518, %v2600, %v2599
    %v2602 = vsub.s32 4, %v2578
    %v2603 = vsel %vm2518, %v2602, %v2578
    %v2604 = vsel %vm2517, %v248, %v2601
    %v2605 = vsel %vm2517, 0, %v2603
    %v2606 = vcosq.f32.pop %v2604
    %v2607 = vsinq.f32.pop %v2604
    %vm2608 = vweird.f32 %v248
    %v2609 = vand.u32 %v2605, 3
    %vm2610 = vcmp.lt.s32.totalorder %v2609, 2
    %vm2611 = vcmp.eq.s32.totalorder %v2609, 0
    %v2612 = vxor.u32 %v2607, 2147483648
    %v2613 = vsel %vm2611, %v2606, %v2612
    %vm2614 = vcmp.eq.s32.totalorder %v2609, 2
    %v2615 = vxor.u32 %v2606, 2147483648
    %v2616 = vsel %vm2614, %v2615, %v2607
    %v2617 = vsel %vm2610, %v2613, %v2616
    %v2618 = vsel %vm2608, nan, %v2617
    %v2619 = vand.u32 2147483647, %v249
    %vm2620 = vcmp.le.f32.partialorder %v2619, 0.7853982
    %vm2621 = vcmp.lt.s32.totalorder %v249, 0
    %v2622 = vand.u32 %v249, 2139095040
    %v2623 = vshrl.u32 %v2622, 23
    %v2624 = vsub.s32 %v2623, 127
    %v2625 = vand.u32 2147483647, %v249
    %v2626 = vand.u32 %v2625, 8388607
    %v2627 = vor.u32 %v2626, 8388608
    %v2628 = vsub.s32 0, %v2627
    %v2629 = vadd.s32 %v2624, 1
    %vm2630 = vcmp.gt.s32.totalorder %v2629, 0
    %v2631 = vsel %vm2630, %v2629, 0
    %v2632 = vshrl.u32 %v2631, 5
    %v2633 = vand.u32 %v2631, 31
    %v2634 = vsub.s32 32, %v2633
    %v2635 = vshrl.u32 683565275, %v2634
    %v2636 = vshll.u32 683565275, %v2633
    %v2637 = vshrl.u32 2475754826, %v2634
    %v2638 = vor.u32 %v2636, %v2637
    %v2639 = vshll.u32 2475754826, %v2633
    %v2640 = vshrl.u32 2131351028, %v2634
    %v2641 = vor.u32 %v2639, %v2640
    %v2642 = vshll.u32 2131351028, %v2633
    %v2643 = vshrl.u32 2102212464, %v2634
    %v2644 = vor.u32 %v2642, %v2643
    %v2645 = vshll.u32 2102212464, %v2633
    %v2646 = vshrl.u32 920167782, %v2634
    %v2647 = vor.u32 %v2645, %v2646
    %v2648 = vshll.u32 920167782, %v2633
    %v2649 = vshrl.u32 1326507024, %v2634
    %v2650 = vor.u32 %v2648, %v2649
    %vm2651 = vcmp.lt.s32.totalorder %v2632, 1
    %vm2652 = vcmp.lt.s32.totalorder %v2632, 2
    %vm2653 = vcmp.lt.s32.totalorder %v2632, 3
    %vm2654 = vcmp.lt.s32.totalorder %v2632, 4
    %v2655 = vsel %vm2651, %v2635, %v2638
    %v2656 = vsel %vm2654, %v2644, 2102212464
    %v2657 = vsel %vm2653, %v2641, %v2656
    %v2658 = vsel %vm2652, %v2655, %v2657
    %v2659 = vsel %vm2651, %v2638, %v2641
    %v2660 = vsel %vm2654, %v2647, 920167782
    %v2661 = vsel %vm2653, %v2644, %v2660
    %v2662 = vsel %vm2652, %v2659, %v2661
    %v2663 = vsel %vm2651, %v2641, %v2644
    %v2664 = vsel %vm2654, %v2650, 1326507024
    %v2665 = vsel %vm2653, %v2647, %v2664
    %v2666 = vsel %vm2652, %v2663, %v2665
    %v2667 = vshll.u32 %v2627, 8
    %v2668 = vmul.u32.u64.compose %v2667, %v2666
    %v2669 = vextract.low.u32 %v2668
    %v2670 = vextract.high.u32 %v2668
    %v2671 = vmul.u32.u64.compose %v2667, %v2662
    %v2672 = vextract.low.u32 %v2671
    %v2673 = vextract.high.u32 %v2671
    %v2674 = vmul.u32 %v2667, %v2658
    %v2675 = vadd.s32 %v2670, %v2672
    %vm2676 = vc.u32 %v2670, %v2672
    %v2677 = vadd.s32 %v2673, 1
    %v2678 = vsel %vm2676, %v2677, %v2673
    %v2679 = vadd.s32 %v2674, %v2678
    %v2680 = vadd.s32 %v2679, 536870912
    %v2681 = vshrl.u32 %v2680, 30
    %v2682 = vshll.u32 %v2681, 30
    %v2683 = vsub.s32 %v2679, %v2682
    %vm2684 = vcmp.lt.s32.totalorder %v2683, 0
    %v2685 = vsub.s32 0, %v2683
    %v2686 = vsel %vm2684, %v2685, %v2683
    %v2687 = vclz %v2686
    %v2688 = vsub.s32 %v2687, 2
    %vm2689 = vcmp.gt.s32.totalorder 0, %v2688
    %v2690 = vsel %vm2689, 0, %v2688
    %v2691 = vsub.s32 32, %v2690
    %v2692 = vshll.u32 %v2683, %v2690
    %v2693 = vshrl.u32 %v2675, %v2691
    %v2694 = vor.u32 %v2692, %v2693
    %v2695 = vsub.s32 4294967266, %v2690
    %v2696 = vadd.s32 %v2695, 127
    %v2697 = vshll.u32 %v2696, 23
    %v2698 = vor.u32 4788187, %v2697
    %v2699 = vand.u32 2147483647, %v2698
    %v2701 = vcvt.s32.f32 %v2694
    %v2702 = vmul.f32 %v2701, %v2699
    %v2703 = vxor.u32 %v2702, 2147483648
    %v2704 = vsel %vm2621, %v2703, %v2702
    %v2705 = vsub.s32 4, %v2681
    %v2706 = vsel %vm2621, %v2705, %v2681
    %v2707 = vsel %vm2620, %v249, %v2704
    %v2708 = vsel %vm2620, 0, %v2706
    %v2709 = vcosq.f32.pop %v2707
    %v2710 = vsinq.f32.pop %v2707
    %vm2711 = vweird.f32 %v249
    %v2712 = vand.u32 %v2708, 3
    %vm2713 = vcmp.lt.s32.totalorder %v2712, 2
    %vm2714 = vcmp.eq.s32.totalorder %v2712, 0
    %v2715 = vxor.u32 %v2710, 2147483648
    %v2716 = vsel %vm2714, %v2709, %v2715
    %vm2717 = vcmp.eq.s32.totalorder %v2712, 2
    %v2718 = vxor.u32 %v2709, 2147483648
    %v2719 = vsel %vm2717, %v2718, %v2710
    %v2720 = vsel %vm2713, %v2716, %v2719
    %v2721 = vsel %vm2711, nan, %v2720
    %v2722 = vsub.f32 1.0, %v352
    %v2723 = vsub.f32 1.0, %v455
    %v2724 = vsub.f32 1.0, %v558
    %v2725 = vsub.f32 1.0, %v661
    %v2726 = vsub.f32 1.0, %v764
    %v2727 = vsub.f32 1.0, %v867
    %v2728 = vsub.f32 1.0, %v970
    %v2729 = vsub.f32 1.0, %v1073
    %v2730 = vsub.f32 1.0, %v1176
    %v2731 = vsub.f32 1.0, %v1279
    %v2732 = vsub.f32 1.0, %v1382
    %v2733 = vsub.f32 1.0, %v1485
    %v2734 = vsub.f32 1.0, %v1588
    %v2735 = vsub.f32 1.0, %v1691
    %v2736 = vsub.f32 1.0, %v1794
    %v2737 = vsub.f32 1.0, %v1897
    %v2738 = vsub.f32 1.0, %v2000
    %v2739 = vsub.f32 1.0, %v2103
    %v2740 = vsub.f32 1.0, %v2206
    %v2741 = vsub.f32 1.0, %v2309
    %v2742 = vsub.f32 1.0, %v2412
    %v2743 = vsub.f32 1.0, %v2515
    %v2744 = vsub.f32 1.0, %v2618
    %v2745 = vsub.f32 1.0, %v2721
    %v2746 = vmul.f32 %v2722, 24.5
    %v2747 = vmul.f32 %v2723, 24.5
    %v2748 = vmul.f32 %v2724, 24.5
    %v2749 = vmul.f32 %v2725, 24.5
    %v2750 = vmul.f32 %v2726, 24.5
    %v2751 = vmul.f32 %v2727, 24.5
    %v2752 = vmul.f32 %v2728, 24.5
    %v2753 = vmul.f32 %v2729, 24.5
    %v2754 = vmul.f32 %v2730, 24.5
    %v2755 = vmul.f32 %v2731, 24.5
    %v2756 = vmul.f32 %v2732, 24.5
    %v2757 = vmul.f32 %v2733, 24.5
    %v2758 = vmul.f32 %v2734, 24.5
    %v2759 = vmul.f32 %v2735, 24.5
    %v2760 = vmul.f32 %v2736, 24.5
    %v2761 = vmul.f32 %v2737, 24.5
    %v2762 = vmul.f32 %v2738, 24.5
    %v2763 = vmul.f32 %v2739, 24.5
    %v2764 = vmul.f32 %v2740, 24.5
    %v2765 = vmul.f32 %v2741, 24.5
    %v2766 = vmul.f32 %v2742, 24.5
    %v2767 = vmul.f32 %v2743, 24.5
    %v2768 = vmul.f32 %v2744, 24.5
    %v2769 = vmul.f32 %v2745, 24.5
    %v2770 = vmul.f32 %v2746, %v154
    %v2771 = vmul.f32 %v2747, %v155
    %v2772 = vmul.f32 %v2748, %v156
    %v2773 = vmul.f32 %v2749, %v157
    %v2774 = vmul.f32 %v2750, %v158
    %v2775 = vmul.f32 %v2751, %v159
    %v2776 = vmul.f32 %v2752, %v160
    %v2777 = vmul.f32 %v2753, %v161
    %v2778 = vmul.f32 %v2754, %v162
    %v2779 = vmul.f32 %v2755, %v163
    %v2780 = vmul.f32 %v2756, %v164
    %v2781 = vmul.f32 %v2757, %v165
    %v2782 = vmul.f32 %v2758, %v166
    %v2783 = vmul.f32 %v2759, %v167
    %v2784 = vmul.f32 %v2760, %v168
    %v2785 = vmul.f32 %v2761, %v169
    %v2786 = vmul.f32 %v2762, %v170
    %v2787 = vmul.f32 %v2763, %v171
    %v2788 = vmul.f32 %v2764, %v172
    %v2789 = vmul.f32 %v2765, %v173
    %v2790 = vmul.f32 %v2766, %v174
    %v2791 = vmul.f32 %v2767, %v175
    %v2792 = vmul.f32 %v2768, %v176
    %v2793 = vmul.f32 %v2769, %v177
    %v2794 = vlaneseq
    %v2795 = vand.u32 %v2794, 127
    %v2796 = vcvt.s32.f32 %v2795
    %v2797 = vadd.f32 %v2796, 0.5
    %v2798 = vmul.f32 %v2797, 0.1
    %v2799 = vfloor.f32 %v2798
    %v2800 = vmul.f32 %v2799, 10.0
    %v2801 = vsub.f32 %v2796, %v2800
    %v2802 = vmul.f32 %v2799, 0.70710677
    %v2803 = vadd.f32 %v2802, -0.70710677
    %v2804 = vmul.f32 %v2801, 0.70710677
    %v2805 = vadd.f32 %v2804, -0.70710677
    %v2806 = vmul.f32 %v9, 4.9497476
    %v2807 = vmul.f32 %v10, 4.9497476
    %v2808 = vmul.f32 %v11, 4.9497476
    %v2809 = vmul.f32 %v12, 4.9497476
    %v2810 = vmul.f32 %v13, 4.9497476
    %v2811 = vmul.f32 %v14, 4.9497476
    %v2812 = vmul.f32 %v15, 4.9497476
    %v2813 = vmul.f32 %v16, 4.9497476
    %v2814 = vmul.f32 %v17, 4.9497476
    %v2815 = vmul.f32 %v18, 4.9497476
    %v2816 = vmul.f32 %v19, 4.9497476
    %v2817 = vmul.f32 %v20, 4.9497476
    %v2818 = vmul.f32 %v21, 4.9497476
    %v2819 = vmul.f32 %v22, 4.9497476
    %v2820 = vmul.f32 %v23, 4.9497476
    %v2821 = vmul.f32 %v24, 4.9497476
    %v2822 = vmul.f32 %v25, 4.9497476
    %v2823 = vmul.f32 %v26, 4.9497476
    %v2824 = vmul.f32 %v27, 4.9497476
    %v2825 = vmul.f32 %v28, 4.9497476
    %v2826 = vmul.f32 %v29, 4.9497476
    %v2827 = vmul.f32 %v30, 4.9497476
    %v2828 = vmul.f32 %v31, 4.9497476
    %v2829 = vmul.f32 %v32, 4.9497476
    %v2830 = vmul.f32 %v82, 4.9497476
    %v2831 = vmul.f32 %v83, 4.9497476
    %v2832 = vmul.f32 %v84, 4.9497476
    %v2833 = vmul.f32 %v85, 4.9497476
    %v2834 = vmul.f32 %v86, 4.9497476
    %v2835 = vmul.f32 %v87, 4.9497476
    %v2836 = vmul.f32 %v88, 4.9497476
    %v2837 = vmul.f32 %v89, 4.9497476
    %v2838 = vmul.f32 %v90, 4.9497476
    %v2839 = vmul.f32 %v91, 4.9497476
    %v2840 = vmul.f32 %v92, 4.9497476
    %v2841 = vmul.f32 %v93, 4.9497476
    %v2842 = vmul.f32 %v94, 4.9497476
    %v2843 = vmul.f32 %v95, 4.9497476
    %v2844 = vmul.f32 %v96, 4.9497476
    %v2845 = vmul.f32 %v97, 4.9497476
    %v2846 = vmul.f32 %v98, 4.9497476
    %v2847 = vmul.f32 %v99, 4.9497476
    %v2848 = vmul.f32 %v100, 4.9497476
    %v2849 = vmul.f32 %v101, 4.9497476
    %v2850 = vmul.f32 %v102, 4.9497476
    %v2851 = vmul.f32 %v103, 4.9497476
    %v2852 = vmul.f32 %v104, 4.9497476
    %v2853 = vmul.f32 %v105, 4.9497476
    %2855 = vset.pattern.permute.xlu0 0
    %2856 = vperm.xlu0 %2855, %v2806
    %v2857 = vpop.permute.xlu0 %2856
    %2860 = vset.pattern.permute.xlu0 0
    %2861 = vperm.xlu0 %2860, %v2807
    %v2862 = vpop.permute.xlu0 %2861
    %2865 = vset.pattern.permute.xlu0 0
    %2866 = vperm.xlu0 %2865, %v2808
    %v2867 = vpop.permute.xlu0 %2866
    %2870 = vset.pattern.permute.xlu0 0
    %2871 = vperm.xlu0 %2870, %v2809
    %v2872 = vpop.permute.xlu0 %2871
    %2875 = vset.pattern.permute.xlu0 0
    %2876 = vperm.xlu0 %2875, %v2810
    %v2877 = vpop.permute.xlu0 %2876
    %2880 = vset.pattern.permute.xlu0 0
    %2881 = vperm.xlu0 %2880, %v2811
    %v2882 = vpop.permute.xlu0 %2881
    %2885 = vset.pattern.permute.xlu0 0
    %2886 = vperm.xlu0 %2885, %v2812
    %v2887 = vpop.permute.xlu0 %2886
    %2890 = vset.pattern.permute.xlu0 0
    %2891 = vperm.xlu0 %2890, %v2813
    %v2892 = vpop.permute.xlu0 %2891
    %2895 = vset.pattern.permute.xlu0 0
    %2896 = vperm.xlu0 %2895, %v2814
    %v2897 = vpop.permute.xlu0 %2896
    %2900 = vset.pattern.permute.xlu0 0
    %2901 = vperm.xlu0 %2900, %v2815
    %v2902 = vpop.permute.xlu0 %2901
    %2905 = vset.pattern.permute.xlu0 0
    %2906 = vperm.xlu0 %2905, %v2816
    %v2907 = vpop.permute.xlu0 %2906
    %2910 = vset.pattern.permute.xlu0 0
    %2911 = vperm.xlu0 %2910, %v2817
    %v2912 = vpop.permute.xlu0 %2911
    %2915 = vset.pattern.permute.xlu0 0
    %2916 = vperm.xlu0 %2915, %v2818
    %v2917 = vpop.permute.xlu0 %2916
    %2920 = vset.pattern.permute.xlu0 0
    %2921 = vperm.xlu0 %2920, %v2819
    %v2922 = vpop.permute.xlu0 %2921
    %2925 = vset.pattern.permute.xlu0 0
    %2926 = vperm.xlu0 %2925, %v2820
    %v2927 = vpop.permute.xlu0 %2926
    %2930 = vset.pattern.permute.xlu0 0
    %2931 = vperm.xlu0 %2930, %v2821
    %v2932 = vpop.permute.xlu0 %2931
    %2935 = vset.pattern.permute.xlu0 0
    %2936 = vperm.xlu0 %2935, %v2822
    %v2937 = vpop.permute.xlu0 %2936
    %2940 = vset.pattern.permute.xlu0 0
    %2941 = vperm.xlu0 %2940, %v2823
    %v2942 = vpop.permute.xlu0 %2941
    %2945 = vset.pattern.permute.xlu0 0
    %2946 = vperm.xlu0 %2945, %v2824
    %v2947 = vpop.permute.xlu0 %2946
    %2950 = vset.pattern.permute.xlu0 0
    %2951 = vperm.xlu0 %2950, %v2825
    %v2952 = vpop.permute.xlu0 %2951
    %2955 = vset.pattern.permute.xlu0 0
    %2956 = vperm.xlu0 %2955, %v2826
    %v2957 = vpop.permute.xlu0 %2956
    %2960 = vset.pattern.permute.xlu0 0
    %2961 = vperm.xlu0 %2960, %v2827
    %v2962 = vpop.permute.xlu0 %2961
    %2965 = vset.pattern.permute.xlu0 0
    %2966 = vperm.xlu0 %2965, %v2828
    %v2967 = vpop.permute.xlu0 %2966
    %2970 = vset.pattern.permute.xlu0 0
    %2971 = vperm.xlu0 %2970, %v2829
    %v2972 = vpop.permute.xlu0 %2971
    %v2974 = vsub.f32 %v2857, %v2803
    %v2975 = vsub.f32 %v2862, %v2803
    %v2976 = vsub.f32 %v2867, %v2803
    %v2977 = vsub.f32 %v2872, %v2803
    %v2978 = vsub.f32 %v2877, %v2803
    %v2979 = vsub.f32 %v2882, %v2803
    %v2980 = vsub.f32 %v2887, %v2803
    %v2981 = vsub.f32 %v2892, %v2803
    %v2982 = vsub.f32 %v2897, %v2803
    %v2983 = vsub.f32 %v2902, %v2803
    %v2984 = vsub.f32 %v2907, %v2803
    %v2985 = vsub.f32 %v2912, %v2803
    %v2986 = vsub.f32 %v2917, %v2803
    %v2987 = vsub.f32 %v2922, %v2803
    %v2988 = vsub.f32 %v2927, %v2803
    %v2989 = vsub.f32 %v2932, %v2803
    %v2990 = vsub.f32 %v2937, %v2803
    %v2991 = vsub.f32 %v2942, %v2803
    %v2992 = vsub.f32 %v2947, %v2803
    %v2993 = vsub.f32 %v2952, %v2803
    %v2994 = vsub.f32 %v2957, %v2803
    %v2995 = vsub.f32 %v2962, %v2803
    %v2996 = vsub.f32 %v2967, %v2803
    %v2997 = vsub.f32 %v2972, %v2803
    %v2998 = vmul.f32 %v2974, %v2974
    %v2999 = vmul.f32 %v2975, %v2975
    %v3000 = vmul.f32 %v2976, %v2976
    %v3001 = vmul.f32 %v2977, %v2977
    %v3002 = vmul.f32 %v2978, %v2978
    %v3003 = vmul.f32 %v2979, %v2979
    %v3004 = vmul.f32 %v2980, %v2980
    %v3005 = vmul.f32 %v2981, %v2981
    %v3006 = vmul.f32 %v2982, %v2982
    %v3007 = vmul.f32 %v2983, %v2983
    %v3008 = vmul.f32 %v2984, %v2984
    %v3009 = vmul.f32 %v2985, %v2985
    %v3010 = vmul.f32 %v2986, %v2986
    %v3011 = vmul.f32 %v2987, %v2987
    %v3012 = vmul.f32 %v2988, %v2988
    %v3013 = vmul.f32 %v2989, %v2989
    %v3014 = vmul.f32 %v2990, %v2990
    %v3015 = vmul.f32 %v2991, %v2991
    %v3016 = vmul.f32 %v2992, %v2992
    %v3017 = vmul.f32 %v2993, %v2993
    %v3018 = vmul.f32 %v2994, %v2994
    %v3019 = vmul.f32 %v2995, %v2995
    %v3020 = vmul.f32 %v2996, %v2996
    %v3021 = vmul.f32 %v2997, %v2997
    %3023 = vset.pattern.permute.xlu0 0
    %3024 = vperm.xlu0 %3023, %v2830
    %v3025 = vpop.permute.xlu0 %3024
    %3028 = vset.pattern.permute.xlu0 0
    %3029 = vperm.xlu0 %3028, %v2831
    %v3030 = vpop.permute.xlu0 %3029
    %3033 = vset.pattern.permute.xlu0 0
    %3034 = vperm.xlu0 %3033, %v2832
    %v3035 = vpop.permute.xlu0 %3034
    %3038 = vset.pattern.permute.xlu0 0
    %3039 = vperm.xlu0 %3038, %v2833
    %v3040 = vpop.permute.xlu0 %3039
    %3043 = vset.pattern.permute.xlu0 0
    %3044 = vperm.xlu0 %3043, %v2834
    %v3045 = vpop.permute.xlu0 %3044
    %3048 = vset.pattern.permute.xlu0 0
    %3049 = vperm.xlu0 %3048, %v2835
    %v3050 = vpop.permute.xlu0 %3049
    %3053 = vset.pattern.permute.xlu0 0
    %3054 = vperm.xlu0 %3053, %v2836
    %v3055 = vpop.permute.xlu0 %3054
    %3058 = vset.pattern.permute.xlu0 0
    %3059 = vperm.xlu0 %3058, %v2837
    %v3060 = vpop.permute.xlu0 %3059
    %3063 = vset.pattern.permute.xlu0 0
    %3064 = vperm.xlu0 %3063, %v2838
    %v3065 = vpop.permute.xlu0 %3064
    %3068 = vset.pattern.permute.xlu0 0
    %3069 = vperm.xlu0 %3068, %v2839
    %v3070 = vpop.permute.xlu0 %3069
    %3073 = vset.pattern.permute.xlu0 0
    %3074 = vperm.xlu0 %3073, %v2840
    %v3075 = vpop.permute.xlu0 %3074
    %3078 = vset.pattern.permute.xlu0 0
    %3079 = vperm.xlu0 %3078, %v2841
    %v3080 = vpop.permute.xlu0 %3079
    %3083 = vset.pattern.permute.xlu0 0
    %3084 = vperm.xlu0 %3083, %v2842
    %v3085 = vpop.permute.xlu0 %3084
    %3088 = vset.pattern.permute.xlu0 0
    %3089 = vperm.xlu0 %3088, %v2843
    %v3090 = vpop.permute.xlu0 %3089
    %3093 = vset.pattern.permute.xlu0 0
    %3094 = vperm.xlu0 %3093, %v2844
    %v3095 = vpop.permute.xlu0 %3094
    %3098 = vset.pattern.permute.xlu0 0
    %3099 = vperm.xlu0 %3098, %v2845
    %v3100 = vpop.permute.xlu0 %3099
    %3103 = vset.pattern.permute.xlu0 0
    %3104 = vperm.xlu0 %3103, %v2846
    %v3105 = vpop.permute.xlu0 %3104
    %3108 = vset.pattern.permute.xlu0 0
    %3109 = vperm.xlu0 %3108, %v2847
    %v3110 = vpop.permute.xlu0 %3109
    %3113 = vset.pattern.permute.xlu0 0
    %3114 = vperm.xlu0 %3113, %v2848
    %v3115 = vpop.permute.xlu0 %3114
    %3118 = vset.pattern.permute.xlu0 0
    %3119 = vperm.xlu0 %3118, %v2849
    %v3120 = vpop.permute.xlu0 %3119
    %3123 = vset.pattern.permute.xlu0 0
    %3124 = vperm.xlu0 %3123, %v2850
    %v3125 = vpop.permute.xlu0 %3124
    %3128 = vset.pattern.permute.xlu0 0
    %3129 = vperm.xlu0 %3128, %v2851
    %v3130 = vpop.permute.xlu0 %3129
    %3133 = vset.pattern.permute.xlu0 0
    %3134 = vperm.xlu0 %3133, %v2852
    %v3135 = vpop.permute.xlu0 %3134
    %3138 = vset.pattern.permute.xlu0 0
    %3139 = vperm.xlu0 %3138, %v2853
    %v3140 = vpop.permute.xlu0 %3139
    %v3142 = vsub.f32 %v3025, %v2805
    %v3143 = vsub.f32 %v3030, %v2805
    %v3144 = vsub.f32 %v3035, %v2805
    %v3145 = vsub.f32 %v3040, %v2805
    %v3146 = vsub.f32 %v3045, %v2805
    %v3147 = vsub.f32 %v3050, %v2805
    %v3148 = vsub.f32 %v3055, %v2805
    %v3149 = vsub.f32 %v3060, %v2805
    %v3150 = vsub.f32 %v3065, %v2805
    %v3151 = vsub.f32 %v3070, %v2805
    %v3152 = vsub.f32 %v3075, %v2805
    %v3153 = vsub.f32 %v3080, %v2805
    %v3154 = vsub.f32 %v3085, %v2805
    %v3155 = vsub.f32 %v3090, %v2805
    %v3156 = vsub.f32 %v3095, %v2805
    %v3157 = vsub.f32 %v3100, %v2805
    %v3158 = vsub.f32 %v3105, %v2805
    %v3159 = vsub.f32 %v3110, %v2805
    %v3160 = vsub.f32 %v3115, %v2805
    %v3161 = vsub.f32 %v3120, %v2805
    %v3162 = vsub.f32 %v3125, %v2805
    %v3163 = vsub.f32 %v3130, %v2805
    %v3164 = vsub.f32 %v3135, %v2805
    %v3165 = vsub.f32 %v3140, %v2805
    %v3166 = vmul.f32 %v3142, %v3142
    %v3167 = vmul.f32 %v3143, %v3143
    %v3168 = vmul.f32 %v3144, %v3144
    %v3169 = vmul.f32 %v3145, %v3145
    %v3170 = vmul.f32 %v3146, %v3146
    %v3171 = vmul.f32 %v3147, %v3147
    %v3172 = vmul.f32 %v3148, %v3148
    %v3173 = vmul.f32 %v3149, %v3149
    %v3174 = vmul.f32 %v3150, %v3150
    %v3175 = vmul.f32 %v3151, %v3151
    %v3176 = vmul.f32 %v3152, %v3152
    %v3177 = vmul.f32 %v3153, %v3153
    %v3178 = vmul.f32 %v3154, %v3154
    %v3179 = vmul.f32 %v3155, %v3155
    %v3180 = vmul.f32 %v3156, %v3156
    %v3181 = vmul.f32 %v3157, %v3157
    %v3182 = vmul.f32 %v3158, %v3158
    %v3183 = vmul.f32 %v3159, %v3159
    %v3184 = vmul.f32 %v3160, %v3160
    %v3185 = vmul.f32 %v3161, %v3161
    %v3186 = vmul.f32 %v3162, %v3162
    %v3187 = vmul.f32 %v3163, %v3163
    %v3188 = vmul.f32 %v3164, %v3164
    %v3189 = vmul.f32 %v3165, %v3165
    %v3190 = vadd.f32 %v2998, %v3166
    %v3191 = vadd.f32 %v2999, %v3167
    %v3192 = vadd.f32 %v3000, %v3168
    %v3193 = vadd.f32 %v3001, %v3169
    %v3194 = vadd.f32 %v3002, %v3170
    %v3195 = vadd.f32 %v3003, %v3171
    %v3196 = vadd.f32 %v3004, %v3172
    %v3197 = vadd.f32 %v3005, %v3173
    %v3198 = vadd.f32 %v3006, %v3174
    %v3199 = vadd.f32 %v3007, %v3175
    %v3200 = vadd.f32 %v3008, %v3176
    %v3201 = vadd.f32 %v3009, %v3177
    %v3202 = vadd.f32 %v3010, %v3178
    %v3203 = vadd.f32 %v3011, %v3179
    %v3204 = vadd.f32 %v3012, %v3180
    %v3205 = vadd.f32 %v3013, %v3181
    %v3206 = vadd.f32 %v3014, %v3182
    %v3207 = vadd.f32 %v3015, %v3183
    %v3208 = vadd.f32 %v3016, %v3184
    %v3209 = vadd.f32 %v3017, %v3185
    %v3210 = vadd.f32 %v3018, %v3186
    %v3211 = vadd.f32 %v3019, %v3187
    %v3212 = vadd.f32 %v3020, %v3188
    %v3213 = vadd.f32 %v3021, %v3189
    %v3214 = vsub.f32 0.0, %v3190
    %v3215 = vsub.f32 0.0, %v3191
    %v3216 = vsub.f32 0.0, %v3192
    %v3217 = vsub.f32 0.0, %v3193
    %v3218 = vsub.f32 0.0, %v3194
    %v3219 = vsub.f32 0.0, %v3195
    %v3220 = vsub.f32 0.0, %v3196
    %v3221 = vsub.f32 0.0, %v3197
    %v3222 = vsub.f32 0.0, %v3198
    %v3223 = vsub.f32 0.0, %v3199
    %v3224 = vsub.f32 0.0, %v3200
    %v3225 = vsub.f32 0.0, %v3201
    %v3226 = vsub.f32 0.0, %v3202
    %v3227 = vsub.f32 0.0, %v3203
    %v3228 = vsub.f32 0.0, %v3204
    %v3229 = vsub.f32 0.0, %v3205
    %v3230 = vsub.f32 0.0, %v3206
    %v3231 = vsub.f32 0.0, %v3207
    %v3232 = vsub.f32 0.0, %v3208
    %v3233 = vsub.f32 0.0, %v3209
    %v3234 = vsub.f32 0.0, %v3210
    %v3235 = vsub.f32 0.0, %v3211
    %v3236 = vsub.f32 0.0, %v3212
    %v3237 = vsub.f32 0.0, %v3213
    %v3238 = vmul.f32 %v3214, 1.442695
    %v3239 = vpow.pop %v3238
    %v3240 = vmul.f32 %v3215, 1.442695
    %v3241 = vpow.pop %v3240
    %v3242 = vmul.f32 %v3216, 1.442695
    %v3243 = vpow.pop %v3242
    %v3244 = vmul.f32 %v3217, 1.442695
    %v3245 = vpow.pop %v3244
    %v3246 = vmul.f32 %v3218, 1.442695
    %v3247 = vpow.pop %v3246
    %v3248 = vmul.f32 %v3219, 1.442695
    %v3249 = vpow.pop %v3248
    %v3250 = vmul.f32 %v3220, 1.442695
    %v3251 = vpow.pop %v3250
    %v3252 = vmul.f32 %v3221, 1.442695
    %v3253 = vpow.pop %v3252
    %v3254 = vmul.f32 %v3222, 1.442695
    %v3255 = vpow.pop %v3254
    %v3256 = vmul.f32 %v3223, 1.442695
    %v3257 = vpow.pop %v3256
    %v3258 = vmul.f32 %v3224, 1.442695
    %v3259 = vpow.pop %v3258
    %v3260 = vmul.f32 %v3225, 1.442695
    %v3261 = vpow.pop %v3260
    %v3262 = vmul.f32 %v3226, 1.442695
    %v3263 = vpow.pop %v3262
    %v3264 = vmul.f32 %v3227, 1.442695
    %v3265 = vpow.pop %v3264
    %v3266 = vmul.f32 %v3228, 1.442695
    %v3267 = vpow.pop %v3266
    %v3268 = vmul.f32 %v3229, 1.442695
    %v3269 = vpow.pop %v3268
    %v3270 = vmul.f32 %v3230, 1.442695
    %v3271 = vpow.pop %v3270
    %v3272 = vmul.f32 %v3231, 1.442695
    %v3273 = vpow.pop %v3272
    %v3274 = vmul.f32 %v3232, 1.442695
    %v3275 = vpow.pop %v3274
    %v3276 = vmul.f32 %v3233, 1.442695
    %v3277 = vpow.pop %v3276
    %v3278 = vmul.f32 %v3234, 1.442695
    %v3279 = vpow.pop %v3278
    %v3280 = vmul.f32 %v3235, 1.442695
    %v3281 = vpow.pop %v3280
    %v3282 = vmul.f32 %v3236, 1.442695
    %v3283 = vpow.pop %v3282
    %v3284 = vmul.f32 %v3237, 1.442695
    %v3285 = vpow.pop %v3284
    %3287 = vset.pattern.permute.xlu0 0
    %3288 = vperm.xlu0 %3287, %v2770
    %v3289 = vpop.permute.xlu0 %3288
    %3292 = vset.pattern.permute.xlu0 0
    %3293 = vperm.xlu0 %3292, %v2771
    %v3294 = vpop.permute.xlu0 %3293
    %3297 = vset.pattern.permute.xlu0 0
    %3298 = vperm.xlu0 %3297, %v2772
    %v3299 = vpop.permute.xlu0 %3298
    %3302 = vset.pattern.permute.xlu0 0
    %3303 = vperm.xlu0 %3302, %v2773
    %v3304 = vpop.permute.xlu0 %3303
    %3307 = vset.pattern.permute.xlu0 0
    %3308 = vperm.xlu0 %3307, %v2774
    %v3309 = vpop.permute.xlu0 %3308
    %3312 = vset.pattern.permute.xlu0 0
    %3313 = vperm.xlu0 %3312, %v2775
    %v3314 = vpop.permute.xlu0 %3313
    %3317 = vset.pattern.permute.xlu0 0
    %3318 = vperm.xlu0 %3317, %v2776
    %v3319 = vpop.permute.xlu0 %3318
    %3322 = vset.pattern.permute.xlu0 0
    %3323 = vperm.xlu0 %3322, %v2777
    %v3324 = vpop.permute.xlu0 %3323
    %3327 = vset.pattern.permute.xlu0 0
    %3328 = vperm.xlu0 %3327, %v2778
    %v3329 = vpop.permute.xlu0 %3328
    %3332 = vset.pattern.permute.xlu0 0
    %3333 = vperm.xlu0 %3332, %v2779
    %v3334 = vpop.permute.xlu0 %3333
    %3337 = vset.pattern.permute.xlu0 0
    %3338 = vperm.xlu0 %3337, %v2780
    %v3339 = vpop.permute.xlu0 %3338
    %3342 = vset.pattern.permute.xlu0 0
    %3343 = vperm.xlu0 %3342, %v2781
    %v3344 = vpop.permute.xlu0 %3343
    %3347 = vset.pattern.permute.xlu0 0
    %3348 = vperm.xlu0 %3347, %v2782
    %v3349 = vpop.permute.xlu0 %3348
    %3352 = vset.pattern.permute.xlu0 0
    %3353 = vperm.xlu0 %3352, %v2783
    %v3354 = vpop.permute.xlu0 %3353
    %3357 = vset.pattern.permute.xlu0 0
    %3358 = vperm.xlu0 %3357, %v2784
    %v3359 = vpop.permute.xlu0 %3358
    %3362 = vset.pattern.permute.xlu0 0
    %3363 = vperm.xlu0 %3362, %v2785
    %v3364 = vpop.permute.xlu0 %3363
    %3367 = vset.pattern.permute.xlu0 0
    %3368 = vperm.xlu0 %3367, %v2786
    %v3369 = vpop.permute.xlu0 %3368
    %3372 = vset.pattern.permute.xlu0 0
    %3373 = vperm.xlu0 %3372, %v2787
    %v3374 = vpop.permute.xlu0 %3373
    %3377 = vset.pattern.permute.xlu0 0
    %3378 = vperm.xlu0 %3377, %v2788
    %v3379 = vpop.permute.xlu0 %3378
    %3382 = vset.pattern.permute.xlu0 0
    %3383 = vperm.xlu0 %3382, %v2789
    %v3384 = vpop.permute.xlu0 %3383
    %3387 = vset.pattern.permute.xlu0 0
    %3388 = vperm.xlu0 %3387, %v2790
    %v3389 = vpop.permute.xlu0 %3388
    %3392 = vset.pattern.permute.xlu0 0
    %3393 = vperm.xlu0 %3392, %v2791
    %v3394 = vpop.permute.xlu0 %3393
    %3397 = vset.pattern.permute.xlu0 0
    %3398 = vperm.xlu0 %3397, %v2792
    %v3399 = vpop.permute.xlu0 %3398
    %3402 = vset.pattern.permute.xlu0 0
    %3403 = vperm.xlu0 %3402, %v2793
    %v3404 = vpop.permute.xlu0 %3403
    %v3406 = vmul.f32 %v3239, %v3289
    %v3407 = vmul.f32 %v3241, %v3294
    %v3408 = vmul.f32 %v3243, %v3299
    %v3409 = vmul.f32 %v3245, %v3304
    %v3410 = vmul.f32 %v3247, %v3309
    %v3411 = vmul.f32 %v3249, %v3314
    %v3412 = vmul.f32 %v3251, %v3319
    %v3413 = vmul.f32 %v3253, %v3324
    %v3414 = vmul.f32 %v3255, %v3329
    %v3415 = vmul.f32 %v3257, %v3334
    %v3416 = vmul.f32 %v3259, %v3339
    %v3417 = vmul.f32 %v3261, %v3344
    %v3418 = vmul.f32 %v3263, %v3349
    %v3419 = vmul.f32 %v3265, %v3354
    %v3420 = vmul.f32 %v3267, %v3359
    %v3421 = vmul.f32 %v3269, %v3364
    %v3422 = vmul.f32 %v3271, %v3369
    %v3423 = vmul.f32 %v3273, %v3374
    %v3424 = vmul.f32 %v3275, %v3379
    %v3425 = vmul.f32 %v3277, %v3384
    %v3426 = vmul.f32 %v3279, %v3389
    %v3427 = vmul.f32 %v3281, %v3394
    %v3428 = vmul.f32 %v3283, %v3399
    %v3429 = vmul.f32 %v3285, %v3404
    %v3430 = vadd.f32 %v3406, %v3407
    %v3431 = vadd.f32 %v3430, %v3408
    %v3432 = vadd.f32 %v3431, %v3409
    %v3433 = vrot.slane %v3432, 4
    %v3434 = vadd.f32 %v3432, %v3433
    %v3435 = vrot.slane %v3434, 2
    %v3436 = vadd.f32 %v3434, %v3435
    %v3437 = vrot.slane %v3436, 1
    %v3438 = vadd.f32 %v3436, %v3437
    %v3439 = vadd.f32 %v3410, %v3411
    %v3440 = vadd.f32 %v3439, %v3412
    %v3441 = vadd.f32 %v3440, %v3413
    %v3442 = vrot.slane %v3441, 4
    %v3443 = vadd.f32 %v3441, %v3442
    %v3444 = vrot.slane %v3443, 2
    %v3445 = vadd.f32 %v3443, %v3444
    %v3446 = vrot.slane %v3445, 1
    %v3447 = vadd.f32 %v3445, %v3446
    %v3448 = vadd.f32 %v3414, %v3415
    %v3449 = vadd.f32 %v3448, %v3416
    %v3450 = vadd.f32 %v3449, %v3417
    %v3451 = vrot.slane %v3450, 4
    %v3452 = vadd.f32 %v3450, %v3451
    %v3453 = vrot.slane %v3452, 2
    %v3454 = vadd.f32 %v3452, %v3453
    %v3455 = vrot.slane %v3454, 1
    %v3456 = vadd.f32 %v3454, %v3455
    %v3457 = vadd.f32 %v3418, %v3419
    %v3458 = vadd.f32 %v3457, %v3420
    %v3459 = vadd.f32 %v3458, %v3421
    %v3460 = vrot.slane %v3459, 4
    %v3461 = vadd.f32 %v3459, %v3460
    %v3462 = vrot.slane %v3461, 2
    %v3463 = vadd.f32 %v3461, %v3462
    %v3464 = vrot.slane %v3463, 1
    %v3465 = vadd.f32 %v3463, %v3464
    %v3466 = vadd.f32 %v3422, %v3423
    %v3467 = vadd.f32 %v3466, %v3424
    %v3468 = vadd.f32 %v3467, %v3425
    %v3469 = vrot.slane %v3468, 4
    %v3470 = vadd.f32 %v3468, %v3469
    %v3471 = vrot.slane %v3470, 2
    %v3472 = vadd.f32 %v3470, %v3471
    %v3473 = vrot.slane %v3472, 1
    %v3474 = vadd.f32 %v3472, %v3473
    %v3475 = vadd.f32 %v3426, %v3427
    %v3476 = vadd.f32 %v3475, %v3428
    %v3477 = vadd.f32 %v3476, %v3429
    %v3478 = vrot.slane %v3477, 4
    %v3479 = vadd.f32 %v3477, %v3478
    %v3480 = vrot.slane %v3479, 2
    %v3481 = vadd.f32 %v3479, %v3480
    %v3482 = vrot.slane %v3481, 1
    %v3483 = vadd.f32 %v3481, %v3482
    %vm3490 = vcmask 1041409
    %v3491 = vsel %vm3490, %v3447, %v3438
    %vm3492 = vcmask 1042434
    %v3493 = vsel %vm3492, %v3456, %v3491
    %vm3494 = vcmask 1043459
    %v3495 = vsel %vm3494, %v3465, %v3493
    %vm3496 = vcmask 1044484
    %v3497 = vsel %vm3496, %v3474, %v3495
    %vm3498 = vcmask 1045509
    %v3499 = vsel %vm3498, %v3483, %v3497
    %3501 = vst [vmem:[#allocation2] sm:$0x3f] %v3499
    // Predicated region
    $region6: #{tpu_custom_call.1} parent=1 // pred_check
      _
    $region7: #{tpu_custom_call.1} parent=1 // pred_check_branch
      %3503 = sbr.rel (0) target = $region9
    $region8: #{tpu_custom_call.1} parent=1 // pred_region
      %s3505 = ssub.s32 128, 128
      %3506 = vsyncadd [#allocation3], %s3505
      %s3508 = sshll.u32 [#allocation2], 4
      %s3509 = int_to_ptr.vmem [resolvable:$true] %s3508
      %3511 = dma.vmem_to_hbm [thread:$0]  %s3509, 128, %s1, [#allocation3]
    $region9: #{tpu_custom_call.1} parent=1 // pred_fallthru
      _
    // Predicated region
    $region10: #{tpu_custom_call.1} parent=1 // pred_check
      _
    $region11: #{tpu_custom_call.1} parent=1 // pred_check_branch
      %3513 = sbr.rel (0) target = $region13
    $region12: #{tpu_custom_call.1} parent=1 // pred_region
      %3514 = dma.done [#allocation3], 128
    $region13: #{tpu_custom_call.1} parent=1 // pred_fallthru
      _
    %3515 = vsyncpa [#allocation3], 1

</llo_original>
